<compile_context>
chip_gen: v6e
topology: v6e:2x2x1
jax: 0.10.0
libtpu: 0.0.40
codegen_flags: <defaults>
</compile_context>

<pallas_src>
import functools

import jax
import jax.numpy as jnp
from jax import lax
from jax.experimental import pallas as pl
from jax.experimental.pallas import tpu as pltpu

EXPANSION = 4
_BN_EPS = 1e-5
# <= 48 MiB keeps the budget safe on v7x's 64 MiB physical VMEM while raising
# the 16/32 MiB scoped defaults on v5e/v6e (128 MiB physical).
_VMEM_LIMIT_BYTES = 48 * 1024 * 1024


# ------------------------------ small helpers -------------------------------

def _take(a, start, count, stride, axis):
    """a[start : start + count*stride : stride] along `axis`, expressed with
    unit-stride slices + reshape so it lowers cleanly in Mosaic (no strided
    value slices)."""
    if stride == 1:
        return lax.slice_in_dim(a, start, start + count, axis=axis)
    sl = lax.slice_in_dim(a, start, start + count * stride, axis=axis)
    shape = list(sl.shape)
    shape[axis:axis + 1] = [count, stride]
    sl = sl.reshape(shape)
    return lax.index_in_dim(sl, 0, axis=axis + 1, keepdims=False)


def _pick_h_tile(Ho, Wo):
    """Output-height tile: divides Ho, keeps <= ~4096 output rows per tile, and
    gives >= 2 tiles when the image is tall enough (pipelining + v7x dual-TC)."""
    target_th = max(1, 4096 // max(Wo, 1))
    th = 1
    for cand in range(1, Ho + 1):
        if Ho % cand == 0 and cand <= target_th:
            th = cand
    if th == Ho and Ho >= 8:
        for cand in range(Ho // 2, 0, -1):
            if Ho % cand == 0:
                th = cand
                break
    return th


# ------------------------------- Pallas kernel ------------------------------

def _bottleneck_kernel(*refs, H, W, Cin, planes, out_c, stride, TH, Wo,
                       has_proj):
    """Fully-fused Bottleneck for one (image, output-row-tile) grid step."""
    if has_proj:
        (xp_ref, w1_ref, s1_ref, b1_ref, w2_ref, s2_ref, b2_ref,
         w3_ref, s3_ref, b3_ref, wsc_ref, ssc_ref, bsc_ref, o_ref) = refs
    else:
        (xp_ref, w1_ref, s1_ref, b1_ref, w2_ref, s2_ref, b2_ref,
         w3_ref, s3_ref, b3_ref, o_ref) = refs

    Wp = W + 2                              # padded width
    TH_in = (TH - 1) * stride + 3           # input rows needed (tile + halo)
    t = pl.program_id(1)
    # First padded-x row needed by this output-row tile (halo included).
    row0 = pl.multiple_of(t * (TH * stride), TH * stride)

    # -- conv1 (1x1) + BN1 + ReLU on tile+halo rows, straight off the resident
    #    padded-x block (not re-DMA'd across the t axis of one image).
    xt = xp_ref[0, pl.ds(row0, TH_in), :, :]            # (TH_in, Wp, Cin) bf16
    h1 = jnp.dot(xt.reshape(TH_in * Wp, Cin), w1_ref[...],
                 preferred_element_type=jnp.float32)
    h1 = jnp.maximum(h1 * s1_ref[...] + b1_ref[...], 0.0)
    h1 = h1.reshape(TH_in, Wp, planes)
    # conv2's zero padding must be zero in h1-space (conv1 of a zero-padded
    # pixel is relu(b1) != 0) -> mask pad positions back to exact zeros.
    rows = lax.broadcasted_iota(jnp.int32, (TH_in, Wp, 1), 0) + row0
    cols = lax.broadcasted_iota(jnp.int32, (TH_in, Wp, 1), 1)
    interior = (rows >= 1) & (rows <= H) & (cols >= 1) & (cols <= W)
    h1 = jnp.where(interior, h1, 0.0).astype(jnp.bfloat16)

    # -- conv2 (3x3, stride): one deep-K MXU matmul on an in-VMEM im2col.
    if stride > 1:
        # A few zero rows/cols at the bottom/right keep the reshape-based
        # stride subsampling slices in bounds (never reached for stride == 1).
        h1 = jnp.pad(h1, ((0, stride - 1), (0, stride - 1), (0, 0)))
    taps = []
    for kh in range(3):
        for kw in range(3):
            p = _take(h1, kh, TH, stride, axis=0)
            p = _take(p, kw, Wo, stride, axis=1)
            taps.append(p.reshape(TH * Wo, planes))
    im2col = jnp.concatenate(taps, axis=-1)             # (TH*Wo, 9*planes) bf16
    h2 = jnp.dot(im2col, w2_ref[...], preferred_element_type=jnp.float32)
    h2 = jnp.maximum(h2 * s2_ref[...] + b2_ref[...], 0.0).astype(jnp.bfloat16)

    # -- conv3 (1x1) + BN3.
    main = jnp.dot(h2, w3_ref[...], preferred_element_type=jnp.float32)
    main = main * s3_ref[...] + b3_ref[...]

    # -- shortcut: reuses the x tile already resident in VMEM; the stride-s
    #    spatial subsample happens here (no wrapper-side strided slice).
    xs = _take(xt, 1, TH, stride, axis=0)
    xs = _take(xs, 1, Wo, stride, axis=1)
    xs = xs.reshape(TH * Wo, Cin)
    if has_proj:
        sc = jnp.dot(xs, wsc_ref[...], preferred_element_type=jnp.float32)
        sc = sc * ssc_ref[...] + bsc_ref[...]
    else:
        sc = xs.astype(jnp.float32)

    out = jnp.maximum(main + sc, 0.0)
    o_ref[...] = out.reshape(1, TH, Wo, out_c).astype(o_ref.dtype)


# ------------------------------- call wrapper --------------------------------

def _fused_call(args, *, N, H, W, Cin, planes, out_c, stride, Ho, Wo, TH,
                has_proj):
    Hp, Wp = H + 2, W + 2
    kernel = functools.partial(
        _bottleneck_kernel, H=H, W=W, Cin=Cin, planes=planes, out_c=out_c,
        stride=stride, TH=TH, Wo=Wo, has_proj=has_proj)

    def const2(a):
        # Whole-array block, constant index map -> fetched once, revisited.
        return pl.BlockSpec(a.shape, lambda n, t: (0, 0))

    xp, w1, s1, b1, w2, s2, b2, w3, s3, b3 = args[:10]
    in_specs = [pl.BlockSpec((1, Hp, Wp, Cin), lambda n, t: (n, 0, 0, 0)),
                const2(w1), const2(s1), const2(b1),
                const2(w2), const2(s2), const2(b2),
                const2(w3), const2(s3), const2(b3)]
    if has_proj:
        wsc, ssc, bsc = args[10:]
        in_specs += [const2(wsc), const2(ssc), const2(bsc)]

    flops = N * (2 * H * W * Cin * planes
                 + 2 * Ho * Wo * 9 * planes * planes
                 + 2 * Ho * Wo * planes * out_c)
    if has_proj:
        flops += N * 2 * Ho * Wo * Cin * out_c
    bytes_accessed = (N * Hp * Wp * Cin * 2            # padded bf16 input read
                      + N * Ho * Wo * out_c * 2        # bf16 output write
                      + (Cin * planes + 9 * planes * planes
                         + planes * out_c) * 2
                      + ((Cin * out_c * 2) if has_proj else 0)
                      + (4 * planes + 4 * out_c) * 4)  # BN scales / biases

    return pl.pallas_call(
        kernel,
        out_shape=jax.ShapeDtypeStruct((N, Ho, Wo, out_c), jnp.bfloat16),
        grid_spec=pltpu.PrefetchScalarGridSpec(
            num_scalar_prefetch=0,
            grid=(N, Ho // TH),
            in_specs=in_specs,
            out_specs=pl.BlockSpec((1, TH, Wo, out_c),
                                   lambda n, t: (n, t, 0, 0)),
        ),
        compiler_params=pltpu.CompilerParams(
            dimension_semantics=("parallel", "parallel"),
            vmem_limit_bytes=_VMEM_LIMIT_BYTES),
        cost_estimate=pl.CostEstimate(flops=int(flops), transcendentals=0,
                                      bytes_accessed=int(bytes_accessed)),
    )(*args)


# ------------------------------- glue (JAX) ----------------------------------

def _fold_bn(key, c):
    k1, k2, k3, k4 = jax.random.split(key, 4)
    gamma = jax.random.uniform(k1, (c,), jnp.float32, 0.5, 1.5)
    beta = jax.random.normal(k2, (c,), jnp.float32) * 0.1
    mean = jax.random.normal(k3, (c,), jnp.float32) * 0.1
    var = jax.random.uniform(k4, (c,), jnp.float32, 0.5, 1.5)
    scale = gamma / jnp.sqrt(var + _BN_EPS)
    bias = beta - mean * scale
    return scale, bias


def init_bottleneck_params(key, in_planes, planes, stride=1):
    out_c = EXPANSION * planes
    ks = jax.random.split(key, 8)
    p = {
        "w1": jax.random.normal(ks[0], (planes, in_planes, 1, 1), jnp.float32) * 0.1,
        "w2": jax.random.normal(ks[1], (planes, planes, 3, 3), jnp.float32) * 0.1,
        "w3": jax.random.normal(ks[2], (out_c, planes, 1, 1), jnp.float32) * 0.1,
    }
    p["s1"], p["b1"] = _fold_bn(ks[3], planes)
    p["s2"], p["b2"] = _fold_bn(ks[4], planes)
    p["s3"], p["b3"] = _fold_bn(ks[5], out_c)
    if stride != 1 or in_planes != out_c:
        p["wsc"] = jax.random.normal(ks[6], (out_c, in_planes, 1, 1), jnp.float32) * 0.1
        p["ssc"], p["bsc"] = _fold_bn(ks[7], out_c)
    return p


def bottleneck_forward(params, x_nchw, stride=1):
    """Pallas-backed Bottleneck forward. Input/output are NCHW (PyTorch)."""
    planes = params["w1"].shape[0]
    out_c = EXPANSION * planes
    N, Cin, H, W = x_nchw.shape
    Ho = (H - 1) // stride + 1
    Wo = (W - 1) // stride + 1
    has_proj = (stride != 1) or (Cin != out_c)

    # bf16 before the NCHW->NHWC boundary transpose (halves boundary traffic);
    # the +1 spatial zero-pad for conv2 fuses into the same relayout copy.
    x_bf = jnp.transpose(x_nchw.astype(jnp.bfloat16), (0, 2, 3, 1))
    xp = jnp.pad(x_bf, ((0, 0), (1, 1), (1, 1), (0, 0)))

    # bf16 MXU operands; BN scale/bias stay f32.
    w1 = params["w1"].reshape(planes, Cin).T.astype(jnp.bfloat16)      # (Cin, planes)
    w2 = jnp.transpose(params["w2"], (2, 3, 1, 0)).reshape(
        9 * planes, planes).astype(jnp.bfloat16)                       # (9*planes, planes)
    w3 = params["w3"].reshape(out_c, planes).T.astype(jnp.bfloat16)    # (planes, out_c)
    s1 = params["s1"].reshape(1, planes).astype(jnp.float32)
    b1 = params["b1"].reshape(1, planes).astype(jnp.float32)
    s2 = params["s2"].reshape(1, planes).astype(jnp.float32)
    b2 = params["b2"].reshape(1, planes).astype(jnp.float32)
    s3 = params["s3"].reshape(1, out_c).astype(jnp.float32)
    b3 = params["b3"].reshape(1, out_c).astype(jnp.float32)

    args = [xp, w1, s1, b1, w2, s2, b2, w3, s3, b3]
    if has_proj:
        wsc = params["wsc"].reshape(out_c, Cin).T.astype(jnp.bfloat16)  # (Cin, out_c)
        ssc = params["ssc"].reshape(1, out_c).astype(jnp.float32)
        bsc = params["bsc"].reshape(1, out_c).astype(jnp.float32)
        args += [wsc, ssc, bsc]

    TH = _pick_h_tile(Ho, Wo)
    out_bf = _fused_call(args, N=N, H=H, W=W, Cin=Cin, planes=planes,
                         out_c=out_c, stride=stride, Ho=Ho, Wo=Wo, TH=TH,
                         has_proj=has_proj)
    # NHWC bf16 -> NCHW f32 in one fused boundary copy.
    return jnp.transpose(out_bf, (0, 3, 1, 2)).astype(jnp.float32)


# ---------------------------- pure-JAX reference -----------------------------

def _ref_forward(params, x_nchw, stride=1):
    """Reference with the same bf16-operand / f32-accumulate numerics."""
    x = jnp.transpose(x_nchw, (0, 2, 3, 1)).astype(jnp.float32)
    Cin = x.shape[-1]
    planes = params["w1"].shape[0]
    out_c = EXPANSION * planes

    def conv(inp, w_pt, s=1, pad=0):
        w = jnp.transpose(w_pt, (2, 3, 1, 0)).astype(jnp.bfloat16)  # HWIO
        return lax.conv_general_dilated(
            inp.astype(jnp.bfloat16), w, (s, s), [(pad, pad), (pad, pad)],
            dimension_numbers=("NHWC", "HWIO", "NHWC"),
            preferred_element_type=jnp.float32)

    h1 = jax.nn.relu(conv(x, params["w1"]) * params["s1"] + params["b1"])
    h1 = h1.astype(jnp.bfloat16)
    h2 = jax.nn.relu(conv(h1, params["w2"], stride, 1) * params["s2"] + params["b2"])
    h2 = h2.astype(jnp.bfloat16)
    main = conv(h2, params["w3"]) * params["s3"] + params["b3"]
    if stride != 1 or Cin != out_c:
        sc = conv(x, params["wsc"], stride) * params["ssc"] + params["bsc"]
    else:
        sc = x.astype(jnp.bfloat16).astype(jnp.float32)
    out = jax.nn.relu(main + sc)
    out = out.astype(jnp.bfloat16).astype(jnp.float32)  # kernel emits bf16
    return jnp.transpose(out, (0, 3, 1, 2))


# ----------------------------------- main -------------------------------------

if __name__ == "__main__":
    key = jax.random.PRNGKey(0)
    k_p1, k_p2, k_x1, k_x2 = jax.random.split(key, 4)

    fwd = jax.jit(bottleneck_forward, static_argnames=("stride",))

    # Config A: projection shortcut (in_planes != expansion*planes), stride 1.
    in_planes, planes, stride = 4, 4, 1
    x = jax.random.normal(k_x1, (2, in_planes, 16, 16), jnp.float32)  # NCHW
    params = init_bottleneck_params(k_p1, in_planes, planes, stride)
    out = jax.block_until_ready(fwd(params, x, stride=stride))
    ref = jax.block_until_ready(_ref_forward(params, x, stride))
    assert out.shape == (2, EXPANSION * planes, 16, 16), out.shape
    err = float(jnp.max(jnp.abs(out - ref)))
    assert jnp.allclose(out, ref, atol=1e-2, rtol=1e-2), err

    # Config B: identity shortcut (in_planes == expansion*planes), stride 1.
    in_planes2, planes2 = 16, 4
    x2 = jax.random.normal(k_x2, (2, in_planes2, 16, 16), jnp.float32)
    params2 = init_bottleneck_params(k_p2, in_planes2, planes2, 1)
    out2 = jax.block_until_ready(fwd(params2, x2, stride=1))
    ref2 = jax.block_until_ready(_ref_forward(params2, x2, 1))
    assert out2.shape == (2, EXPANSION * planes2, 16, 16), out2.shape
    err2 = float(jnp.max(jnp.abs(out2 - ref2)))
    assert jnp.allclose(out2, ref2, atol=1e-2, rtol=1e-2), err2

    print("KERNEL_OK")
</pallas_src>

<mosaic_0001>
module attributes {stable_mosaic.version = 11 : i64} {
  func.func @_bottleneck_kernel(%arg0: i32, %arg1: i32, %arg2: memref<1x18x18x4xbf16, #tpu.memory_space<vmem>>, %arg3: memref<4x4xbf16, #tpu.memory_space<vmem>>, %arg4: memref<1x4xf32, #tpu.memory_space<vmem>>, %arg5: memref<1x4xf32, #tpu.memory_space<vmem>>, %arg6: memref<36x4xbf16, #tpu.memory_space<vmem>>, %arg7: memref<1x4xf32, #tpu.memory_space<vmem>>, %arg8: memref<1x4xf32, #tpu.memory_space<vmem>>, %arg9: memref<4x16xbf16, #tpu.memory_space<vmem>>, %arg10: memref<1x16xf32, #tpu.memory_space<vmem>>, %arg11: memref<1x16xf32, #tpu.memory_space<vmem>>, %arg12: memref<4x16xbf16, #tpu.memory_space<vmem>>, %arg13: memref<1x16xf32, #tpu.memory_space<vmem>>, %arg14: memref<1x16xf32, #tpu.memory_space<vmem>>, %arg15: memref<1x8x16x16xbf16, #tpu.memory_space<vmem>>) attributes {dimension_semantics = [#tpu.dimension_semantics<parallel>, #tpu.dimension_semantics<parallel>], iteration_bounds = array<i64: 2, 2>, scalar_prefetch = 0 : i64, scratch_operands = 0 : i64, tpu.core_type = #tpu.core_type<tc>, window_params = [{transform_indices = @transform_0, window_bounds = array<i64: 1, 18, 18, 4>}, {pipeline_mode = #tpu.pipeline_mode<synchronous>, transform_indices = @transform_1, window_bounds = array<i64: 4, 4>}, {pipeline_mode = #tpu.pipeline_mode<synchronous>, transform_indices = @transform_2, window_bounds = array<i64: 1, 4>}, {pipeline_mode = #tpu.pipeline_mode<synchronous>, transform_indices = @transform_3, window_bounds = array<i64: 1, 4>}, {pipeline_mode = #tpu.pipeline_mode<synchronous>, transform_indices = @transform_4, window_bounds = array<i64: 36, 4>}, {pipeline_mode = #tpu.pipeline_mode<synchronous>, transform_indices = @transform_5, window_bounds = array<i64: 1, 4>}, {pipeline_mode = #tpu.pipeline_mode<synchronous>, transform_indices = @transform_6, window_bounds = array<i64: 1, 4>}, {pipeline_mode = #tpu.pipeline_mode<synchronous>, transform_indices = @transform_7, window_bounds = array<i64: 4, 16>}, {pipeline_mode = #tpu.pipeline_mode<synchronous>, transform_indices = @transform_8, window_bounds = array<i64: 1, 16>}, {pipeline_mode = #tpu.pipeline_mode<synchronous>, transform_indices = @transform_9, window_bounds = array<i64: 1, 16>}, {pipeline_mode = #tpu.pipeline_mode<synchronous>, transform_indices = @transform_10, window_bounds = array<i64: 4, 16>}, {pipeline_mode = #tpu.pipeline_mode<synchronous>, transform_indices = @transform_11, window_bounds = array<i64: 1, 16>}, {pipeline_mode = #tpu.pipeline_mode<synchronous>, transform_indices = @transform_12, window_bounds = array<i64: 1, 16>}, {transform_indices = @transform_13, window_bounds = array<i64: 1, 8, 16, 16>}]} {
    %c8_i32 = arith.constant 8 : i32
    %0 = arith.muli %arg1, %c8_i32 : i32
    %1 = tpu.assume_multiple %0, 8 : i32
    %c0 = arith.constant 0 : index
    %2 = arith.index_cast %1 : i32 to index
    %c0_0 = arith.constant 0 : index
    %c0_1 = arith.constant 0 : index
    %3 = vector.load %arg2[%c0, %2, %c0_0, %c0_1] : memref<1x18x18x4xbf16, #tpu.memory_space<vmem>>, vector<1x10x18x4xbf16>
    %4 = vector.shape_cast %3 : vector<1x10x18x4xbf16> to vector<10x18x4xbf16>
    %5 = vector.shape_cast %4 : vector<10x18x4xbf16> to vector<180x4xbf16>
    %c0_2 = arith.constant 0 : index
    %c0_3 = arith.constant 0 : index
    %6 = vector.load %arg3[%c0_2, %c0_3] : memref<4x4xbf16, #tpu.memory_space<vmem>>, vector<4x4xbf16>
    %cst = arith.constant dense<0.000000e+00> : vector<180x4xf32>
    %7 = tpu.matmul %5, %6, %cst {dimension_numbers = #tpu.dot_dimension_numbers<[1], [0], [0], [1], [0, 0, 1, 1], [], []>} : vector<180x4xbf16>, vector<4x4xbf16>, vector<180x4xf32> -> vector<180x4xf32>
    %c0_4 = arith.constant 0 : index
    %c0_5 = arith.constant 0 : index
    %8 = vector.load %arg4[%c0_4, %c0_5] : memref<1x4xf32, #tpu.memory_space<vmem>>, vector<1x4xf32>
    %9 = vector.broadcast %8 : vector<1x4xf32> to vector<180x4xf32>
    %10 = arith.mulf %7, %9 : vector<180x4xf32>
    %c0_6 = arith.constant 0 : index
    %c0_7 = arith.constant 0 : index
    %11 = vector.load %arg5[%c0_6, %c0_7] : memref<1x4xf32, #tpu.memory_space<vmem>>, vector<1x4xf32>
    %12 = vector.broadcast %11 : vector<1x4xf32> to vector<180x4xf32>
    %13 = arith.addf %10, %12 : vector<180x4xf32>
    %cst_8 = arith.constant 0.000000e+00 : f32
    %14 = vector.broadcast %cst_8 : f32 to vector<180x4xf32>
    %15 = arith.maximumf %13, %14 : vector<180x4xf32>
    %16 = vector.shape_cast %15 : vector<180x4xf32> to vector<10x18x4xf32>
    %17 = tpu.iota {dimensions = array<i32: 0>} : vector<10x18x1xi32>
    %18 = vector.broadcast %1 : i32 to vector<10x18x1xi32>
    %19 = arith.addi %17, %18 : vector<10x18x1xi32>
    %20 = tpu.iota {dimensions = array<i32: 1>} : vector<10x18x1xi32>
    %c1_i32 = arith.constant 1 : i32
    %21 = vector.broadcast %c1_i32 : i32 to vector<10x18x1xi32>
    %22 = arith.cmpi sge, %19, %21 : vector<10x18x1xi32>
    %c16_i32 = arith.constant 16 : i32
    %23 = vector.broadcast %c16_i32 : i32 to vector<10x18x1xi32>
    %24 = arith.cmpi sle, %19, %23 : vector<10x18x1xi32>
    %25 = arith.andi %22, %24 : vector<10x18x1xi1>
    %c1_i32_9 = arith.constant 1 : i32
    %26 = vector.broadcast %c1_i32_9 : i32 to vector<10x18x1xi32>
    %27 = arith.cmpi sge, %20, %26 : vector<10x18x1xi32>
    %28 = arith.andi %25, %27 : vector<10x18x1xi1>
    %c16_i32_10 = arith.constant 16 : i32
    %29 = vector.broadcast %c16_i32_10 : i32 to vector<10x18x1xi32>
    %30 = arith.cmpi sle, %20, %29 : vector<10x18x1xi32>
    %31 = arith.andi %28, %30 : vector<10x18x1xi1>
    %cst_11 = arith.constant 0.000000e+00 : f32
    %32 = vector.shape_cast %31 : vector<10x18x1xi1> to vector<10x18x1xi1>
    %33 = vector.broadcast %32 : vector<10x18x1xi1> to vector<10x18x4xi1>
    %34 = vector.broadcast %cst_11 : f32 to vector<10x18x4xf32>
    %35 = arith.select %33, %16, %34 : vector<10x18x4xi1>, vector<10x18x4xf32>
    %36 = arith.truncf %35 : vector<10x18x4xf32> to vector<10x18x4xbf16>
    %37 = vector.extract_strided_slice %36 {offsets = [0, 0, 0], sizes = [8, 18, 4], strides = [1, 1, 1]} : vector<10x18x4xbf16> to vector<8x18x4xbf16>
    %38 = vector.extract_strided_slice %37 {offsets = [0, 0, 0], sizes = [8, 16, 4], strides = [1, 1, 1]} : vector<8x18x4xbf16> to vector<8x16x4xbf16>
    %39 = vector.shape_cast %38 : vector<8x16x4xbf16> to vector<128x4xbf16>
    %40 = vector.extract_strided_slice %36 {offsets = [0, 0, 0], sizes = [8, 18, 4], strides = [1, 1, 1]} : vector<10x18x4xbf16> to vector<8x18x4xbf16>
    %41 = vector.extract_strided_slice %40 {offsets = [0, 1, 0], sizes = [8, 16, 4], strides = [1, 1, 1]} : vector<8x18x4xbf16> to vector<8x16x4xbf16>
    %42 = vector.shape_cast %41 : vector<8x16x4xbf16> to vector<128x4xbf16>
    %43 = vector.extract_strided_slice %36 {offsets = [0, 0, 0], sizes = [8, 18, 4], strides = [1, 1, 1]} : vector<10x18x4xbf16> to vector<8x18x4xbf16>
    %44 = vector.extract_strided_slice %43 {offsets = [0, 2, 0], sizes = [8, 16, 4], strides = [1, 1, 1]} : vector<8x18x4xbf16> to vector<8x16x4xbf16>
    %45 = vector.shape_cast %44 : vector<8x16x4xbf16> to vector<128x4xbf16>
    %46 = vector.extract_strided_slice %36 {offsets = [1, 0, 0], sizes = [8, 18, 4], strides = [1, 1, 1]} : vector<10x18x4xbf16> to vector<8x18x4xbf16>
    %47 = vector.extract_strided_slice %46 {offsets = [0, 0, 0], sizes = [8, 16, 4], strides = [1, 1, 1]} : vector<8x18x4xbf16> to vector<8x16x4xbf16>
    %48 = vector.shape_cast %47 : vector<8x16x4xbf16> to vector<128x4xbf16>
    %49 = vector.extract_strided_slice %36 {offsets = [1, 0, 0], sizes = [8, 18, 4], strides = [1, 1, 1]} : vector<10x18x4xbf16> to vector<8x18x4xbf16>
    %50 = vector.extract_strided_slice %49 {offsets = [0, 1, 0], sizes = [8, 16, 4], strides = [1, 1, 1]} : vector<8x18x4xbf16> to vector<8x16x4xbf16>
    %51 = vector.shape_cast %50 : vector<8x16x4xbf16> to vector<128x4xbf16>
    %52 = vector.extract_strided_slice %36 {offsets = [1, 0, 0], sizes = [8, 18, 4], strides = [1, 1, 1]} : vector<10x18x4xbf16> to vector<8x18x4xbf16>
    %53 = vector.extract_strided_slice %52 {offsets = [0, 2, 0], sizes = [8, 16, 4], strides = [1, 1, 1]} : vector<8x18x4xbf16> to vector<8x16x4xbf16>
    %54 = vector.shape_cast %53 : vector<8x16x4xbf16> to vector<128x4xbf16>
    %55 = vector.extract_strided_slice %36 {offsets = [2, 0, 0], sizes = [8, 18, 4], strides = [1, 1, 1]} : vector<10x18x4xbf16> to vector<8x18x4xbf16>
    %56 = vector.extract_strided_slice %55 {offsets = [0, 0, 0], sizes = [8, 16, 4], strides = [1, 1, 1]} : vector<8x18x4xbf16> to vector<8x16x4xbf16>
    %57 = vector.shape_cast %56 : vector<8x16x4xbf16> to vector<128x4xbf16>
    %58 = vector.extract_strided_slice %36 {offsets = [2, 0, 0], sizes = [8, 18, 4], strides = [1, 1, 1]} : vector<10x18x4xbf16> to vector<8x18x4xbf16>
    %59 = vector.extract_strided_slice %58 {offsets = [0, 1, 0], sizes = [8, 16, 4], strides = [1, 1, 1]} : vector<8x18x4xbf16> to vector<8x16x4xbf16>
    %60 = vector.shape_cast %59 : vector<8x16x4xbf16> to vector<128x4xbf16>
    %61 = vector.extract_strided_slice %36 {offsets = [2, 0, 0], sizes = [8, 18, 4], strides = [1, 1, 1]} : vector<10x18x4xbf16> to vector<8x18x4xbf16>
    %62 = vector.extract_strided_slice %61 {offsets = [0, 2, 0], sizes = [8, 16, 4], strides = [1, 1, 1]} : vector<8x18x4xbf16> to vector<8x16x4xbf16>
    %63 = vector.shape_cast %62 : vector<8x16x4xbf16> to vector<128x4xbf16>
    %64 = tpu.concatenate %39, %42, %45, %48, %51, %54, %57, %60, %63 in 1 : vector<128x4xbf16>, vector<128x4xbf16>, vector<128x4xbf16>, vector<128x4xbf16>, vector<128x4xbf16>, vector<128x4xbf16>, vector<128x4xbf16>, vector<128x4xbf16>, vector<128x4xbf16> -> vector<128x36xbf16>
    %c0_12 = arith.constant 0 : index
    %c0_13 = arith.constant 0 : index
    %65 = vector.load %arg6[%c0_12, %c0_13] : memref<36x4xbf16, #tpu.memory_space<vmem>>, vector<36x4xbf16>
    %cst_14 = arith.constant dense<0.000000e+00> : vector<128x4xf32>
    %66 = tpu.matmul %64, %65, %cst_14 {dimension_numbers = #tpu.dot_dimension_numbers<[1], [0], [0], [1], [0, 0, 1, 1], [], []>} : vector<128x36xbf16>, vector<36x4xbf16>, vector<128x4xf32> -> vector<128x4xf32>
    %c0_15 = arith.constant 0 : index
    %c0_16 = arith.constant 0 : index
    %67 = vector.load %arg7[%c0_15, %c0_16] : memref<1x4xf32, #tpu.memory_space<vmem>>, vector<1x4xf32>
    %68 = vector.broadcast %67 : vector<1x4xf32> to vector<128x4xf32>
    %69 = arith.mulf %66, %68 : vector<128x4xf32>
    %c0_17 = arith.constant 0 : index
    %c0_18 = arith.constant 0 : index
    %70 = vector.load %arg8[%c0_17, %c0_18] : memref<1x4xf32, #tpu.memory_space<vmem>>, vector<1x4xf32>
    %71 = vector.broadcast %70 : vector<1x4xf32> to vector<128x4xf32>
    %72 = arith.addf %69, %71 : vector<128x4xf32>
    %cst_19 = arith.constant 0.000000e+00 : f32
    %73 = vector.broadcast %cst_19 : f32 to vector<128x4xf32>
    %74 = arith.maximumf %72, %73 : vector<128x4xf32>
    %75 = arith.truncf %74 : vector<128x4xf32> to vector<128x4xbf16>
    %c0_20 = arith.constant 0 : index
    %c0_21 = arith.constant 0 : index
    %76 = vector.load %arg9[%c0_20, %c0_21] : memref<4x16xbf16, #tpu.memory_space<vmem>>, vector<4x16xbf16>
    %cst_22 = arith.constant dense<0.000000e+00> : vector<128x16xf32>
    %77 = tpu.matmul %75, %76, %cst_22 {dimension_numbers = #tpu.dot_dimension_numbers<[1], [0], [0], [1], [0, 0, 1, 1], [], []>} : vector<128x4xbf16>, vector<4x16xbf16>, vector<128x16xf32> -> vector<128x16xf32>
    %c0_23 = arith.constant 0 : index
    %c0_24 = arith.constant 0 : index
    %78 = vector.load %arg10[%c0_23, %c0_24] : memref<1x16xf32, #tpu.memory_space<vmem>>, vector<1x16xf32>
    %79 = vector.broadcast %78 : vector<1x16xf32> to vector<128x16xf32>
    %80 = arith.mulf %77, %79 : vector<128x16xf32>
    %c0_25 = arith.constant 0 : index
    %c0_26 = arith.constant 0 : index
    %81 = vector.load %arg11[%c0_25, %c0_26] : memref<1x16xf32, #tpu.memory_space<vmem>>, vector<1x16xf32>
    %82 = vector.broadcast %81 : vector<1x16xf32> to vector<128x16xf32>
    %83 = arith.addf %80, %82 : vector<128x16xf32>
    %84 = vector.extract_strided_slice %4 {offsets = [1, 0, 0], sizes = [8, 18, 4], strides = [1, 1, 1]} : vector<10x18x4xbf16> to vector<8x18x4xbf16>
    %85 = vector.extract_strided_slice %84 {offsets = [0, 1, 0], sizes = [8, 16, 4], strides = [1, 1, 1]} : vector<8x18x4xbf16> to vector<8x16x4xbf16>
    %86 = vector.shape_cast %85 : vector<8x16x4xbf16> to vector<128x4xbf16>
    %c0_27 = arith.constant 0 : index
    %c0_28 = arith.constant 0 : index
    %87 = vector.load %arg12[%c0_27, %c0_28] : memref<4x16xbf16, #tpu.memory_space<vmem>>, vector<4x16xbf16>
    %cst_29 = arith.constant dense<0.000000e+00> : vector<128x16xf32>
    %88 = tpu.matmul %86, %87, %cst_29 {dimension_numbers = #tpu.dot_dimension_numbers<[1], [0], [0], [1], [0, 0, 1, 1], [], []>} : vector<128x4xbf16>, vector<4x16xbf16>, vector<128x16xf32> -> vector<128x16xf32>
    %c0_30 = arith.constant 0 : index
    %c0_31 = arith.constant 0 : index
    %89 = vector.load %arg13[%c0_30, %c0_31] : memref<1x16xf32, #tpu.memory_space<vmem>>, vector<1x16xf32>
    %90 = vector.broadcast %89 : vector<1x16xf32> to vector<128x16xf32>
    %91 = arith.mulf %88, %90 : vector<128x16xf32>
    %c0_32 = arith.constant 0 : index
    %c0_33 = arith.constant 0 : index
    %92 = vector.load %arg14[%c0_32, %c0_33] : memref<1x16xf32, #tpu.memory_space<vmem>>, vector<1x16xf32>
    %93 = vector.broadcast %92 : vector<1x16xf32> to vector<128x16xf32>
    %94 = arith.addf %91, %93 : vector<128x16xf32>
    %95 = arith.addf %83, %94 : vector<128x16xf32>
    %cst_34 = arith.constant 0.000000e+00 : f32
    %96 = vector.broadcast %cst_34 : f32 to vector<128x16xf32>
    %97 = arith.maximumf %95, %96 : vector<128x16xf32>
    %98 = vector.shape_cast %97 : vector<128x16xf32> to vector<1x8x16x16xf32>
    %99 = arith.truncf %98 : vector<1x8x16x16xf32> to vector<1x8x16x16xbf16>
    %c0_35 = arith.constant 0 : index
    %c0_36 = arith.constant 0 : index
    %c0_37 = arith.constant 0 : index
    %c0_38 = arith.constant 0 : index
    %100 = vector.load %arg15[%c0_35, %c0_36, %c0_37, %c0_38] : memref<1x8x16x16xbf16, #tpu.memory_space<vmem>>, vector<1x8x16x16xbf16>
    tpu.vector_store %arg15[%c0_35, %c0_36, %c0_37, %c0_38], %99 {strides = array<i32>} : memref<1x8x16x16xbf16, #tpu.memory_space<vmem>>, vector<1x8x16x16xbf16>,
    return
  }
  func.func @transform_0(%arg0: i32, %arg1: i32) -> (i32, i32, i32, i32) {
    %c0_i32 = arith.constant 0 : i32
    %c0_i32_0 = arith.constant 0 : i32
    %c0_i32_1 = arith.constant 0 : i32
    %c0_i32_2 = arith.constant 0 : i32
    return %arg0, %c0_i32, %c0_i32_0, %c0_i32_1 : i32, i32, i32, i32
  }
  func.func @transform_1(%arg0: i32, %arg1: i32) -> (i32, i32) {
    %c0_i32 = arith.constant 0 : i32
    %c0_i32_0 = arith.constant 0 : i32
    %c0_i32_1 = arith.constant 0 : i32
    return %c0_i32, %c0_i32_0 : i32, i32
  }
  func.func @transform_2(%arg0: i32, %arg1: i32) -> (i32, i32) {
    %c0_i32 = arith.constant 0 : i32
    %c0_i32_0 = arith.constant 0 : i32
    %c0_i32_1 = arith.constant 0 : i32
    return %c0_i32, %c0_i32_0 : i32, i32
  }
  func.func @transform_3(%arg0: i32, %arg1: i32) -> (i32, i32) {
    %c0_i32 = arith.constant 0 : i32
    %c0_i32_0 = arith.constant 0 : i32
    %c0_i32_1 = arith.constant 0 : i32
    return %c0_i32, %c0_i32_0 : i32, i32
  }
  func.func @transform_4(%arg0: i32, %arg1: i32) -> (i32, i32) {
    %c0_i32 = arith.constant 0 : i32
    %c0_i32_0 = arith.constant 0 : i32
    %c0_i32_1 = arith.constant 0 : i32
    return %c0_i32, %c0_i32_0 : i32, i32
  }
  func.func @transform_5(%arg0: i32, %arg1: i32) -> (i32, i32) {
    %c0_i32 = arith.constant 0 : i32
    %c0_i32_0 = arith.constant 0 : i32
    %c0_i32_1 = arith.constant 0 : i32
    return %c0_i32, %c0_i32_0 : i32, i32
  }
  func.func @transform_6(%arg0: i32, %arg1: i32) -> (i32, i32) {
    %c0_i32 = arith.constant 0 : i32
    %c0_i32_0 = arith.constant 0 : i32
    %c0_i32_1 = arith.constant 0 : i32
    return %c0_i32, %c0_i32_0 : i32, i32
  }
  func.func @transform_7(%arg0: i32, %arg1: i32) -> (i32, i32) {
    %c0_i32 = arith.constant 0 : i32
    %c0_i32_0 = arith.constant 0 : i32
    %c0_i32_1 = arith.constant 0 : i32
    return %c0_i32, %c0_i32_0 : i32, i32
  }
  func.func @transform_8(%arg0: i32, %arg1: i32) -> (i32, i32) {
    %c0_i32 = arith.constant 0 : i32
    %c0_i32_0 = arith.constant 0 : i32
    %c0_i32_1 = arith.constant 0 : i32
    return %c0_i32, %c0_i32_0 : i32, i32
  }
  func.func @transform_9(%arg0: i32, %arg1: i32) -> (i32, i32) {
    %c0_i32 = arith.constant 0 : i32
    %c0_i32_0 = arith.constant 0 : i32
    %c0_i32_1 = arith.constant 0 : i32
    return %c0_i32, %c0_i32_0 : i32, i32
  }
  func.func @transform_10(%arg0: i32, %arg1: i32) -> (i32, i32) {
    %c0_i32 = arith.constant 0 : i32
    %c0_i32_0 = arith.constant 0 : i32
    %c0_i32_1 = arith.constant 0 : i32
    return %c0_i32, %c0_i32_0 : i32, i32
  }
  func.func @transform_11(%arg0: i32, %arg1: i32) -> (i32, i32) {
    %c0_i32 = arith.constant 0 : i32
    %c0_i32_0 = arith.constant 0 : i32
    %c0_i32_1 = arith.constant 0 : i32
    return %c0_i32, %c0_i32_0 : i32, i32
  }
  func.func @transform_12(%arg0: i32, %arg1: i32) -> (i32, i32) {
    %c0_i32 = arith.constant 0 : i32
    %c0_i32_0 = arith.constant 0 : i32
    %c0_i32_1 = arith.constant 0 : i32
    return %c0_i32, %c0_i32_0 : i32, i32
  }
  func.func @transform_13(%arg0: i32, %arg1: i32) -> (i32, i32, i32, i32) {
    %c0_i32 = arith.constant 0 : i32
    %c0_i32_0 = arith.constant 0 : i32
    %c0_i32_1 = arith.constant 0 : i32
    return %arg0, %arg1, %c0_i32, %c0_i32_0 : i32, i32, i32, i32
  }
}

</mosaic_0001>

<llo_original>
// kernel: bottleneck_forward.1
$region0: #{bottleneck_forward.1}
  #allocation0 [shape = 'u32[]', space=smem, size = 0x4, offset = 0x4, fixed_abs, tag = 'smem constant byte address 0x4 - core index']
  #allocation1 [shape = 'u32[144,128]{1,0:T(1,128)}', space=vmem, size = 0x12000, scoped, tag = 'internal scratch']
  %s0 = inlined_call_operand.vmem [shape: bf16[2,18,18,4], index: 0, kind: input, shape index: {}]
  %s1 = inlined_call_operand.vmem [shape: bf16[4,4], index: 1, kind: input, shape index: {}]
  %s2 = inlined_call_operand.vmem [shape: f32[1,4], index: 2, kind: input, shape index: {}]
  %s3 = inlined_call_operand.vmem [shape: f32[1,4], index: 3, kind: input, shape index: {}]
  %s4 = inlined_call_operand.vmem [shape: bf16[36,4], index: 4, kind: input, shape index: {}]
  %s5 = inlined_call_operand.vmem [shape: f32[1,4], index: 5, kind: input, shape index: {}]
  %s6 = inlined_call_operand.vmem [shape: f32[1,4], index: 6, kind: input, shape index: {}]
  %s7 = inlined_call_operand.vmem [shape: bf16[4,16], index: 7, kind: input, shape index: {}]
  %s8 = inlined_call_operand.vmem [shape: f32[1,16], index: 8, kind: input, shape index: {}]
  %s9 = inlined_call_operand.vmem [shape: f32[1,16], index: 9, kind: input, shape index: {}]
  %s10 = inlined_call_operand.vmem [shape: bf16[4,16], index: 10, kind: input, shape index: {}]
  %s11 = inlined_call_operand.vmem [shape: f32[1,16], index: 11, kind: input, shape index: {}]
  %s12 = inlined_call_operand.vmem [shape: f32[1,16], index: 12, kind: input, shape index: {}]
  %s13 = inlined_call_operand.vmem [shape: bf16[2,16,16,16], index: 13, kind: output, shape index: {}]
  %s14 = sld [smem:[#allocation0]]
  $region85: #{bottleneck_forward.1} parent=0
    _
  %s16 = ssub.s32 1, %s14
  %s17 = scalar_select 0, %s16, %s14
  loop: start=0, step=1, limit=6
  $region2: #{bottleneck_forward.1} parent=0 // loop_pre_header
    _
  $region3: #{bottleneck_forward.1} parent=0 // loop_header
    %s19 = sphi 0, %s23
    %p20 = scmp.ge.s32.totalorder %s19, 6
    %s26 = sphi 0, %s38
    %s27 = sphi 0, %s34
    %s28 = sphi 0, %s26
    %s29 = sphi 0, %s27
    %s30 = sphi 0, %s28
    %s31 = sphi 0, %s29
    %s41 = sphi 0, %s43
    %s44 = sphi 0, %s41
    %s45 = sphi 0, %s44
    %s61 = sphi 0, %s45
    %s65 = sphi 0, %s65
    %s67 = sphi 0, %s65
    %s68 = sphi 0, %s67
    %s82 = sphi 0, %s68
    %s86 = sphi 0, %s86
    %s88 = sphi 0, %s86
    %s89 = sphi 0, %s88
    %s103 = sphi 0, %s89
    %s107 = sphi 0, %s107
    %s109 = sphi 0, %s107
    %s110 = sphi 0, %s109
    %s124 = sphi 0, %s110
    %s128 = sphi 0, %s128
    %s130 = sphi 0, %s128
    %s131 = sphi 0, %s130
    %s145 = sphi 0, %s131
    %s149 = sphi 0, %s149
    %s151 = sphi 0, %s149
    %s152 = sphi 0, %s151
    %s166 = sphi 0, %s152
    %s170 = sphi 0, %s170
    %s172 = sphi 0, %s170
    %s173 = sphi 0, %s172
    %s187 = sphi 0, %s173
    %s191 = sphi 0, %s191
    %s193 = sphi 0, %s191
    %s194 = sphi 0, %s193
    %s208 = sphi 0, %s194
    %s212 = sphi 0, %s212
    %s214 = sphi 0, %s212
    %s215 = sphi 0, %s214
    %s229 = sphi 0, %s215
    %s233 = sphi 0, %s233
    %s235 = sphi 0, %s233
    %s236 = sphi 0, %s235
    %s250 = sphi 0, %s236
    %s254 = sphi 0, %s254
    %s256 = sphi 0, %s254
    %s257 = sphi 0, %s256
    %s271 = sphi 0, %s257
    %s275 = sphi 0, %s275
    %s277 = sphi 0, %s275
    %s278 = sphi 0, %s277
    %s292 = sphi 0, %s278
    %s296 = sphi 0, %s296
    %s298 = sphi 0, %s296
    %s299 = sphi 0, %s298
    %s313 = sphi 0, %s299
    %s321 = sphi 0, %s323
    %s324 = sphi 0, %s321
    %s325 = sphi 0, %s324
    %s341 = sphi 0, %s325
  $region4: #{bottleneck_forward.1} parent=0 // loop_header_branch
    %22 = sbr.rel (%p20) target = $region8
  $region5: #{bottleneck_forward.1} parent=0 // loop_body
    %s24 = ssub.s32 %s19, 1
    %s25 = ssub.s32 %s19, 2
    %s32 = sadd.s32 1, %s27
    %p33 = scmp.ge.s32.totalorder %s32, 2
    %s34 = scalar_select %p33, 0, %s32
    %s35 = sadd.s32 1, %s26
    %s36 = scalar_select %p33, %s35, %s26
    %p37 = scmp.ge.s32.totalorder %s36, 2
    %s38 = scalar_select %p37, 0, %s36
    %s39 = ssub.s32 %s26, %s38
    %p40 = scmp.eq.s32.totalorder %s39, 0
    %s42 = sadd.s32 %s41, 1
    %s43 = scalar_select %p40, %s41, %s42
    %p46 = pneg %p40
    %p47 = scmp.eq.s32.totalorder %s19, 3
    %p48 = por %p46, %p47
    %p49 = scmp.ne.s32.totalorder %s41, %s44
    %p50 = scmp.eq.s32.totalorder %s19, 0
    %p51 = por %p49, %p50
    %p52 = scmp.ne.s32.totalorder %s41, %s44
    %p53 = scmp.eq.s32.totalorder %s24, 3
    %p54 = por %p52, %p53
    %p55 = scmp.ne.s32.totalorder %s44, %s45
    %p56 = scmp.eq.s32.totalorder %s24, 0
    %p57 = por %p55, %p56
    %p58 = scmp.ne.s32.totalorder %s44, %s45
    %p59 = scmp.eq.s32.totalorder %s25, 3
    %p60 = por %p58, %p59
    %p62 = scmp.ne.s32.totalorder %s45, %s61
    %p63 = scmp.eq.s32.totalorder %s25, 0
    %p64 = por %p62, %p63
    %s66 = sadd.s32 %s65, 1
    %p69 = scmp.eq.s32.totalorder %s19, 3
    %p70 = scmp.ne.s32.totalorder %s65, %s67
    %p71 = scmp.eq.s32.totalorder %s19, 0
    %p72 = por %p70, %p71
    %p73 = scmp.ne.s32.totalorder %s65, %s67
    %p74 = scmp.eq.s32.totalorder %s24, 3
    %p75 = por %p73, %p74
    %p76 = scmp.ne.s32.totalorder %s67, %s68
    %p77 = scmp.eq.s32.totalorder %s24, 0
    %p78 = por %p76, %p77
    %p79 = scmp.ne.s32.totalorder %s67, %s68
    %p80 = scmp.eq.s32.totalorder %s25, 3
    %p81 = por %p79, %p80
    %p83 = scmp.ne.s32.totalorder %s68, %s82
    %p84 = scmp.eq.s32.totalorder %s25, 0
    %p85 = por %p83, %p84
    %s87 = sadd.s32 %s86, 1
    %p90 = scmp.eq.s32.totalorder %s19, 3
    %p91 = scmp.ne.s32.totalorder %s86, %s88
    %p92 = scmp.eq.s32.totalorder %s19, 0
    %p93 = por %p91, %p92
    %p94 = scmp.ne.s32.totalorder %s86, %s88
    %p95 = scmp.eq.s32.totalorder %s24, 3
    %p96 = por %p94, %p95
    %p97 = scmp.ne.s32.totalorder %s88, %s89
    %p98 = scmp.eq.s32.totalorder %s24, 0
    %p99 = por %p97, %p98
    %p100 = scmp.ne.s32.totalorder %s88, %s89
    %p101 = scmp.eq.s32.totalorder %s25, 3
    %p102 = por %p100, %p101
    %p104 = scmp.ne.s32.totalorder %s89, %s103
    %p105 = scmp.eq.s32.totalorder %s25, 0
    %p106 = por %p104, %p105
    %s108 = sadd.s32 %s107, 1
    %p111 = scmp.eq.s32.totalorder %s19, 3
    %p112 = scmp.ne.s32.totalorder %s107, %s109
    %p113 = scmp.eq.s32.totalorder %s19, 0
    %p114 = por %p112, %p113
    %p115 = scmp.ne.s32.totalorder %s107, %s109
    %p116 = scmp.eq.s32.totalorder %s24, 3
    %p117 = por %p115, %p116
    %p118 = scmp.ne.s32.totalorder %s109, %s110
    %p119 = scmp.eq.s32.totalorder %s24, 0
    %p120 = por %p118, %p119
    %p121 = scmp.ne.s32.totalorder %s109, %s110
    %p122 = scmp.eq.s32.totalorder %s25, 3
    %p123 = por %p121, %p122
    %p125 = scmp.ne.s32.totalorder %s110, %s124
    %p126 = scmp.eq.s32.totalorder %s25, 0
    %p127 = por %p125, %p126
    %s129 = sadd.s32 %s128, 1
    %p132 = scmp.eq.s32.totalorder %s19, 3
    %p133 = scmp.ne.s32.totalorder %s128, %s130
    %p134 = scmp.eq.s32.totalorder %s19, 0
    %p135 = por %p133, %p134
    %p136 = scmp.ne.s32.totalorder %s128, %s130
    %p137 = scmp.eq.s32.totalorder %s24, 3
    %p138 = por %p136, %p137
    %p139 = scmp.ne.s32.totalorder %s130, %s131
    %p140 = scmp.eq.s32.totalorder %s24, 0
    %p141 = por %p139, %p140
    %p142 = scmp.ne.s32.totalorder %s130, %s131
    %p143 = scmp.eq.s32.totalorder %s25, 3
    %p144 = por %p142, %p143
    %p146 = scmp.ne.s32.totalorder %s131, %s145
    %p147 = scmp.eq.s32.totalorder %s25, 0
    %p148 = por %p146, %p147
    %s150 = sadd.s32 %s149, 1
    %p153 = scmp.eq.s32.totalorder %s19, 3
    %p154 = scmp.ne.s32.totalorder %s149, %s151
    %p155 = scmp.eq.s32.totalorder %s19, 0
    %p156 = por %p154, %p155
    %p157 = scmp.ne.s32.totalorder %s149, %s151
    %p158 = scmp.eq.s32.totalorder %s24, 3
    %p159 = por %p157, %p158
    %p160 = scmp.ne.s32.totalorder %s151, %s152
    %p161 = scmp.eq.s32.totalorder %s24, 0
    %p162 = por %p160, %p161
    %p163 = scmp.ne.s32.totalorder %s151, %s152
    %p164 = scmp.eq.s32.totalorder %s25, 3
    %p165 = por %p163, %p164
    %p167 = scmp.ne.s32.totalorder %s152, %s166
    %p168 = scmp.eq.s32.totalorder %s25, 0
    %p169 = por %p167, %p168
    %s171 = sadd.s32 %s170, 1
    %p174 = scmp.eq.s32.totalorder %s19, 3
    %p175 = scmp.ne.s32.totalorder %s170, %s172
    %p176 = scmp.eq.s32.totalorder %s19, 0
    %p177 = por %p175, %p176
    %p178 = scmp.ne.s32.totalorder %s170, %s172
    %p179 = scmp.eq.s32.totalorder %s24, 3
    %p180 = por %p178, %p179
    %p181 = scmp.ne.s32.totalorder %s172, %s173
    %p182 = scmp.eq.s32.totalorder %s24, 0
    %p183 = por %p181, %p182
    %p184 = scmp.ne.s32.totalorder %s172, %s173
    %p185 = scmp.eq.s32.totalorder %s25, 3
    %p186 = por %p184, %p185
    %p188 = scmp.ne.s32.totalorder %s173, %s187
    %p189 = scmp.eq.s32.totalorder %s25, 0
    %p190 = por %p188, %p189
    %s192 = sadd.s32 %s191, 1
    %p195 = scmp.eq.s32.totalorder %s19, 3
    %p196 = scmp.ne.s32.totalorder %s191, %s193
    %p197 = scmp.eq.s32.totalorder %s19, 0
    %p198 = por %p196, %p197
    %p199 = scmp.ne.s32.totalorder %s191, %s193
    %p200 = scmp.eq.s32.totalorder %s24, 3
    %p201 = por %p199, %p200
    %p202 = scmp.ne.s32.totalorder %s193, %s194
    %p203 = scmp.eq.s32.totalorder %s24, 0
    %p204 = por %p202, %p203
    %p205 = scmp.ne.s32.totalorder %s193, %s194
    %p206 = scmp.eq.s32.totalorder %s25, 3
    %p207 = por %p205, %p206
    %p209 = scmp.ne.s32.totalorder %s194, %s208
    %p210 = scmp.eq.s32.totalorder %s25, 0
    %p211 = por %p209, %p210
    %s213 = sadd.s32 %s212, 1
    %p216 = scmp.eq.s32.totalorder %s19, 3
    %p217 = scmp.ne.s32.totalorder %s212, %s214
    %p218 = scmp.eq.s32.totalorder %s19, 0
    %p219 = por %p217, %p218
    %p220 = scmp.ne.s32.totalorder %s212, %s214
    %p221 = scmp.eq.s32.totalorder %s24, 3
    %p222 = por %p220, %p221
    %p223 = scmp.ne.s32.totalorder %s214, %s215
    %p224 = scmp.eq.s32.totalorder %s24, 0
    %p225 = por %p223, %p224
    %p226 = scmp.ne.s32.totalorder %s214, %s215
    %p227 = scmp.eq.s32.totalorder %s25, 3
    %p228 = por %p226, %p227
    %p230 = scmp.ne.s32.totalorder %s215, %s229
    %p231 = scmp.eq.s32.totalorder %s25, 0
    %p232 = por %p230, %p231
    %s234 = sadd.s32 %s233, 1
    %p237 = scmp.eq.s32.totalorder %s19, 3
    %p238 = scmp.ne.s32.totalorder %s233, %s235
    %p239 = scmp.eq.s32.totalorder %s19, 0
    %p240 = por %p238, %p239
    %p241 = scmp.ne.s32.totalorder %s233, %s235
    %p242 = scmp.eq.s32.totalorder %s24, 3
    %p243 = por %p241, %p242
    %p244 = scmp.ne.s32.totalorder %s235, %s236
    %p245 = scmp.eq.s32.totalorder %s24, 0
    %p246 = por %p244, %p245
    %p247 = scmp.ne.s32.totalorder %s235, %s236
    %p248 = scmp.eq.s32.totalorder %s25, 3
    %p249 = por %p247, %p248
    %p251 = scmp.ne.s32.totalorder %s236, %s250
    %p252 = scmp.eq.s32.totalorder %s25, 0
    %p253 = por %p251, %p252
    %s255 = sadd.s32 %s254, 1
    %p258 = scmp.eq.s32.totalorder %s19, 3
    %p259 = scmp.ne.s32.totalorder %s254, %s256
    %p260 = scmp.eq.s32.totalorder %s19, 0
    %p261 = por %p259, %p260
    %p262 = scmp.ne.s32.totalorder %s254, %s256
    %p263 = scmp.eq.s32.totalorder %s24, 3
    %p264 = por %p262, %p263
    %p265 = scmp.ne.s32.totalorder %s256, %s257
    %p266 = scmp.eq.s32.totalorder %s24, 0
    %p267 = por %p265, %p266
    %p268 = scmp.ne.s32.totalorder %s256, %s257
    %p269 = scmp.eq.s32.totalorder %s25, 3
    %p270 = por %p268, %p269
    %p272 = scmp.ne.s32.totalorder %s257, %s271
    %p273 = scmp.eq.s32.totalorder %s25, 0
    %p274 = por %p272, %p273
    %s276 = sadd.s32 %s275, 1
    %p279 = scmp.eq.s32.totalorder %s19, 3
    %p280 = scmp.ne.s32.totalorder %s275, %s277
    %p281 = scmp.eq.s32.totalorder %s19, 0
    %p282 = por %p280, %p281
    %p283 = scmp.ne.s32.totalorder %s275, %s277
    %p284 = scmp.eq.s32.totalorder %s24, 3
    %p285 = por %p283, %p284
    %p286 = scmp.ne.s32.totalorder %s277, %s278
    %p287 = scmp.eq.s32.totalorder %s24, 0
    %p288 = por %p286, %p287
    %p289 = scmp.ne.s32.totalorder %s277, %s278
    %p290 = scmp.eq.s32.totalorder %s25, 3
    %p291 = por %p289, %p290
    %p293 = scmp.ne.s32.totalorder %s278, %s292
    %p294 = scmp.eq.s32.totalorder %s25, 0
    %p295 = por %p293, %p294
    %s297 = sadd.s32 %s296, 1
    %p300 = scmp.eq.s32.totalorder %s19, 3
    %p301 = scmp.ne.s32.totalorder %s296, %s298
    %p302 = scmp.eq.s32.totalorder %s19, 0
    %p303 = por %p301, %p302
    %p304 = scmp.ne.s32.totalorder %s296, %s298
    %p305 = scmp.eq.s32.totalorder %s24, 3
    %p306 = por %p304, %p305
    %p307 = scmp.ne.s32.totalorder %s298, %s299
    %p308 = scmp.eq.s32.totalorder %s24, 0
    %p309 = por %p307, %p308
    %p310 = scmp.ne.s32.totalorder %s298, %s299
    %p311 = scmp.eq.s32.totalorder %s25, 3
    %p312 = por %p310, %p311
    %p314 = scmp.ne.s32.totalorder %s299, %s313
    %p315 = scmp.eq.s32.totalorder %s25, 0
    %p316 = por %p314, %p315
    %s317 = ssub.s32 %s26, %s38
    %s318 = ssub.s32 %s27, %s34
    %s319 = sor.u32 %s317, %s318
    %p320 = scmp.eq.s32.totalorder %s319, 0
    %s322 = sadd.s32 %s321, 1
    %s323 = scalar_select %p320, %s321, %s322
    %p326 = pneg %p320
    %p327 = scmp.eq.s32.totalorder %s19, 3
    %p328 = por %p326, %p327
    %p329 = scmp.ne.s32.totalorder %s321, %s324
    %p330 = scmp.eq.s32.totalorder %s19, 0
    %p331 = por %p329, %p330
    %p332 = scmp.ne.s32.totalorder %s321, %s324
    %p333 = scmp.eq.s32.totalorder %s24, 3
    %p334 = por %p332, %p333
    %p335 = scmp.ne.s32.totalorder %s324, %s325
    %p336 = scmp.eq.s32.totalorder %s24, 0
    %p337 = por %p335, %p336
    %p338 = scmp.ne.s32.totalorder %s324, %s325
    %p339 = scmp.eq.s32.totalorder %s25, 3
    %p340 = por %p338, %p339
    %p342 = scmp.ne.s32.totalorder %s325, %s341
    %p343 = scmp.eq.s32.totalorder %s25, 0
    %p344 = por %p342, %p343
    %p345 = scmp.le.s32.totalorder 1, %s19
    %p346 = scmp.lt.s32.totalorder %s19, 5
    %p347 = pnand %p345, %p346
    %p348 = pneg %p347
    // Predicated region
    $region9: #{bottleneck_forward.1} parent=5 // pred_check
      _
    $region10: #{bottleneck_forward.1} parent=5 // pred_check_branch
      %350 = sbr.rel (%p347) target = $region12
    $region11: #{bottleneck_forward.1} parent=5 // pred_region
      %s351 = ssub.s32 %s19, 1
      // Predicated region
      $region13: #{bottleneck_forward.1} parent=11 // pred_check
        %p352 = pneg %p78
      $region14: #{bottleneck_forward.1} parent=11 // pred_check_branch
        %354 = sbr.rel (%p352) target = $region16
      $region15: #{bottleneck_forward.1} parent=11 // pred_region
        _
      $region16: #{bottleneck_forward.1} parent=11 // pred_fallthru
        _
      // Predicated region
      $region17: #{bottleneck_forward.1} parent=11 // pred_check
        %p355 = pneg %p99
      $region18: #{bottleneck_forward.1} parent=11 // pred_check_branch
        %357 = sbr.rel (%p355) target = $region20
      $region19: #{bottleneck_forward.1} parent=11 // pred_region
        _
      $region20: #{bottleneck_forward.1} parent=11 // pred_fallthru
        _
      // Predicated region
      $region21: #{bottleneck_forward.1} parent=11 // pred_check
        %p358 = pneg %p120
      $region22: #{bottleneck_forward.1} parent=11 // pred_check_branch
        %360 = sbr.rel (%p358) target = $region24
      $region23: #{bottleneck_forward.1} parent=11 // pred_region
        _
      $region24: #{bottleneck_forward.1} parent=11 // pred_fallthru
        _
      // Predicated region
      $region25: #{bottleneck_forward.1} parent=11 // pred_check
        %p361 = pneg %p141
      $region26: #{bottleneck_forward.1} parent=11 // pred_check_branch
        %363 = sbr.rel (%p361) target = $region28
      $region27: #{bottleneck_forward.1} parent=11 // pred_region
        _
      $region28: #{bottleneck_forward.1} parent=11 // pred_fallthru
        _
      // Predicated region
      $region29: #{bottleneck_forward.1} parent=11 // pred_check
        %p364 = pneg %p162
      $region30: #{bottleneck_forward.1} parent=11 // pred_check_branch
        %366 = sbr.rel (%p364) target = $region32
      $region31: #{bottleneck_forward.1} parent=11 // pred_region
        _
      $region32: #{bottleneck_forward.1} parent=11 // pred_fallthru
        _
      // Predicated region
      $region33: #{bottleneck_forward.1} parent=11 // pred_check
        %p367 = pneg %p183
      $region34: #{bottleneck_forward.1} parent=11 // pred_check_branch
        %369 = sbr.rel (%p367) target = $region36
      $region35: #{bottleneck_forward.1} parent=11 // pred_region
        _
      $region36: #{bottleneck_forward.1} parent=11 // pred_fallthru
        _
      // Predicated region
      $region37: #{bottleneck_forward.1} parent=11 // pred_check
        %p370 = pneg %p204
      $region38: #{bottleneck_forward.1} parent=11 // pred_check_branch
        %372 = sbr.rel (%p370) target = $region40
      $region39: #{bottleneck_forward.1} parent=11 // pred_region
        _
      $region40: #{bottleneck_forward.1} parent=11 // pred_fallthru
        _
      // Predicated region
      $region41: #{bottleneck_forward.1} parent=11 // pred_check
        %p373 = pneg %p225
      $region42: #{bottleneck_forward.1} parent=11 // pred_check_branch
        %375 = sbr.rel (%p373) target = $region44
      $region43: #{bottleneck_forward.1} parent=11 // pred_region
        _
      $region44: #{bottleneck_forward.1} parent=11 // pred_fallthru
        _
      // Predicated region
      $region45: #{bottleneck_forward.1} parent=11 // pred_check
        %p376 = pneg %p246
      $region46: #{bottleneck_forward.1} parent=11 // pred_check_branch
        %378 = sbr.rel (%p376) target = $region48
      $region47: #{bottleneck_forward.1} parent=11 // pred_region
        _
      $region48: #{bottleneck_forward.1} parent=11 // pred_fallthru
        _
      // Predicated region
      $region49: #{bottleneck_forward.1} parent=11 // pred_check
        %p379 = pneg %p267
      $region50: #{bottleneck_forward.1} parent=11 // pred_check_branch
        %381 = sbr.rel (%p379) target = $region52
      $region51: #{bottleneck_forward.1} parent=11 // pred_region
        _
      $region52: #{bottleneck_forward.1} parent=11 // pred_fallthru
        _
      // Predicated region
      $region53: #{bottleneck_forward.1} parent=11 // pred_check
        %p382 = pneg %p288
      $region54: #{bottleneck_forward.1} parent=11 // pred_check_branch
        %384 = sbr.rel (%p382) target = $region56
      $region55: #{bottleneck_forward.1} parent=11 // pred_region
        _
      $region56: #{bottleneck_forward.1} parent=11 // pred_fallthru
        _
      // Predicated region
      $region57: #{bottleneck_forward.1} parent=11 // pred_check
        %p385 = pneg %p309
      $region58: #{bottleneck_forward.1} parent=11 // pred_check_branch
        %387 = sbr.rel (%p385) target = $region60
      $region59: #{bottleneck_forward.1} parent=11 // pred_region
        _
      $region60: #{bottleneck_forward.1} parent=11 // pred_fallthru
        _
    $region12: #{bottleneck_forward.1} parent=5 // pred_fallthru
      _
    %p388 = scmp.lt.s32.totalorder %s19, 4
    // Predicated region
    $region61: #{bottleneck_forward.1} parent=5 // pred_check
      %p389 = pneg %p388
    $region62: #{bottleneck_forward.1} parent=5 // pred_check_branch
      %391 = sbr.rel (%p389) target = $region64
    $region63: #{bottleneck_forward.1} parent=5 // pred_region
      // Predicated region
      $region65: #{bottleneck_forward.1} parent=63 // pred_check
        %p392 = pneg %p51
      $region66: #{bottleneck_forward.1} parent=63 // pred_check_branch
        %394 = sbr.rel (%p392) target = $region68
      $region67: #{bottleneck_forward.1} parent=63 // pred_region
        %p395 = scmp.lt.s32.totalorder %s26, 1
        %s396 = scalar_select %p395, %s26, 1
        %s397 = smul.addr %s396, 54
        %s398 = smul.addr %s397, 4
        %s399 = scalar_lea.vmem %s0, %s398
      $region68: #{bottleneck_forward.1} parent=63 // pred_fallthru
        _
    $region64: #{bottleneck_forward.1} parent=5 // pred_fallthru
      _
    %p400 = scmp.le.s32.totalorder 1, %s19
    %p401 = scmp.lt.s32.totalorder %s19, 5
    %p402 = pnand %p400, %p401
    %p403 = pneg %p402
    // Predicated region
    $region69: #{bottleneck_forward.1} parent=5 // pred_check
      _
    $region70: #{bottleneck_forward.1} parent=5 // pred_check_branch
      %405 = sbr.rel (%p402) target = $region72
    $region71: #{bottleneck_forward.1} parent=5 // pred_region
      %s406 = ssub.s32 %s19, 1
      %p407 = scmp.lt.s32.totalorder %s28, 1
      %s408 = scalar_select %p407, %s28, 1
      %s409 = smul.addr %s408, 54
      %s410 = smul.addr %s409, 4
      %s411 = scalar_lea.vmem %s0, %s410
      %p412 = pneg %p57
      %p413 = pneg %p54
      %p414 = pneg %p78
      %p415 = pneg %p75
      %p416 = pneg %p99
      %p417 = pneg %p96
      %p418 = pneg %p120
      %p419 = pneg %p117
      %p420 = pneg %p141
      %p421 = pneg %p138
      %p422 = pneg %p162
      %p423 = pneg %p159
      %p424 = pneg %p183
      %p425 = pneg %p180
      %p426 = pneg %p204
      %p427 = pneg %p201
      %p428 = pneg %p225
      %p429 = pneg %p222
      %p430 = pneg %p246
      %p431 = pneg %p243
      %p432 = pneg %p267
      %p433 = pneg %p264
      %p434 = pneg %p288
      %p435 = pneg %p285
      %p436 = pneg %p309
      %p437 = pneg %p306
      %p438 = pneg %p337
      %p439 = pneg %p334
      %s440 = smul.u32 8, %s29
      %p441 = scmp.lt.s32.totalorder %s28, 1
      %s442 = scalar_select %p441, %s28, 1
      %p443 = scmp.lt.s32.totalorder %s440, 15
      %s444 = scalar_select %p443, %s440, 15
      %s445 = smul.addr %s444, 2
      %s446 = smul.addr %s442, 32
      %s447 = sadd.s32 %s445, %s446
      %s448 = smul.addr %s447, 4
      %s449 = scalar_lea.vmem %s13, %s448
      %p450 = scmp.lt.s32.totalorder %s28, 1
      %s451 = scalar_select %p450, %s28, 1
      %s452 = smul.addr %s451, 54
      %s453 = smul.addr %s452, 4
      %s454 = scalar_lea.vmem %s0, %s453
      %s455 = smul.u32 8, %s29
      %p456 = scmp.lt.s32.totalorder %s28, 1
      %s457 = scalar_select %p456, %s28, 1
      %p458 = scmp.lt.s32.totalorder %s455, 15
      %s459 = scalar_select %p458, %s455, 15
      %s460 = smul.addr %s459, 2
      %s461 = smul.addr %s457, 32
      %s462 = sadd.s32 %s460, %s461
      %s463 = smul.addr %s462, 4
      %s464 = scalar_lea.vmem %s13, %s463
      %s465 = smul.u32 8, %s29
      %s467 = smul.u32 %s29, 8
      %s468 = smul.u32 %s467, 3
      %s469 = smul.addr %s468, 4
      %s470 = scalar_lea.vmem %s454, %s469
      %v471 = vld [vmem:[%s470] sm:$0xf]
      %v472 = vld [vmem:[%s470 + $0x4] sm:$0xf]
      %v473 = vld [vmem:[%s470 + $0x8] sm:$0x1]
      %v474 = vld [vmem:[%s470 + $0xc] sm:$0xf]
      %v475 = vld [vmem:[%s470 + $0x10] sm:$0xf]
      %v476 = vld [vmem:[%s470 + $0x14] sm:$0x1]
      %v477 = vld [vmem:[%s470 + $0x18] sm:$0xf]
      %v478 = vld [vmem:[%s470 + $0x1c] sm:$0xf]
      %v479 = vld [vmem:[%s470 + $0x20] sm:$0x1]
      %v480 = vld [vmem:[%s470 + $0x24] sm:$0xf]
      %v481 = vld [vmem:[%s470 + $0x28] sm:$0xf]
      %v482 = vld [vmem:[%s470 + $0x2c] sm:$0x1]
      %v483 = vld [vmem:[%s470 + $0x30] sm:$0xf]
      %v484 = vld [vmem:[%s470 + $0x34] sm:$0xf]
      %v485 = vld [vmem:[%s470 + $0x38] sm:$0x1]
      %v486 = vld [vmem:[%s470 + $0x3c] sm:$0xf]
      %v487 = vld [vmem:[%s470 + $0x40] sm:$0xf]
      %v488 = vld [vmem:[%s470 + $0x44] sm:$0x1]
      %v489 = vld [vmem:[%s470 + $0x48] sm:$0xf]
      %v490 = vld [vmem:[%s470 + $0x4c] sm:$0xf]
      %v491 = vld [vmem:[%s470 + $0x50] sm:$0x1]
      %v492 = vld [vmem:[%s470 + $0x54] sm:$0xf]
      %v493 = vld [vmem:[%s470 + $0x58] sm:$0xf]
      %v494 = vld [vmem:[%s470 + $0x5c] sm:$0x1]
      %v495 = vld [vmem:[%s470 + $0x60] sm:$0xf]
      %v496 = vld [vmem:[%s470 + $0x64] sm:$0xf]
      %v497 = vld [vmem:[%s470 + $0x68] sm:$0x1]
      %v498 = vld [vmem:[%s470 + $0x6c] sm:$0xf]
      %v499 = vld [vmem:[%s470 + $0x70] sm:$0xf]
      %v500 = vld [vmem:[%s470 + $0x74] sm:$0x1]
      %v532 = vunpack.c.l.s4 1966171168
      %v533 = vunpack.c.0.s8 %v532
      %v534 = vlaneseq
      %v535 = vshrl.u32 %v534, 7
      %v536 = vsub.s32 %v533, %v535
      %v537 = vrot.slane %v471, %v536
      %v538 = vcombine.high %v537, %v537
      %v540 = vunpack.c.l.s4 1966171168
      %v541 = vunpack.c.0.s8 %v540
      %v542 = vlaneseq
      %v543 = vshrl.u32 %v542, 7
      %v544 = vsub.s32 %v541, %v543
      %v545 = vrot.slane %v537, %v544
      %v547 = vunpack.c.l.s4 1966171168
      %v548 = vunpack.c.0.s8 %v547
      %v549 = vlaneseq
      %v550 = vshrl.u32 %v549, 7
      %v551 = vsub.s32 %v548, %v550
      %v552 = vrot.slane %v538, %v551
      %v553 = vcombine.high %v545, %v545
      %v554 = vcombine.high %v552, %v552
      %v556 = vunpack.c.l.s4 1966171168
      %v557 = vunpack.c.0.s8 %v556
      %v558 = vlaneseq
      %v559 = vshrl.u32 %v558, 7
      %v560 = vsub.s32 %v557, %v559
      %v561 = vrot.slane %v472, %v560
      %v562 = vcombine.high %v561, %v561
      %v564 = vunpack.c.l.s4 1966171168
      %v565 = vunpack.c.0.s8 %v564
      %v566 = vlaneseq
      %v567 = vshrl.u32 %v566, 7
      %v568 = vsub.s32 %v565, %v567
      %v569 = vrot.slane %v561, %v568
      %v571 = vunpack.c.l.s4 1966171168
      %v572 = vunpack.c.0.s8 %v571
      %v573 = vlaneseq
      %v574 = vshrl.u32 %v573, 7
      %v575 = vsub.s32 %v572, %v574
      %v576 = vrot.slane %v562, %v575
      %v577 = vcombine.high %v569, %v569
      %v578 = vcombine.high %v576, %v576
      %v580 = vunpack.c.l.s4 1966171168
      %v581 = vunpack.c.0.s8 %v580
      %v582 = vlaneseq
      %v583 = vshrl.u32 %v582, 7
      %v584 = vsub.s32 %v581, %v583
      %v585 = vrot.slane %v473, %v584
      %v587 = vunpack.c.l.s4 1966171168
      %v588 = vunpack.c.0.s8 %v587
      %v589 = vlaneseq
      %v590 = vshrl.u32 %v589, 7
      %v591 = vsub.s32 %v588, %v590
      %v592 = vrot.slane %v585, %v591
      %v594 = vunpack.c.l.s4 1966171168
      %v595 = vunpack.c.0.s8 %v594
      %v596 = vlaneseq
      %v597 = vshrl.u32 %v596, 7
      %v598 = vsub.s32 %v595, %v597
      %v599 = vrot.slane %v474, %v598
      %v600 = vcombine.high %v599, %v599
      %v602 = vunpack.c.l.s4 1966171168
      %v603 = vunpack.c.0.s8 %v602
      %v604 = vlaneseq
      %v605 = vshrl.u32 %v604, 7
      %v606 = vsub.s32 %v603, %v605
      %v607 = vrot.slane %v599, %v606
      %v609 = vunpack.c.l.s4 1966171168
      %v610 = vunpack.c.0.s8 %v609
      %v611 = vlaneseq
      %v612 = vshrl.u32 %v611, 7
      %v613 = vsub.s32 %v610, %v612
      %v614 = vrot.slane %v600, %v613
      %v615 = vcombine.high %v607, %v607
      %v616 = vcombine.high %v614, %v614
      %v618 = vunpack.c.l.s4 1966171168
      %v619 = vunpack.c.0.s8 %v618
      %v620 = vlaneseq
      %v621 = vshrl.u32 %v620, 7
      %v622 = vsub.s32 %v619, %v621
      %v623 = vrot.slane %v475, %v622
      %v624 = vcombine.high %v623, %v623
      %v626 = vunpack.c.l.s4 1966171168
      %v627 = vunpack.c.0.s8 %v626
      %v628 = vlaneseq
      %v629 = vshrl.u32 %v628, 7
      %v630 = vsub.s32 %v627, %v629
      %v631 = vrot.slane %v623, %v630
      %v633 = vunpack.c.l.s4 1966171168
      %v634 = vunpack.c.0.s8 %v633
      %v635 = vlaneseq
      %v636 = vshrl.u32 %v635, 7
      %v637 = vsub.s32 %v634, %v636
      %v638 = vrot.slane %v624, %v637
      %v639 = vcombine.high %v631, %v631
      %v640 = vcombine.high %v638, %v638
      %v642 = vunpack.c.l.s4 1966171168
      %v643 = vunpack.c.0.s8 %v642
      %v644 = vlaneseq
      %v645 = vshrl.u32 %v644, 7
      %v646 = vsub.s32 %v643, %v645
      %v647 = vrot.slane %v476, %v646
      %v649 = vunpack.c.l.s4 1966171168
      %v650 = vunpack.c.0.s8 %v649
      %v651 = vlaneseq
      %v652 = vshrl.u32 %v651, 7
      %v653 = vsub.s32 %v650, %v652
      %v654 = vrot.slane %v647, %v653
      %v656 = vunpack.c.l.s4 1966171168
      %v657 = vunpack.c.0.s8 %v656
      %v658 = vlaneseq
      %v659 = vshrl.u32 %v658, 7
      %v660 = vsub.s32 %v657, %v659
      %v661 = vrot.slane %v477, %v660
      %v662 = vcombine.high %v661, %v661
      %v664 = vunpack.c.l.s4 1966171168
      %v665 = vunpack.c.0.s8 %v664
      %v666 = vlaneseq
      %v667 = vshrl.u32 %v666, 7
      %v668 = vsub.s32 %v665, %v667
      %v669 = vrot.slane %v661, %v668
      %v671 = vunpack.c.l.s4 1966171168
      %v672 = vunpack.c.0.s8 %v671
      %v673 = vlaneseq
      %v674 = vshrl.u32 %v673, 7
      %v675 = vsub.s32 %v672, %v674
      %v676 = vrot.slane %v662, %v675
      %v677 = vcombine.high %v669, %v669
      %v678 = vcombine.high %v676, %v676
      %v680 = vunpack.c.l.s4 1966171168
      %v681 = vunpack.c.0.s8 %v680
      %v682 = vlaneseq
      %v683 = vshrl.u32 %v682, 7
      %v684 = vsub.s32 %v681, %v683
      %v685 = vrot.slane %v478, %v684
      %v686 = vcombine.high %v685, %v685
      %v688 = vunpack.c.l.s4 1966171168
      %v689 = vunpack.c.0.s8 %v688
      %v690 = vlaneseq
      %v691 = vshrl.u32 %v690, 7
      %v692 = vsub.s32 %v689, %v691
      %v693 = vrot.slane %v685, %v692
      %v695 = vunpack.c.l.s4 1966171168
      %v696 = vunpack.c.0.s8 %v695
      %v697 = vlaneseq
      %v698 = vshrl.u32 %v697, 7
      %v699 = vsub.s32 %v696, %v698
      %v700 = vrot.slane %v686, %v699
      %v701 = vcombine.high %v693, %v693
      %v702 = vcombine.high %v700, %v700
      %v704 = vunpack.c.l.s4 1966171168
      %v705 = vunpack.c.0.s8 %v704
      %v706 = vlaneseq
      %v707 = vshrl.u32 %v706, 7
      %v708 = vsub.s32 %v705, %v707
      %v709 = vrot.slane %v479, %v708
      %v711 = vunpack.c.l.s4 1966171168
      %v712 = vunpack.c.0.s8 %v711
      %v713 = vlaneseq
      %v714 = vshrl.u32 %v713, 7
      %v715 = vsub.s32 %v712, %v714
      %v716 = vrot.slane %v709, %v715
      %v718 = vunpack.c.l.s4 1966171168
      %v719 = vunpack.c.0.s8 %v718
      %v720 = vlaneseq
      %v721 = vshrl.u32 %v720, 7
      %v722 = vsub.s32 %v719, %v721
      %v723 = vrot.slane %v480, %v722
      %v724 = vcombine.high %v723, %v723
      %v726 = vunpack.c.l.s4 1966171168
      %v727 = vunpack.c.0.s8 %v726
      %v728 = vlaneseq
      %v729 = vshrl.u32 %v728, 7
      %v730 = vsub.s32 %v727, %v729
      %v731 = vrot.slane %v723, %v730
      %v733 = vunpack.c.l.s4 1966171168
      %v734 = vunpack.c.0.s8 %v733
      %v735 = vlaneseq
      %v736 = vshrl.u32 %v735, 7
      %v737 = vsub.s32 %v734, %v736
      %v738 = vrot.slane %v724, %v737
      %v739 = vcombine.high %v731, %v731
      %v740 = vcombine.high %v738, %v738
      %v742 = vunpack.c.l.s4 1966171168
      %v743 = vunpack.c.0.s8 %v742
      %v744 = vlaneseq
      %v745 = vshrl.u32 %v744, 7
      %v746 = vsub.s32 %v743, %v745
      %v747 = vrot.slane %v481, %v746
      %v748 = vcombine.high %v747, %v747
      %v750 = vunpack.c.l.s4 1966171168
      %v751 = vunpack.c.0.s8 %v750
      %v752 = vlaneseq
      %v753 = vshrl.u32 %v752, 7
      %v754 = vsub.s32 %v751, %v753
      %v755 = vrot.slane %v747, %v754
      %v757 = vunpack.c.l.s4 1966171168
      %v758 = vunpack.c.0.s8 %v757
      %v759 = vlaneseq
      %v760 = vshrl.u32 %v759, 7
      %v761 = vsub.s32 %v758, %v760
      %v762 = vrot.slane %v748, %v761
      %v763 = vcombine.high %v755, %v755
      %v764 = vcombine.high %v762, %v762
      %v766 = vunpack.c.l.s4 1966171168
      %v767 = vunpack.c.0.s8 %v766
      %v768 = vlaneseq
      %v769 = vshrl.u32 %v768, 7
      %v770 = vsub.s32 %v767, %v769
      %v771 = vrot.slane %v482, %v770
      %v773 = vunpack.c.l.s4 1966171168
      %v774 = vunpack.c.0.s8 %v773
      %v775 = vlaneseq
      %v776 = vshrl.u32 %v775, 7
      %v777 = vsub.s32 %v774, %v776
      %v778 = vrot.slane %v771, %v777
      %v780 = vunpack.c.l.s4 1966171168
      %v781 = vunpack.c.0.s8 %v780
      %v782 = vlaneseq
      %v783 = vshrl.u32 %v782, 7
      %v784 = vsub.s32 %v781, %v783
      %v785 = vrot.slane %v483, %v784
      %v786 = vcombine.high %v785, %v785
      %v788 = vunpack.c.l.s4 1966171168
      %v789 = vunpack.c.0.s8 %v788
      %v790 = vlaneseq
      %v791 = vshrl.u32 %v790, 7
      %v792 = vsub.s32 %v789, %v791
      %v793 = vrot.slane %v785, %v792
      %v795 = vunpack.c.l.s4 1966171168
      %v796 = vunpack.c.0.s8 %v795
      %v797 = vlaneseq
      %v798 = vshrl.u32 %v797, 7
      %v799 = vsub.s32 %v796, %v798
      %v800 = vrot.slane %v786, %v799
      %v801 = vcombine.high %v793, %v793
      %v802 = vcombine.high %v800, %v800
      %v804 = vunpack.c.l.s4 1966171168
      %v805 = vunpack.c.0.s8 %v804
      %v806 = vlaneseq
      %v807 = vshrl.u32 %v806, 7
      %v808 = vsub.s32 %v805, %v807
      %v809 = vrot.slane %v484, %v808
      %v810 = vcombine.high %v809, %v809
      %v812 = vunpack.c.l.s4 1966171168
      %v813 = vunpack.c.0.s8 %v812
      %v814 = vlaneseq
      %v815 = vshrl.u32 %v814, 7
      %v816 = vsub.s32 %v813, %v815
      %v817 = vrot.slane %v809, %v816
      %v819 = vunpack.c.l.s4 1966171168
      %v820 = vunpack.c.0.s8 %v819
      %v821 = vlaneseq
      %v822 = vshrl.u32 %v821, 7
      %v823 = vsub.s32 %v820, %v822
      %v824 = vrot.slane %v810, %v823
      %v825 = vcombine.high %v817, %v817
      %v826 = vcombine.high %v824, %v824
      %v828 = vunpack.c.l.s4 1966171168
      %v829 = vunpack.c.0.s8 %v828
      %v830 = vlaneseq
      %v831 = vshrl.u32 %v830, 7
      %v832 = vsub.s32 %v829, %v831
      %v833 = vrot.slane %v485, %v832
      %v835 = vunpack.c.l.s4 1966171168
      %v836 = vunpack.c.0.s8 %v835
      %v837 = vlaneseq
      %v838 = vshrl.u32 %v837, 7
      %v839 = vsub.s32 %v836, %v838
      %v840 = vrot.slane %v833, %v839
      %v842 = vunpack.c.l.s4 1966171168
      %v843 = vunpack.c.0.s8 %v842
      %v844 = vlaneseq
      %v845 = vshrl.u32 %v844, 7
      %v846 = vsub.s32 %v843, %v845
      %v847 = vrot.slane %v486, %v846
      %v848 = vcombine.high %v847, %v847
      %v850 = vunpack.c.l.s4 1966171168
      %v851 = vunpack.c.0.s8 %v850
      %v852 = vlaneseq
      %v853 = vshrl.u32 %v852, 7
      %v854 = vsub.s32 %v851, %v853
      %v855 = vrot.slane %v847, %v854
      %v857 = vunpack.c.l.s4 1966171168
      %v858 = vunpack.c.0.s8 %v857
      %v859 = vlaneseq
      %v860 = vshrl.u32 %v859, 7
      %v861 = vsub.s32 %v858, %v860
      %v862 = vrot.slane %v848, %v861
      %v863 = vcombine.high %v855, %v855
      %v864 = vcombine.high %v862, %v862
      %v866 = vunpack.c.l.s4 1966171168
      %v867 = vunpack.c.0.s8 %v866
      %v868 = vlaneseq
      %v869 = vshrl.u32 %v868, 7
      %v870 = vsub.s32 %v867, %v869
      %v871 = vrot.slane %v487, %v870
      %v872 = vcombine.high %v871, %v871
      %v874 = vunpack.c.l.s4 1966171168
      %v875 = vunpack.c.0.s8 %v874
      %v876 = vlaneseq
      %v877 = vshrl.u32 %v876, 7
      %v878 = vsub.s32 %v875, %v877
      %v879 = vrot.slane %v871, %v878
      %v881 = vunpack.c.l.s4 1966171168
      %v882 = vunpack.c.0.s8 %v881
      %v883 = vlaneseq
      %v884 = vshrl.u32 %v883, 7
      %v885 = vsub.s32 %v882, %v884
      %v886 = vrot.slane %v872, %v885
      %v887 = vcombine.high %v879, %v879
      %v888 = vcombine.high %v886, %v886
      %v890 = vunpack.c.l.s4 1966171168
      %v891 = vunpack.c.0.s8 %v890
      %v892 = vlaneseq
      %v893 = vshrl.u32 %v892, 7
      %v894 = vsub.s32 %v891, %v893
      %v895 = vrot.slane %v488, %v894
      %v897 = vunpack.c.l.s4 1966171168
      %v898 = vunpack.c.0.s8 %v897
      %v899 = vlaneseq
      %v900 = vshrl.u32 %v899, 7
      %v901 = vsub.s32 %v898, %v900
      %v902 = vrot.slane %v895, %v901
      %v904 = vunpack.c.l.s4 1966171168
      %v905 = vunpack.c.0.s8 %v904
      %v906 = vlaneseq
      %v907 = vshrl.u32 %v906, 7
      %v908 = vsub.s32 %v905, %v907
      %v909 = vrot.slane %v489, %v908
      %v910 = vcombine.high %v909, %v909
      %v912 = vunpack.c.l.s4 1966171168
      %v913 = vunpack.c.0.s8 %v912
      %v914 = vlaneseq
      %v915 = vshrl.u32 %v914, 7
      %v916 = vsub.s32 %v913, %v915
      %v917 = vrot.slane %v909, %v916
      %v919 = vunpack.c.l.s4 1966171168
      %v920 = vunpack.c.0.s8 %v919
      %v921 = vlaneseq
      %v922 = vshrl.u32 %v921, 7
      %v923 = vsub.s32 %v920, %v922
      %v924 = vrot.slane %v910, %v923
      %v925 = vcombine.high %v917, %v917
      %v926 = vcombine.high %v924, %v924
      %v928 = vunpack.c.l.s4 1966171168
      %v929 = vunpack.c.0.s8 %v928
      %v930 = vlaneseq
      %v931 = vshrl.u32 %v930, 7
      %v932 = vsub.s32 %v929, %v931
      %v933 = vrot.slane %v490, %v932
      %v934 = vcombine.high %v933, %v933
      %v936 = vunpack.c.l.s4 1966171168
      %v937 = vunpack.c.0.s8 %v936
      %v938 = vlaneseq
      %v939 = vshrl.u32 %v938, 7
      %v940 = vsub.s32 %v937, %v939
      %v941 = vrot.slane %v933, %v940
      %v943 = vunpack.c.l.s4 1966171168
      %v944 = vunpack.c.0.s8 %v943
      %v945 = vlaneseq
      %v946 = vshrl.u32 %v945, 7
      %v947 = vsub.s32 %v944, %v946
      %v948 = vrot.slane %v934, %v947
      %v949 = vcombine.high %v941, %v941
      %v950 = vcombine.high %v948, %v948
      %v952 = vunpack.c.l.s4 1966171168
      %v953 = vunpack.c.0.s8 %v952
      %v954 = vlaneseq
      %v955 = vshrl.u32 %v954, 7
      %v956 = vsub.s32 %v953, %v955
      %v957 = vrot.slane %v491, %v956
      %v959 = vunpack.c.l.s4 1966171168
      %v960 = vunpack.c.0.s8 %v959
      %v961 = vlaneseq
      %v962 = vshrl.u32 %v961, 7
      %v963 = vsub.s32 %v960, %v962
      %v964 = vrot.slane %v957, %v963
      %v966 = vunpack.c.l.s4 1966171168
      %v967 = vunpack.c.0.s8 %v966
      %v968 = vlaneseq
      %v969 = vshrl.u32 %v968, 7
      %v970 = vsub.s32 %v967, %v969
      %v971 = vrot.slane %v492, %v970
      %v972 = vcombine.high %v971, %v971
      %v974 = vunpack.c.l.s4 1966171168
      %v975 = vunpack.c.0.s8 %v974
      %v976 = vlaneseq
      %v977 = vshrl.u32 %v976, 7
      %v978 = vsub.s32 %v975, %v977
      %v979 = vrot.slane %v971, %v978
      %v981 = vunpack.c.l.s4 1966171168
      %v982 = vunpack.c.0.s8 %v981
      %v983 = vlaneseq
      %v984 = vshrl.u32 %v983, 7
      %v985 = vsub.s32 %v982, %v984
      %v986 = vrot.slane %v972, %v985
      %v987 = vcombine.high %v979, %v979
      %v988 = vcombine.high %v986, %v986
      %v990 = vunpack.c.l.s4 1966171168
      %v991 = vunpack.c.0.s8 %v990
      %v992 = vlaneseq
      %v993 = vshrl.u32 %v992, 7
      %v994 = vsub.s32 %v991, %v993
      %v995 = vrot.slane %v493, %v994
      %v996 = vcombine.high %v995, %v995
      %v998 = vunpack.c.l.s4 1966171168
      %v999 = vunpack.c.0.s8 %v998
      %v1000 = vlaneseq
      %v1001 = vshrl.u32 %v1000, 7
      %v1002 = vsub.s32 %v999, %v1001
      %v1003 = vrot.slane %v995, %v1002
      %v1005 = vunpack.c.l.s4 1966171168
      %v1006 = vunpack.c.0.s8 %v1005
      %v1007 = vlaneseq
      %v1008 = vshrl.u32 %v1007, 7
      %v1009 = vsub.s32 %v1006, %v1008
      %v1010 = vrot.slane %v996, %v1009
      %v1011 = vcombine.high %v1003, %v1003
      %v1012 = vcombine.high %v1010, %v1010
      %v1014 = vunpack.c.l.s4 1966171168
      %v1015 = vunpack.c.0.s8 %v1014
      %v1016 = vlaneseq
      %v1017 = vshrl.u32 %v1016, 7
      %v1018 = vsub.s32 %v1015, %v1017
      %v1019 = vrot.slane %v494, %v1018
      %v1021 = vunpack.c.l.s4 1966171168
      %v1022 = vunpack.c.0.s8 %v1021
      %v1023 = vlaneseq
      %v1024 = vshrl.u32 %v1023, 7
      %v1025 = vsub.s32 %v1022, %v1024
      %v1026 = vrot.slane %v1019, %v1025
      %v1028 = vunpack.c.l.s4 1966171168
      %v1029 = vunpack.c.0.s8 %v1028
      %v1030 = vlaneseq
      %v1031 = vshrl.u32 %v1030, 7
      %v1032 = vsub.s32 %v1029, %v1031
      %v1033 = vrot.slane %v495, %v1032
      %v1034 = vcombine.high %v1033, %v1033
      %v1036 = vunpack.c.l.s4 1966171168
      %v1037 = vunpack.c.0.s8 %v1036
      %v1038 = vlaneseq
      %v1039 = vshrl.u32 %v1038, 7
      %v1040 = vsub.s32 %v1037, %v1039
      %v1041 = vrot.slane %v1033, %v1040
      %v1043 = vunpack.c.l.s4 1966171168
      %v1044 = vunpack.c.0.s8 %v1043
      %v1045 = vlaneseq
      %v1046 = vshrl.u32 %v1045, 7
      %v1047 = vsub.s32 %v1044, %v1046
      %v1048 = vrot.slane %v1034, %v1047
      %v1049 = vcombine.high %v1041, %v1041
      %v1050 = vcombine.high %v1048, %v1048
      %v1052 = vunpack.c.l.s4 1966171168
      %v1053 = vunpack.c.0.s8 %v1052
      %v1054 = vlaneseq
      %v1055 = vshrl.u32 %v1054, 7
      %v1056 = vsub.s32 %v1053, %v1055
      %v1057 = vrot.slane %v496, %v1056
      %v1058 = vcombine.high %v1057, %v1057
      %v1060 = vunpack.c.l.s4 1966171168
      %v1061 = vunpack.c.0.s8 %v1060
      %v1062 = vlaneseq
      %v1063 = vshrl.u32 %v1062, 7
      %v1064 = vsub.s32 %v1061, %v1063
      %v1065 = vrot.slane %v1057, %v1064
      %v1067 = vunpack.c.l.s4 1966171168
      %v1068 = vunpack.c.0.s8 %v1067
      %v1069 = vlaneseq
      %v1070 = vshrl.u32 %v1069, 7
      %v1071 = vsub.s32 %v1068, %v1070
      %v1072 = vrot.slane %v1058, %v1071
      %v1073 = vcombine.high %v1065, %v1065
      %v1074 = vcombine.high %v1072, %v1072
      %v1076 = vunpack.c.l.s4 1966171168
      %v1077 = vunpack.c.0.s8 %v1076
      %v1078 = vlaneseq
      %v1079 = vshrl.u32 %v1078, 7
      %v1080 = vsub.s32 %v1077, %v1079
      %v1081 = vrot.slane %v497, %v1080
      %v1083 = vunpack.c.l.s4 1966171168
      %v1084 = vunpack.c.0.s8 %v1083
      %v1085 = vlaneseq
      %v1086 = vshrl.u32 %v1085, 7
      %v1087 = vsub.s32 %v1084, %v1086
      %v1088 = vrot.slane %v1081, %v1087
      %v1090 = vunpack.c.l.s4 1966171168
      %v1091 = vunpack.c.0.s8 %v1090
      %v1092 = vlaneseq
      %v1093 = vshrl.u32 %v1092, 7
      %v1094 = vsub.s32 %v1091, %v1093
      %v1095 = vrot.slane %v498, %v1094
      %v1096 = vcombine.high %v1095, %v1095
      %v1098 = vunpack.c.l.s4 1966171168
      %v1099 = vunpack.c.0.s8 %v1098
      %v1100 = vlaneseq
      %v1101 = vshrl.u32 %v1100, 7
      %v1102 = vsub.s32 %v1099, %v1101
      %v1103 = vrot.slane %v1095, %v1102
      %v1105 = vunpack.c.l.s4 1966171168
      %v1106 = vunpack.c.0.s8 %v1105
      %v1107 = vlaneseq
      %v1108 = vshrl.u32 %v1107, 7
      %v1109 = vsub.s32 %v1106, %v1108
      %v1110 = vrot.slane %v1096, %v1109
      %v1111 = vcombine.high %v1103, %v1103
      %v1112 = vcombine.high %v1110, %v1110
      %v1114 = vunpack.c.l.s4 1966171168
      %v1115 = vunpack.c.0.s8 %v1114
      %v1116 = vlaneseq
      %v1117 = vshrl.u32 %v1116, 7
      %v1118 = vsub.s32 %v1115, %v1117
      %v1119 = vrot.slane %v499, %v1118
      %v1120 = vcombine.high %v1119, %v1119
      %v1122 = vunpack.c.l.s4 1966171168
      %v1123 = vunpack.c.0.s8 %v1122
      %v1124 = vlaneseq
      %v1125 = vshrl.u32 %v1124, 7
      %v1126 = vsub.s32 %v1123, %v1125
      %v1127 = vrot.slane %v1119, %v1126
      %v1129 = vunpack.c.l.s4 1966171168
      %v1130 = vunpack.c.0.s8 %v1129
      %v1131 = vlaneseq
      %v1132 = vshrl.u32 %v1131, 7
      %v1133 = vsub.s32 %v1130, %v1132
      %v1134 = vrot.slane %v1120, %v1133
      %v1135 = vcombine.high %v1127, %v1127
      %v1136 = vcombine.high %v1134, %v1134
      %v1138 = vunpack.c.l.s4 1966171168
      %v1139 = vunpack.c.0.s8 %v1138
      %v1140 = vlaneseq
      %v1141 = vshrl.u32 %v1140, 7
      %v1142 = vsub.s32 %v1139, %v1141
      %v1143 = vrot.slane %v500, %v1142
      %v1145 = vunpack.c.l.s4 1966171168
      %v1146 = vunpack.c.0.s8 %v1145
      %v1147 = vlaneseq
      %v1148 = vshrl.u32 %v1147, 7
      %v1149 = vsub.s32 %v1146, %v1148
      %v1150 = vrot.slane %v1143, %v1149
      %v1151 = vld [vmem:[%s1] sm:$0x3]
      %v1152 = vcombine.low %v545, %v552
      %v1153 = vcombine.low %v553, %v554
      %v1154 = vcombine.low %v569, %v576
      %v1155 = vcombine.low %v577, %v578
      %v1157 = vunpack.c.l.s4 1966171168
      %v1158 = vunpack.c.0.s8 %v1157
      %v1159 = vlaneseq
      %v1160 = vshrl.u32 %v1159, 7
      %v1161 = vsub.s32 %v1158, %v1160
      %v1162 = vrot.slane %v1152, %v1161
      %v1164 = vunpack.c.l.s4 1966171168
      %v1165 = vunpack.c.0.s8 %v1164
      %v1166 = vlaneseq
      %v1167 = vshrl.u32 %v1166, 7
      %v1168 = vsub.s32 %v1165, %v1167
      %v1169 = vrot.slane %v1153, %v1168
      %v1171 = vunpack.c.l.s4 1966171168
      %v1172 = vunpack.c.0.s8 %v1171
      %v1173 = vlaneseq
      %v1174 = vshrl.u32 %v1173, 7
      %v1175 = vsub.s32 %v1172, %v1174
      %v1176 = vrot.slane %v1154, %v1175
      %v1178 = vunpack.c.l.s4 1966171168
      %v1179 = vunpack.c.0.s8 %v1178
      %v1180 = vlaneseq
      %v1181 = vshrl.u32 %v1180, 7
      %v1182 = vsub.s32 %v1179, %v1181
      %v1183 = vrot.slane %v1155, %v1182
      %v1184 = vcombine.low %v1162, %v1169
      %v1185 = vcombine.low %v1176, %v1183
      %v1187 = vunpack.c.l.s4 1966171168
      %v1188 = vunpack.c.0.s8 %v1187
      %v1189 = vlaneseq
      %v1190 = vshrl.u32 %v1189, 7
      %v1191 = vsub.s32 %v1188, %v1190
      %v1192 = vrot.slane %v1184, %v1191
      %v1194 = vunpack.c.l.s4 1966171168
      %v1195 = vunpack.c.0.s8 %v1194
      %v1196 = vlaneseq
      %v1197 = vshrl.u32 %v1196, 7
      %v1198 = vsub.s32 %v1195, %v1197
      %v1199 = vrot.slane %v1185, %v1198
      %v1200 = vcombine.low %v1192, %v1199
      %v1201 = vcombine.low %v592, %v607
      %v1202 = vcombine.low %v614, %v615
      %v1203 = vcombine.low %v616, %v631
      %v1204 = vcombine.low %v638, %v639
      %v1206 = vunpack.c.l.s4 1966171168
      %v1207 = vunpack.c.0.s8 %v1206
      %v1208 = vlaneseq
      %v1209 = vshrl.u32 %v1208, 7
      %v1210 = vsub.s32 %v1207, %v1209
      %v1211 = vrot.slane %v1201, %v1210
      %v1213 = vunpack.c.l.s4 1966171168
      %v1214 = vunpack.c.0.s8 %v1213
      %v1215 = vlaneseq
      %v1216 = vshrl.u32 %v1215, 7
      %v1217 = vsub.s32 %v1214, %v1216
      %v1218 = vrot.slane %v1202, %v1217
      %v1220 = vunpack.c.l.s4 1966171168
      %v1221 = vunpack.c.0.s8 %v1220
      %v1222 = vlaneseq
      %v1223 = vshrl.u32 %v1222, 7
      %v1224 = vsub.s32 %v1221, %v1223
      %v1225 = vrot.slane %v1203, %v1224
      %v1227 = vunpack.c.l.s4 1966171168
      %v1228 = vunpack.c.0.s8 %v1227
      %v1229 = vlaneseq
      %v1230 = vshrl.u32 %v1229, 7
      %v1231 = vsub.s32 %v1228, %v1230
      %v1232 = vrot.slane %v1204, %v1231
      %v1233 = vcombine.low %v1211, %v1218
      %v1234 = vcombine.low %v1225, %v1232
      %v1236 = vunpack.c.l.s4 1966171168
      %v1237 = vunpack.c.0.s8 %v1236
      %v1238 = vlaneseq
      %v1239 = vshrl.u32 %v1238, 7
      %v1240 = vsub.s32 %v1237, %v1239
      %v1241 = vrot.slane %v1233, %v1240
      %v1243 = vunpack.c.l.s4 1966171168
      %v1244 = vunpack.c.0.s8 %v1243
      %v1245 = vlaneseq
      %v1246 = vshrl.u32 %v1245, 7
      %v1247 = vsub.s32 %v1244, %v1246
      %v1248 = vrot.slane %v1234, %v1247
      %v1249 = vcombine.low %v1241, %v1248
      %v1250 = vcombine.low %v640, %v654
      %v1251 = vcombine.low %v669, %v676
      %v1252 = vcombine.low %v677, %v678
      %v1253 = vcombine.low %v693, %v700
      %v1255 = vunpack.c.l.s4 1966171168
      %v1256 = vunpack.c.0.s8 %v1255
      %v1257 = vlaneseq
      %v1258 = vshrl.u32 %v1257, 7
      %v1259 = vsub.s32 %v1256, %v1258
      %v1260 = vrot.slane %v1250, %v1259
      %v1262 = vunpack.c.l.s4 1966171168
      %v1263 = vunpack.c.0.s8 %v1262
      %v1264 = vlaneseq
      %v1265 = vshrl.u32 %v1264, 7
      %v1266 = vsub.s32 %v1263, %v1265
      %v1267 = vrot.slane %v1251, %v1266
      %v1269 = vunpack.c.l.s4 1966171168
      %v1270 = vunpack.c.0.s8 %v1269
      %v1271 = vlaneseq
      %v1272 = vshrl.u32 %v1271, 7
      %v1273 = vsub.s32 %v1270, %v1272
      %v1274 = vrot.slane %v1252, %v1273
      %v1276 = vunpack.c.l.s4 1966171168
      %v1277 = vunpack.c.0.s8 %v1276
      %v1278 = vlaneseq
      %v1279 = vshrl.u32 %v1278, 7
      %v1280 = vsub.s32 %v1277, %v1279
      %v1281 = vrot.slane %v1253, %v1280
      %v1282 = vcombine.low %v1260, %v1267
      %v1283 = vcombine.low %v1274, %v1281
      %v1285 = vunpack.c.l.s4 1966171168
      %v1286 = vunpack.c.0.s8 %v1285
      %v1287 = vlaneseq
      %v1288 = vshrl.u32 %v1287, 7
      %v1289 = vsub.s32 %v1286, %v1288
      %v1290 = vrot.slane %v1282, %v1289
      %v1292 = vunpack.c.l.s4 1966171168
      %v1293 = vunpack.c.0.s8 %v1292
      %v1294 = vlaneseq
      %v1295 = vshrl.u32 %v1294, 7
      %v1296 = vsub.s32 %v1293, %v1295
      %v1297 = vrot.slane %v1283, %v1296
      %v1298 = vcombine.low %v1290, %v1297
      %v1299 = vcombine.low %v701, %v702
      %v1300 = vcombine.low %v716, %v731
      %v1301 = vcombine.low %v738, %v739
      %v1302 = vcombine.low %v740, %v755
      %v1304 = vunpack.c.l.s4 1966171168
      %v1305 = vunpack.c.0.s8 %v1304
      %v1306 = vlaneseq
      %v1307 = vshrl.u32 %v1306, 7
      %v1308 = vsub.s32 %v1305, %v1307
      %v1309 = vrot.slane %v1299, %v1308
      %v1311 = vunpack.c.l.s4 1966171168
      %v1312 = vunpack.c.0.s8 %v1311
      %v1313 = vlaneseq
      %v1314 = vshrl.u32 %v1313, 7
      %v1315 = vsub.s32 %v1312, %v1314
      %v1316 = vrot.slane %v1300, %v1315
      %v1318 = vunpack.c.l.s4 1966171168
      %v1319 = vunpack.c.0.s8 %v1318
      %v1320 = vlaneseq
      %v1321 = vshrl.u32 %v1320, 7
      %v1322 = vsub.s32 %v1319, %v1321
      %v1323 = vrot.slane %v1301, %v1322
      %v1325 = vunpack.c.l.s4 1966171168
      %v1326 = vunpack.c.0.s8 %v1325
      %v1327 = vlaneseq
      %v1328 = vshrl.u32 %v1327, 7
      %v1329 = vsub.s32 %v1326, %v1328
      %v1330 = vrot.slane %v1302, %v1329
      %v1331 = vcombine.low %v1309, %v1316
      %v1332 = vcombine.low %v1323, %v1330
      %v1334 = vunpack.c.l.s4 1966171168
      %v1335 = vunpack.c.0.s8 %v1334
      %v1336 = vlaneseq
      %v1337 = vshrl.u32 %v1336, 7
      %v1338 = vsub.s32 %v1335, %v1337
      %v1339 = vrot.slane %v1331, %v1338
      %v1341 = vunpack.c.l.s4 1966171168
      %v1342 = vunpack.c.0.s8 %v1341
      %v1343 = vlaneseq
      %v1344 = vshrl.u32 %v1343, 7
      %v1345 = vsub.s32 %v1342, %v1344
      %v1346 = vrot.slane %v1332, %v1345
      %v1347 = vcombine.low %v1339, %v1346
      %v1348 = vcombine.low %v762, %v763
      %v1349 = vcombine.low %v764, %v778
      %v1350 = vcombine.low %v793, %v800
      %v1351 = vcombine.low %v801, %v802
      %v1353 = vunpack.c.l.s4 1966171168
      %v1354 = vunpack.c.0.s8 %v1353
      %v1355 = vlaneseq
      %v1356 = vshrl.u32 %v1355, 7
      %v1357 = vsub.s32 %v1354, %v1356
      %v1358 = vrot.slane %v1348, %v1357
      %v1360 = vunpack.c.l.s4 1966171168
      %v1361 = vunpack.c.0.s8 %v1360
      %v1362 = vlaneseq
      %v1363 = vshrl.u32 %v1362, 7
      %v1364 = vsub.s32 %v1361, %v1363
      %v1365 = vrot.slane %v1349, %v1364
      %v1367 = vunpack.c.l.s4 1966171168
      %v1368 = vunpack.c.0.s8 %v1367
      %v1369 = vlaneseq
      %v1370 = vshrl.u32 %v1369, 7
      %v1371 = vsub.s32 %v1368, %v1370
      %v1372 = vrot.slane %v1350, %v1371
      %v1374 = vunpack.c.l.s4 1966171168
      %v1375 = vunpack.c.0.s8 %v1374
      %v1376 = vlaneseq
      %v1377 = vshrl.u32 %v1376, 7
      %v1378 = vsub.s32 %v1375, %v1377
      %v1379 = vrot.slane %v1351, %v1378
      %v1380 = vcombine.low %v1358, %v1365
      %v1381 = vcombine.low %v1372, %v1379
      %v1383 = vunpack.c.l.s4 1966171168
      %v1384 = vunpack.c.0.s8 %v1383
      %v1385 = vlaneseq
      %v1386 = vshrl.u32 %v1385, 7
      %v1387 = vsub.s32 %v1384, %v1386
      %v1388 = vrot.slane %v1380, %v1387
      %v1390 = vunpack.c.l.s4 1966171168
      %v1391 = vunpack.c.0.s8 %v1390
      %v1392 = vlaneseq
      %v1393 = vshrl.u32 %v1392, 7
      %v1394 = vsub.s32 %v1391, %v1393
      %v1395 = vrot.slane %v1381, %v1394
      %v1396 = vcombine.low %v1388, %v1395
      %v1397 = vcombine.low %v817, %v824
      %v1398 = vcombine.low %v825, %v826
      %v1399 = vcombine.low %v840, %v855
      %v1400 = vcombine.low %v862, %v863
      %v1402 = vunpack.c.l.s4 1966171168
      %v1403 = vunpack.c.0.s8 %v1402
      %v1404 = vlaneseq
      %v1405 = vshrl.u32 %v1404, 7
      %v1406 = vsub.s32 %v1403, %v1405
      %v1407 = vrot.slane %v1397, %v1406
      %v1409 = vunpack.c.l.s4 1966171168
      %v1410 = vunpack.c.0.s8 %v1409
      %v1411 = vlaneseq
      %v1412 = vshrl.u32 %v1411, 7
      %v1413 = vsub.s32 %v1410, %v1412
      %v1414 = vrot.slane %v1398, %v1413
      %v1416 = vunpack.c.l.s4 1966171168
      %v1417 = vunpack.c.0.s8 %v1416
      %v1418 = vlaneseq
      %v1419 = vshrl.u32 %v1418, 7
      %v1420 = vsub.s32 %v1417, %v1419
      %v1421 = vrot.slane %v1399, %v1420
      %v1423 = vunpack.c.l.s4 1966171168
      %v1424 = vunpack.c.0.s8 %v1423
      %v1425 = vlaneseq
      %v1426 = vshrl.u32 %v1425, 7
      %v1427 = vsub.s32 %v1424, %v1426
      %v1428 = vrot.slane %v1400, %v1427
      %v1429 = vcombine.low %v1407, %v1414
      %v1430 = vcombine.low %v1421, %v1428
      %v1432 = vunpack.c.l.s4 1966171168
      %v1433 = vunpack.c.0.s8 %v1432
      %v1434 = vlaneseq
      %v1435 = vshrl.u32 %v1434, 7
      %v1436 = vsub.s32 %v1433, %v1435
      %v1437 = vrot.slane %v1429, %v1436
      %v1439 = vunpack.c.l.s4 1966171168
      %v1440 = vunpack.c.0.s8 %v1439
      %v1441 = vlaneseq
      %v1442 = vshrl.u32 %v1441, 7
      %v1443 = vsub.s32 %v1440, %v1442
      %v1444 = vrot.slane %v1430, %v1443
      %v1445 = vcombine.low %v1437, %v1444
      %v1446 = vcombine.low %v864, %v879
      %v1447 = vcombine.low %v886, %v887
      %v1448 = vcombine.low %v888, %v902
      %v1449 = vcombine.low %v917, %v924
      %v1451 = vunpack.c.l.s4 1966171168
      %v1452 = vunpack.c.0.s8 %v1451
      %v1453 = vlaneseq
      %v1454 = vshrl.u32 %v1453, 7
      %v1455 = vsub.s32 %v1452, %v1454
      %v1456 = vrot.slane %v1446, %v1455
      %v1458 = vunpack.c.l.s4 1966171168
      %v1459 = vunpack.c.0.s8 %v1458
      %v1460 = vlaneseq
      %v1461 = vshrl.u32 %v1460, 7
      %v1462 = vsub.s32 %v1459, %v1461
      %v1463 = vrot.slane %v1447, %v1462
      %v1465 = vunpack.c.l.s4 1966171168
      %v1466 = vunpack.c.0.s8 %v1465
      %v1467 = vlaneseq
      %v1468 = vshrl.u32 %v1467, 7
      %v1469 = vsub.s32 %v1466, %v1468
      %v1470 = vrot.slane %v1448, %v1469
      %v1472 = vunpack.c.l.s4 1966171168
      %v1473 = vunpack.c.0.s8 %v1472
      %v1474 = vlaneseq
      %v1475 = vshrl.u32 %v1474, 7
      %v1476 = vsub.s32 %v1473, %v1475
      %v1477 = vrot.slane %v1449, %v1476
      %v1478 = vcombine.low %v1456, %v1463
      %v1479 = vcombine.low %v1470, %v1477
      %v1481 = vunpack.c.l.s4 1966171168
      %v1482 = vunpack.c.0.s8 %v1481
      %v1483 = vlaneseq
      %v1484 = vshrl.u32 %v1483, 7
      %v1485 = vsub.s32 %v1482, %v1484
      %v1486 = vrot.slane %v1478, %v1485
      %v1488 = vunpack.c.l.s4 1966171168
      %v1489 = vunpack.c.0.s8 %v1488
      %v1490 = vlaneseq
      %v1491 = vshrl.u32 %v1490, 7
      %v1492 = vsub.s32 %v1489, %v1491
      %v1493 = vrot.slane %v1479, %v1492
      %v1494 = vcombine.low %v1486, %v1493
      %v1495 = vcombine.low %v925, %v926
      %v1496 = vcombine.low %v941, %v948
      %v1497 = vcombine.low %v949, %v950
      %v1498 = vcombine.low %v964, %v979
      %v1500 = vunpack.c.l.s4 1966171168
      %v1501 = vunpack.c.0.s8 %v1500
      %v1502 = vlaneseq
      %v1503 = vshrl.u32 %v1502, 7
      %v1504 = vsub.s32 %v1501, %v1503
      %v1505 = vrot.slane %v1495, %v1504
      %v1507 = vunpack.c.l.s4 1966171168
      %v1508 = vunpack.c.0.s8 %v1507
      %v1509 = vlaneseq
      %v1510 = vshrl.u32 %v1509, 7
      %v1511 = vsub.s32 %v1508, %v1510
      %v1512 = vrot.slane %v1496, %v1511
      %v1514 = vunpack.c.l.s4 1966171168
      %v1515 = vunpack.c.0.s8 %v1514
      %v1516 = vlaneseq
      %v1517 = vshrl.u32 %v1516, 7
      %v1518 = vsub.s32 %v1515, %v1517
      %v1519 = vrot.slane %v1497, %v1518
      %v1521 = vunpack.c.l.s4 1966171168
      %v1522 = vunpack.c.0.s8 %v1521
      %v1523 = vlaneseq
      %v1524 = vshrl.u32 %v1523, 7
      %v1525 = vsub.s32 %v1522, %v1524
      %v1526 = vrot.slane %v1498, %v1525
      %v1527 = vcombine.low %v1505, %v1512
      %v1528 = vcombine.low %v1519, %v1526
      %v1530 = vunpack.c.l.s4 1966171168
      %v1531 = vunpack.c.0.s8 %v1530
      %v1532 = vlaneseq
      %v1533 = vshrl.u32 %v1532, 7
      %v1534 = vsub.s32 %v1531, %v1533
      %v1535 = vrot.slane %v1527, %v1534
      %v1537 = vunpack.c.l.s4 1966171168
      %v1538 = vunpack.c.0.s8 %v1537
      %v1539 = vlaneseq
      %v1540 = vshrl.u32 %v1539, 7
      %v1541 = vsub.s32 %v1538, %v1540
      %v1542 = vrot.slane %v1528, %v1541
      %v1543 = vcombine.low %v1535, %v1542
      %v1544 = vcombine.low %v986, %v987
      %v1545 = vcombine.low %v988, %v1003
      %v1546 = vcombine.low %v1010, %v1011
      %v1547 = vcombine.low %v1012, %v1026
      %v1549 = vunpack.c.l.s4 1966171168
      %v1550 = vunpack.c.0.s8 %v1549
      %v1551 = vlaneseq
      %v1552 = vshrl.u32 %v1551, 7
      %v1553 = vsub.s32 %v1550, %v1552
      %v1554 = vrot.slane %v1544, %v1553
      %v1556 = vunpack.c.l.s4 1966171168
      %v1557 = vunpack.c.0.s8 %v1556
      %v1558 = vlaneseq
      %v1559 = vshrl.u32 %v1558, 7
      %v1560 = vsub.s32 %v1557, %v1559
      %v1561 = vrot.slane %v1545, %v1560
      %v1563 = vunpack.c.l.s4 1966171168
      %v1564 = vunpack.c.0.s8 %v1563
      %v1565 = vlaneseq
      %v1566 = vshrl.u32 %v1565, 7
      %v1567 = vsub.s32 %v1564, %v1566
      %v1568 = vrot.slane %v1546, %v1567
      %v1570 = vunpack.c.l.s4 1966171168
      %v1571 = vunpack.c.0.s8 %v1570
      %v1572 = vlaneseq
      %v1573 = vshrl.u32 %v1572, 7
      %v1574 = vsub.s32 %v1571, %v1573
      %v1575 = vrot.slane %v1547, %v1574
      %v1576 = vcombine.low %v1554, %v1561
      %v1577 = vcombine.low %v1568, %v1575
      %v1579 = vunpack.c.l.s4 1966171168
      %v1580 = vunpack.c.0.s8 %v1579
      %v1581 = vlaneseq
      %v1582 = vshrl.u32 %v1581, 7
      %v1583 = vsub.s32 %v1580, %v1582
      %v1584 = vrot.slane %v1576, %v1583
      %v1586 = vunpack.c.l.s4 1966171168
      %v1587 = vunpack.c.0.s8 %v1586
      %v1588 = vlaneseq
      %v1589 = vshrl.u32 %v1588, 7
      %v1590 = vsub.s32 %v1587, %v1589
      %v1591 = vrot.slane %v1577, %v1590
      %v1592 = vcombine.low %v1584, %v1591
      %v1593 = vcombine.low %v1041, %v1048
      %v1594 = vcombine.low %v1049, %v1050
      %v1595 = vcombine.low %v1065, %v1072
      %v1596 = vcombine.low %v1073, %v1074
      %v1598 = vunpack.c.l.s4 1966171168
      %v1599 = vunpack.c.0.s8 %v1598
      %v1600 = vlaneseq
      %v1601 = vshrl.u32 %v1600, 7
      %v1602 = vsub.s32 %v1599, %v1601
      %v1603 = vrot.slane %v1593, %v1602
      %v1605 = vunpack.c.l.s4 1966171168
      %v1606 = vunpack.c.0.s8 %v1605
      %v1607 = vlaneseq
      %v1608 = vshrl.u32 %v1607, 7
      %v1609 = vsub.s32 %v1606, %v1608
      %v1610 = vrot.slane %v1594, %v1609
      %v1612 = vunpack.c.l.s4 1966171168
      %v1613 = vunpack.c.0.s8 %v1612
      %v1614 = vlaneseq
      %v1615 = vshrl.u32 %v1614, 7
      %v1616 = vsub.s32 %v1613, %v1615
      %v1617 = vrot.slane %v1595, %v1616
      %v1619 = vunpack.c.l.s4 1966171168
      %v1620 = vunpack.c.0.s8 %v1619
      %v1621 = vlaneseq
      %v1622 = vshrl.u32 %v1621, 7
      %v1623 = vsub.s32 %v1620, %v1622
      %v1624 = vrot.slane %v1596, %v1623
      %v1625 = vcombine.low %v1603, %v1610
      %v1626 = vcombine.low %v1617, %v1624
      %v1628 = vunpack.c.l.s4 1966171168
      %v1629 = vunpack.c.0.s8 %v1628
      %v1630 = vlaneseq
      %v1631 = vshrl.u32 %v1630, 7
      %v1632 = vsub.s32 %v1629, %v1631
      %v1633 = vrot.slane %v1625, %v1632
      %v1635 = vunpack.c.l.s4 1966171168
      %v1636 = vunpack.c.0.s8 %v1635
      %v1637 = vlaneseq
      %v1638 = vshrl.u32 %v1637, 7
      %v1639 = vsub.s32 %v1636, %v1638
      %v1640 = vrot.slane %v1626, %v1639
      %v1641 = vcombine.low %v1633, %v1640
      %v1642 = vcombine.low %v1088, %v1103
      %v1643 = vcombine.low %v1110, %v1111
      %v1644 = vcombine.low %v1112, %v1127
      %v1645 = vcombine.low %v1134, %v1135
      %v1647 = vunpack.c.l.s4 1966171168
      %v1648 = vunpack.c.0.s8 %v1647
      %v1649 = vlaneseq
      %v1650 = vshrl.u32 %v1649, 7
      %v1651 = vsub.s32 %v1648, %v1650
      %v1652 = vrot.slane %v1642, %v1651
      %v1654 = vunpack.c.l.s4 1966171168
      %v1655 = vunpack.c.0.s8 %v1654
      %v1656 = vlaneseq
      %v1657 = vshrl.u32 %v1656, 7
      %v1658 = vsub.s32 %v1655, %v1657
      %v1659 = vrot.slane %v1643, %v1658
      %v1661 = vunpack.c.l.s4 1966171168
      %v1662 = vunpack.c.0.s8 %v1661
      %v1663 = vlaneseq
      %v1664 = vshrl.u32 %v1663, 7
      %v1665 = vsub.s32 %v1662, %v1664
      %v1666 = vrot.slane %v1644, %v1665
      %v1668 = vunpack.c.l.s4 1966171168
      %v1669 = vunpack.c.0.s8 %v1668
      %v1670 = vlaneseq
      %v1671 = vshrl.u32 %v1670, 7
      %v1672 = vsub.s32 %v1669, %v1671
      %v1673 = vrot.slane %v1645, %v1672
      %v1674 = vcombine.low %v1652, %v1659
      %v1675 = vcombine.low %v1666, %v1673
      %v1677 = vunpack.c.l.s4 1966171168
      %v1678 = vunpack.c.0.s8 %v1677
      %v1679 = vlaneseq
      %v1680 = vshrl.u32 %v1679, 7
      %v1681 = vsub.s32 %v1678, %v1680
      %v1682 = vrot.slane %v1674, %v1681
      %v1684 = vunpack.c.l.s4 1966171168
      %v1685 = vunpack.c.0.s8 %v1684
      %v1686 = vlaneseq
      %v1687 = vshrl.u32 %v1686, 7
      %v1688 = vsub.s32 %v1685, %v1687
      %v1689 = vrot.slane %v1675, %v1688
      %v1690 = vcombine.low %v1682, %v1689
      %v1691 = vcombine.low %v1136, %v1150
      %v1693 = vunpack.c.l.s4 1966171168
      %v1694 = vunpack.c.0.s8 %v1693
      %v1695 = vlaneseq
      %v1696 = vshrl.u32 %v1695, 7
      %v1697 = vsub.s32 %v1694, %v1696
      %v1698 = vrot.slane %v1691, %v1697
      %v1700 = vunpack.c.l.s4 1966171168
      %v1701 = vunpack.c.0.s8 %v1700
      %v1702 = vlaneseq
      %v1703 = vshrl.u32 %v1702, 7
      %v1704 = vsub.s32 %v1701, %v1703
      %v1705 = vrot.slane %v1698, %v1704
      %vm1706 = vcmask 31744
      %v1708 = vsel %vm1706, %v1200, 0
      %v1711 = vsel %vm1706, %v1249, 0
      %v1714 = vsel %vm1706, %v1298, 0
      %v1717 = vsel %vm1706, %v1347, 0
      %v1720 = vsel %vm1706, %v1396, 0
      %v1723 = vsel %vm1706, %v1445, 0
      %v1726 = vsel %vm1706, %v1494, 0
      %v1729 = vsel %vm1706, %v1543, 0
      %v1732 = vsel %vm1706, %v1592, 0
      %v1735 = vsel %vm1706, %v1641, 0
      %v1738 = vsel %vm1706, %v1690, 0
      %v1741 = vsel %vm1706, %v1705, 0
      %vm1743 = vcmask 1041408
      %v1745 = vsel %vm1743, %v1151, 0
      %1747 = vmatprep.subr.bf16.mxu0 0
      %1748 = vmatpush1.bf16.msra.mxu0 0
      %1749 = vmatprep.subr.bf16.mxu0 0
      %1750 = vmatpush1.bf16.msra.mxu0 0
      %1751 = vmatprep.subr.bf16.mxu0 0
      %1752 = vmatpush1.bf16.msra.mxu0 0
      %1753 = vmatprep.subr.bf16.mxu0 0
      %1754 = vmatpush1.bf16.msra.mxu0 0
      %1755 = vmatprep.subr.bf16.mxu0 0
      %1756 = vmatpush1.bf16.msra.mxu0 0
      %1757 = vmatprep.subr.bf16.mxu0 0
      %1758 = vmatpush1.bf16.msra.mxu0 0
      %1759 = vmatprep.subr.bf16.mxu0 0
      %1760 = vmatpush1.bf16.msra.mxu0 0
      %1761 = vmatprep.subr.bf16.mxu0 0
      %1762 = vmatpush1.bf16.msra.mxu0 %v1745
      %1763 = vmatprep.subr.bf16.mxu0 0
      %1764 = vmatpush2.bf16.msra.mxu0 0
      %1765 = vmatprep.subr.bf16.mxu0 0
      %1766 = vmatpush2.bf16.msra.mxu0 0
      %1767 = vmatprep.subr.bf16.mxu0 0
      %1768 = vmatpush2.bf16.msra.mxu0 0
      %1769 = vmatprep.subr.bf16.mxu0 0
      %1770 = vmatpush2.bf16.msra.mxu0 0
      %1771 = vmatprep.subr.bf16.mxu0 0
      %1772 = vmatpush2.bf16.msra.mxu0 0
      %1773 = vmatprep.subr.bf16.mxu0 0
      %1774 = vmatpush2.bf16.msra.mxu0 0
      %1775 = vmatprep.subr.bf16.mxu0 0
      %1776 = vmatpush2.bf16.msra.mxu0 0
      %1777 = vmatprep.subr.bf16.mxu0 0
      %1778 = vmatpush2.bf16.msra.mxu0 0
      %1779 = vmatprep.mubr.bf16.mxu0 0
      %1780 = vmatmul.mubr.bf16.gmra.mxu0 %v1708
      %v1781 = vpop.f32.mrf.mxu0
      %v1782 = vadd.f32 0.0, %v1781
      %v1783 = vpop.f32.mrf.mxu0
      %v1784 = vpop.f32.mrf.mxu0
      %v1785 = vadd.f32 0.0, %v1784
      %v1786 = vpop.f32.mrf.mxu0
      %1787 = vmatprep.mubr.bf16.mxu0 0
      %1788 = vmatmul.mubr.bf16.gmra.mxu0 %v1711
      %v1789 = vpop.f32.mrf.mxu0
      %v1790 = vadd.f32 0.0, %v1789
      %v1791 = vpop.f32.mrf.mxu0
      %v1792 = vpop.f32.mrf.mxu0
      %v1793 = vadd.f32 0.0, %v1792
      %v1794 = vpop.f32.mrf.mxu0
      %1795 = vmatprep.mubr.bf16.mxu0 0
      %1796 = vmatmul.mubr.bf16.gmra.mxu0 %v1714
      %v1797 = vpop.f32.mrf.mxu0
      %v1798 = vadd.f32 0.0, %v1797
      %v1799 = vpop.f32.mrf.mxu0
      %v1800 = vpop.f32.mrf.mxu0
      %v1801 = vadd.f32 0.0, %v1800
      %v1802 = vpop.f32.mrf.mxu0
      %1803 = vmatprep.mubr.bf16.mxu0 0
      %1804 = vmatmul.mubr.bf16.gmra.mxu0 %v1717
      %v1805 = vpop.f32.mrf.mxu0
      %v1806 = vadd.f32 0.0, %v1805
      %v1807 = vpop.f32.mrf.mxu0
      %v1808 = vpop.f32.mrf.mxu0
      %v1809 = vadd.f32 0.0, %v1808
      %v1810 = vpop.f32.mrf.mxu0
      %1811 = vmatprep.mubr.bf16.mxu0 0
      %1812 = vmatmul.mubr.bf16.gmra.mxu0 %v1720
      %v1813 = vpop.f32.mrf.mxu0
      %v1814 = vadd.f32 0.0, %v1813
      %v1815 = vpop.f32.mrf.mxu0
      %v1816 = vpop.f32.mrf.mxu0
      %v1817 = vadd.f32 0.0, %v1816
      %v1818 = vpop.f32.mrf.mxu0
      %1819 = vmatprep.mubr.bf16.mxu0 0
      %1820 = vmatmul.mubr.bf16.gmra.mxu0 %v1723
      %v1821 = vpop.f32.mrf.mxu0
      %v1822 = vadd.f32 0.0, %v1821
      %v1823 = vpop.f32.mrf.mxu0
      %v1824 = vpop.f32.mrf.mxu0
      %v1825 = vadd.f32 0.0, %v1824
      %v1826 = vpop.f32.mrf.mxu0
      %1827 = vmatprep.mubr.bf16.mxu0 0
      %1828 = vmatmul.mubr.bf16.gmra.mxu0 %v1726
      %v1829 = vpop.f32.mrf.mxu0
      %v1830 = vadd.f32 0.0, %v1829
      %v1831 = vpop.f32.mrf.mxu0
      %v1832 = vpop.f32.mrf.mxu0
      %v1833 = vadd.f32 0.0, %v1832
      %v1834 = vpop.f32.mrf.mxu0
      %1835 = vmatprep.mubr.bf16.mxu0 0
      %1836 = vmatmul.mubr.bf16.gmra.mxu0 %v1729
      %v1837 = vpop.f32.mrf.mxu0
      %v1838 = vadd.f32 0.0, %v1837
      %v1839 = vpop.f32.mrf.mxu0
      %v1840 = vpop.f32.mrf.mxu0
      %v1841 = vadd.f32 0.0, %v1840
      %v1842 = vpop.f32.mrf.mxu0
      %1843 = vmatprep.mubr.bf16.mxu0 0
      %1844 = vmatmul.mubr.bf16.gmra.mxu0 %v1732
      %v1845 = vpop.f32.mrf.mxu0
      %v1846 = vadd.f32 0.0, %v1845
      %v1847 = vpop.f32.mrf.mxu0
      %v1848 = vpop.f32.mrf.mxu0
      %v1849 = vadd.f32 0.0, %v1848
      %v1850 = vpop.f32.mrf.mxu0
      %1851 = vmatprep.mubr.bf16.mxu0 0
      %1852 = vmatmul.mubr.bf16.gmra.mxu0 %v1735
      %v1853 = vpop.f32.mrf.mxu0
      %v1854 = vadd.f32 0.0, %v1853
      %v1855 = vpop.f32.mrf.mxu0
      %v1856 = vpop.f32.mrf.mxu0
      %v1857 = vadd.f32 0.0, %v1856
      %v1858 = vpop.f32.mrf.mxu0
      %1859 = vmatprep.mubr.bf16.mxu0 0
      %1860 = vmatmul.mubr.bf16.gmra.mxu0 %v1738
      %v1861 = vpop.f32.mrf.mxu0
      %v1862 = vadd.f32 0.0, %v1861
      %v1863 = vpop.f32.mrf.mxu0
      %v1864 = vpop.f32.mrf.mxu0
      %v1865 = vadd.f32 0.0, %v1864
      %v1866 = vpop.f32.mrf.mxu0
      %1867 = vmatprep.mubr.bf16.mxu0 0
      %1868 = vmatmul.mubr.bf16.gmra.mxu0 %v1741
      %v1869 = vpop.f32.mrf.mxu0
      %v1870 = vadd.f32 0.0, %v1869
      %v1871 = vpop.f32.mrf.mxu0
      %v1872 = vpop.f32.mrf.mxu0
      %v1873 = vpop.f32.mrf.mxu0
      %1874 = vdwg.mxu0
      %v1875 = vld [vmem:[%s2] sm:$0x1]
      %v1877 = vlaneseq
      %v1878 = vshrl.u32 %v1877, 7
      %v1879 = vsub.s32 0, %v1878
      %v1880 = vrot.slane %v1875, %v1879
      %v1882 = vmul.f32 %v1782, %v1880
      %v1883 = vmul.f32 %v1785, %v1880
      %v1884 = vmul.f32 %v1790, %v1880
      %v1885 = vmul.f32 %v1793, %v1880
      %v1886 = vmul.f32 %v1798, %v1880
      %v1887 = vmul.f32 %v1801, %v1880
      %v1888 = vmul.f32 %v1806, %v1880
      %v1889 = vmul.f32 %v1809, %v1880
      %v1890 = vmul.f32 %v1814, %v1880
      %v1891 = vmul.f32 %v1817, %v1880
      %v1892 = vmul.f32 %v1822, %v1880
      %v1893 = vmul.f32 %v1825, %v1880
      %v1894 = vmul.f32 %v1830, %v1880
      %v1895 = vmul.f32 %v1833, %v1880
      %v1896 = vmul.f32 %v1838, %v1880
      %v1897 = vmul.f32 %v1841, %v1880
      %v1898 = vmul.f32 %v1846, %v1880
      %v1899 = vmul.f32 %v1849, %v1880
      %v1900 = vmul.f32 %v1854, %v1880
      %v1901 = vmul.f32 %v1857, %v1880
      %v1902 = vmul.f32 %v1862, %v1880
      %v1903 = vmul.f32 %v1865, %v1880
      %v1904 = vmul.f32 %v1870, %v1880
      %v1905 = vld [vmem:[%s3] sm:$0x1]
      %v1907 = vlaneseq
      %v1908 = vshrl.u32 %v1907, 7
      %v1909 = vsub.s32 0, %v1908
      %v1910 = vrot.slane %v1905, %v1909
      %v1912 = vadd.f32 %v1882, %v1910
      %v1913 = vadd.f32 %v1883, %v1910
      %v1914 = vadd.f32 %v1884, %v1910
      %v1915 = vadd.f32 %v1885, %v1910
      %v1916 = vadd.f32 %v1886, %v1910
      %v1917 = vadd.f32 %v1887, %v1910
      %v1918 = vadd.f32 %v1888, %v1910
      %v1919 = vadd.f32 %v1889, %v1910
      %v1920 = vadd.f32 %v1890, %v1910
      %v1921 = vadd.f32 %v1891, %v1910
      %v1922 = vadd.f32 %v1892, %v1910
      %v1923 = vadd.f32 %v1893, %v1910
      %v1924 = vadd.f32 %v1894, %v1910
      %v1925 = vadd.f32 %v1895, %v1910
      %v1926 = vadd.f32 %v1896, %v1910
      %v1927 = vadd.f32 %v1897, %v1910
      %v1928 = vadd.f32 %v1898, %v1910
      %v1929 = vadd.f32 %v1899, %v1910
      %v1930 = vadd.f32 %v1900, %v1910
      %v1931 = vadd.f32 %v1901, %v1910
      %v1932 = vadd.f32 %v1902, %v1910
      %v1933 = vadd.f32 %v1903, %v1910
      %v1934 = vadd.f32 %v1904, %v1910
      %v1935 = vmax.f32 %v1912, 0.0
      %v1936 = vmax.f32 %v1913, 0.0
      %v1937 = vmax.f32 %v1914, 0.0
      %v1938 = vmax.f32 %v1915, 0.0
      %v1939 = vmax.f32 %v1916, 0.0
      %v1940 = vmax.f32 %v1917, 0.0
      %v1941 = vmax.f32 %v1918, 0.0
      %v1942 = vmax.f32 %v1919, 0.0
      %v1943 = vmax.f32 %v1920, 0.0
      %v1944 = vmax.f32 %v1921, 0.0
      %v1945 = vmax.f32 %v1922, 0.0
      %v1946 = vmax.f32 %v1923, 0.0
      %v1947 = vmax.f32 %v1924, 0.0
      %v1948 = vmax.f32 %v1925, 0.0
      %v1949 = vmax.f32 %v1926, 0.0
      %v1950 = vmax.f32 %v1927, 0.0
      %v1951 = vmax.f32 %v1928, 0.0
      %v1952 = vmax.f32 %v1929, 0.0
      %v1953 = vmax.f32 %v1930, 0.0
      %v1954 = vmax.f32 %v1931, 0.0
      %v1955 = vmax.f32 %v1932, 0.0
      %v1956 = vmax.f32 %v1933, 0.0
      %v1957 = vmax.f32 %v1934, 0.0
      %v1981 = vcombine.high %v1935, %v1935
      %v1983 = vunpack.c.l.s4 1983009808
      %v1984 = vunpack.c.0.s8 %v1983
      %v1985 = vlaneseq
      %v1986 = vshrl.u32 %v1985, 7
      %v1987 = vsub.s32 %v1984, %v1986
      %v1988 = vrot.slane %v1935, %v1987
      %v1990 = vunpack.c.l.s4 1983009808
      %v1991 = vunpack.c.0.s8 %v1990
      %v1992 = vlaneseq
      %v1993 = vshrl.u32 %v1992, 7
      %v1994 = vsub.s32 %v1991, %v1993
      %v1995 = vrot.slane %v1981, %v1994
      %v1996 = vcombine.high %v1988, %v1988
      %v1997 = vcombine.high %v1995, %v1995
      %v1998 = vcombine.high %v1936, %v1936
      %v2000 = vunpack.c.l.s4 1983009808
      %v2001 = vunpack.c.0.s8 %v2000
      %v2002 = vlaneseq
      %v2003 = vshrl.u32 %v2002, 7
      %v2004 = vsub.s32 %v2001, %v2003
      %v2005 = vrot.slane %v1936, %v2004
      %v2007 = vunpack.c.l.s4 1983009808
      %v2008 = vunpack.c.0.s8 %v2007
      %v2009 = vlaneseq
      %v2010 = vshrl.u32 %v2009, 7
      %v2011 = vsub.s32 %v2008, %v2010
      %v2012 = vrot.slane %v1998, %v2011
      %v2013 = vcombine.high %v2005, %v2005
      %v2014 = vcombine.high %v2012, %v2012
      %v2015 = vcombine.high %v1937, %v1937
      %v2017 = vunpack.c.l.s4 1983009808
      %v2018 = vunpack.c.0.s8 %v2017
      %v2019 = vlaneseq
      %v2020 = vshrl.u32 %v2019, 7
      %v2021 = vsub.s32 %v2018, %v2020
      %v2022 = vrot.slane %v1937, %v2021
      %v2024 = vunpack.c.l.s4 1983009808
      %v2025 = vunpack.c.0.s8 %v2024
      %v2026 = vlaneseq
      %v2027 = vshrl.u32 %v2026, 7
      %v2028 = vsub.s32 %v2025, %v2027
      %v2029 = vrot.slane %v2015, %v2028
      %v2030 = vcombine.high %v2022, %v2022
      %v2031 = vcombine.high %v2029, %v2029
      %v2032 = vcombine.high %v1938, %v1938
      %v2034 = vunpack.c.l.s4 1983009808
      %v2035 = vunpack.c.0.s8 %v2034
      %v2036 = vlaneseq
      %v2037 = vshrl.u32 %v2036, 7
      %v2038 = vsub.s32 %v2035, %v2037
      %v2039 = vrot.slane %v1938, %v2038
      %v2041 = vunpack.c.l.s4 1983009808
      %v2042 = vunpack.c.0.s8 %v2041
      %v2043 = vlaneseq
      %v2044 = vshrl.u32 %v2043, 7
      %v2045 = vsub.s32 %v2042, %v2044
      %v2046 = vrot.slane %v2032, %v2045
      %v2047 = vcombine.high %v2039, %v2039
      %v2048 = vcombine.high %v2046, %v2046
      %v2049 = vcombine.high %v1939, %v1939
      %v2051 = vunpack.c.l.s4 1983009808
      %v2052 = vunpack.c.0.s8 %v2051
      %v2053 = vlaneseq
      %v2054 = vshrl.u32 %v2053, 7
      %v2055 = vsub.s32 %v2052, %v2054
      %v2056 = vrot.slane %v1939, %v2055
      %v2058 = vunpack.c.l.s4 1983009808
      %v2059 = vunpack.c.0.s8 %v2058
      %v2060 = vlaneseq
      %v2061 = vshrl.u32 %v2060, 7
      %v2062 = vsub.s32 %v2059, %v2061
      %v2063 = vrot.slane %v2049, %v2062
      %v2064 = vcombine.high %v2056, %v2056
      %v2065 = vcombine.high %v2063, %v2063
      %v2066 = vcombine.high %v1940, %v1940
      %v2068 = vunpack.c.l.s4 1983009808
      %v2069 = vunpack.c.0.s8 %v2068
      %v2070 = vlaneseq
      %v2071 = vshrl.u32 %v2070, 7
      %v2072 = vsub.s32 %v2069, %v2071
      %v2073 = vrot.slane %v1940, %v2072
      %v2075 = vunpack.c.l.s4 1983009808
      %v2076 = vunpack.c.0.s8 %v2075
      %v2077 = vlaneseq
      %v2078 = vshrl.u32 %v2077, 7
      %v2079 = vsub.s32 %v2076, %v2078
      %v2080 = vrot.slane %v2066, %v2079
      %v2081 = vcombine.high %v2073, %v2073
      %v2082 = vcombine.high %v2080, %v2080
      %v2083 = vcombine.high %v1941, %v1941
      %v2085 = vunpack.c.l.s4 1983009808
      %v2086 = vunpack.c.0.s8 %v2085
      %v2087 = vlaneseq
      %v2088 = vshrl.u32 %v2087, 7
      %v2089 = vsub.s32 %v2086, %v2088
      %v2090 = vrot.slane %v1941, %v2089
      %v2092 = vunpack.c.l.s4 1983009808
      %v2093 = vunpack.c.0.s8 %v2092
      %v2094 = vlaneseq
      %v2095 = vshrl.u32 %v2094, 7
      %v2096 = vsub.s32 %v2093, %v2095
      %v2097 = vrot.slane %v2083, %v2096
      %v2098 = vcombine.high %v2090, %v2090
      %v2099 = vcombine.high %v2097, %v2097
      %v2100 = vcombine.high %v1942, %v1942
      %v2102 = vunpack.c.l.s4 1983009808
      %v2103 = vunpack.c.0.s8 %v2102
      %v2104 = vlaneseq
      %v2105 = vshrl.u32 %v2104, 7
      %v2106 = vsub.s32 %v2103, %v2105
      %v2107 = vrot.slane %v1942, %v2106
      %v2109 = vunpack.c.l.s4 1983009808
      %v2110 = vunpack.c.0.s8 %v2109
      %v2111 = vlaneseq
      %v2112 = vshrl.u32 %v2111, 7
      %v2113 = vsub.s32 %v2110, %v2112
      %v2114 = vrot.slane %v2100, %v2113
      %v2115 = vcombine.high %v2107, %v2107
      %v2116 = vcombine.high %v2114, %v2114
      %v2117 = vcombine.high %v1943, %v1943
      %v2119 = vunpack.c.l.s4 1983009808
      %v2120 = vunpack.c.0.s8 %v2119
      %v2121 = vlaneseq
      %v2122 = vshrl.u32 %v2121, 7
      %v2123 = vsub.s32 %v2120, %v2122
      %v2124 = vrot.slane %v1943, %v2123
      %v2126 = vunpack.c.l.s4 1983009808
      %v2127 = vunpack.c.0.s8 %v2126
      %v2128 = vlaneseq
      %v2129 = vshrl.u32 %v2128, 7
      %v2130 = vsub.s32 %v2127, %v2129
      %v2131 = vrot.slane %v2117, %v2130
      %v2132 = vcombine.high %v2124, %v2124
      %v2133 = vcombine.high %v2131, %v2131
      %v2134 = vcombine.high %v1944, %v1944
      %v2136 = vunpack.c.l.s4 1983009808
      %v2137 = vunpack.c.0.s8 %v2136
      %v2138 = vlaneseq
      %v2139 = vshrl.u32 %v2138, 7
      %v2140 = vsub.s32 %v2137, %v2139
      %v2141 = vrot.slane %v1944, %v2140
      %v2143 = vunpack.c.l.s4 1983009808
      %v2144 = vunpack.c.0.s8 %v2143
      %v2145 = vlaneseq
      %v2146 = vshrl.u32 %v2145, 7
      %v2147 = vsub.s32 %v2144, %v2146
      %v2148 = vrot.slane %v2134, %v2147
      %v2149 = vcombine.high %v2141, %v2141
      %v2150 = vcombine.high %v2148, %v2148
      %v2151 = vcombine.high %v1945, %v1945
      %v2153 = vunpack.c.l.s4 1983009808
      %v2154 = vunpack.c.0.s8 %v2153
      %v2155 = vlaneseq
      %v2156 = vshrl.u32 %v2155, 7
      %v2157 = vsub.s32 %v2154, %v2156
      %v2158 = vrot.slane %v1945, %v2157
      %v2160 = vunpack.c.l.s4 1983009808
      %v2161 = vunpack.c.0.s8 %v2160
      %v2162 = vlaneseq
      %v2163 = vshrl.u32 %v2162, 7
      %v2164 = vsub.s32 %v2161, %v2163
      %v2165 = vrot.slane %v2151, %v2164
      %v2166 = vcombine.high %v2158, %v2158
      %v2167 = vcombine.high %v2165, %v2165
      %v2168 = vcombine.high %v1946, %v1946
      %v2170 = vunpack.c.l.s4 1983009808
      %v2171 = vunpack.c.0.s8 %v2170
      %v2172 = vlaneseq
      %v2173 = vshrl.u32 %v2172, 7
      %v2174 = vsub.s32 %v2171, %v2173
      %v2175 = vrot.slane %v1946, %v2174
      %v2177 = vunpack.c.l.s4 1983009808
      %v2178 = vunpack.c.0.s8 %v2177
      %v2179 = vlaneseq
      %v2180 = vshrl.u32 %v2179, 7
      %v2181 = vsub.s32 %v2178, %v2180
      %v2182 = vrot.slane %v2168, %v2181
      %v2183 = vcombine.high %v2175, %v2175
      %v2184 = vcombine.high %v2182, %v2182
      %v2185 = vcombine.high %v1947, %v1947
      %v2187 = vunpack.c.l.s4 1983009808
      %v2188 = vunpack.c.0.s8 %v2187
      %v2189 = vlaneseq
      %v2190 = vshrl.u32 %v2189, 7
      %v2191 = vsub.s32 %v2188, %v2190
      %v2192 = vrot.slane %v1947, %v2191
      %v2194 = vunpack.c.l.s4 1983009808
      %v2195 = vunpack.c.0.s8 %v2194
      %v2196 = vlaneseq
      %v2197 = vshrl.u32 %v2196, 7
      %v2198 = vsub.s32 %v2195, %v2197
      %v2199 = vrot.slane %v2185, %v2198
      %v2200 = vcombine.high %v2192, %v2192
      %v2201 = vcombine.high %v2199, %v2199
      %v2202 = vcombine.high %v1948, %v1948
      %v2204 = vunpack.c.l.s4 1983009808
      %v2205 = vunpack.c.0.s8 %v2204
      %v2206 = vlaneseq
      %v2207 = vshrl.u32 %v2206, 7
      %v2208 = vsub.s32 %v2205, %v2207
      %v2209 = vrot.slane %v1948, %v2208
      %v2211 = vunpack.c.l.s4 1983009808
      %v2212 = vunpack.c.0.s8 %v2211
      %v2213 = vlaneseq
      %v2214 = vshrl.u32 %v2213, 7
      %v2215 = vsub.s32 %v2212, %v2214
      %v2216 = vrot.slane %v2202, %v2215
      %v2217 = vcombine.high %v2209, %v2209
      %v2218 = vcombine.high %v2216, %v2216
      %v2219 = vcombine.high %v1949, %v1949
      %v2221 = vunpack.c.l.s4 1983009808
      %v2222 = vunpack.c.0.s8 %v2221
      %v2223 = vlaneseq
      %v2224 = vshrl.u32 %v2223, 7
      %v2225 = vsub.s32 %v2222, %v2224
      %v2226 = vrot.slane %v1949, %v2225
      %v2228 = vunpack.c.l.s4 1983009808
      %v2229 = vunpack.c.0.s8 %v2228
      %v2230 = vlaneseq
      %v2231 = vshrl.u32 %v2230, 7
      %v2232 = vsub.s32 %v2229, %v2231
      %v2233 = vrot.slane %v2219, %v2232
      %v2234 = vcombine.high %v2226, %v2226
      %v2235 = vcombine.high %v2233, %v2233
      %v2236 = vcombine.high %v1950, %v1950
      %v2238 = vunpack.c.l.s4 1983009808
      %v2239 = vunpack.c.0.s8 %v2238
      %v2240 = vlaneseq
      %v2241 = vshrl.u32 %v2240, 7
      %v2242 = vsub.s32 %v2239, %v2241
      %v2243 = vrot.slane %v1950, %v2242
      %v2245 = vunpack.c.l.s4 1983009808
      %v2246 = vunpack.c.0.s8 %v2245
      %v2247 = vlaneseq
      %v2248 = vshrl.u32 %v2247, 7
      %v2249 = vsub.s32 %v2246, %v2248
      %v2250 = vrot.slane %v2236, %v2249
      %v2251 = vcombine.high %v2243, %v2243
      %v2252 = vcombine.high %v2250, %v2250
      %v2253 = vcombine.high %v1951, %v1951
      %v2255 = vunpack.c.l.s4 1983009808
      %v2256 = vunpack.c.0.s8 %v2255
      %v2257 = vlaneseq
      %v2258 = vshrl.u32 %v2257, 7
      %v2259 = vsub.s32 %v2256, %v2258
      %v2260 = vrot.slane %v1951, %v2259
      %v2262 = vunpack.c.l.s4 1983009808
      %v2263 = vunpack.c.0.s8 %v2262
      %v2264 = vlaneseq
      %v2265 = vshrl.u32 %v2264, 7
      %v2266 = vsub.s32 %v2263, %v2265
      %v2267 = vrot.slane %v2253, %v2266
      %v2268 = vcombine.high %v2260, %v2260
      %v2269 = vcombine.high %v2267, %v2267
      %v2270 = vcombine.high %v1952, %v1952
      %v2272 = vunpack.c.l.s4 1983009808
      %v2273 = vunpack.c.0.s8 %v2272
      %v2274 = vlaneseq
      %v2275 = vshrl.u32 %v2274, 7
      %v2276 = vsub.s32 %v2273, %v2275
      %v2277 = vrot.slane %v1952, %v2276
      %v2279 = vunpack.c.l.s4 1983009808
      %v2280 = vunpack.c.0.s8 %v2279
      %v2281 = vlaneseq
      %v2282 = vshrl.u32 %v2281, 7
      %v2283 = vsub.s32 %v2280, %v2282
      %v2284 = vrot.slane %v2270, %v2283
      %v2285 = vcombine.high %v2277, %v2277
      %v2286 = vcombine.high %v2284, %v2284
      %v2287 = vcombine.high %v1953, %v1953
      %v2289 = vunpack.c.l.s4 1983009808
      %v2290 = vunpack.c.0.s8 %v2289
      %v2291 = vlaneseq
      %v2292 = vshrl.u32 %v2291, 7
      %v2293 = vsub.s32 %v2290, %v2292
      %v2294 = vrot.slane %v1953, %v2293
      %v2296 = vunpack.c.l.s4 1983009808
      %v2297 = vunpack.c.0.s8 %v2296
      %v2298 = vlaneseq
      %v2299 = vshrl.u32 %v2298, 7
      %v2300 = vsub.s32 %v2297, %v2299
      %v2301 = vrot.slane %v2287, %v2300
      %v2302 = vcombine.high %v2294, %v2294
      %v2303 = vcombine.high %v2301, %v2301
      %v2304 = vcombine.high %v1954, %v1954
      %v2306 = vunpack.c.l.s4 1983009808
      %v2307 = vunpack.c.0.s8 %v2306
      %v2308 = vlaneseq
      %v2309 = vshrl.u32 %v2308, 7
      %v2310 = vsub.s32 %v2307, %v2309
      %v2311 = vrot.slane %v1954, %v2310
      %v2313 = vunpack.c.l.s4 1983009808
      %v2314 = vunpack.c.0.s8 %v2313
      %v2315 = vlaneseq
      %v2316 = vshrl.u32 %v2315, 7
      %v2317 = vsub.s32 %v2314, %v2316
      %v2318 = vrot.slane %v2304, %v2317
      %v2319 = vcombine.high %v2311, %v2311
      %v2320 = vcombine.high %v2318, %v2318
      %v2321 = vcombine.high %v1955, %v1955
      %v2323 = vunpack.c.l.s4 1983009808
      %v2324 = vunpack.c.0.s8 %v2323
      %v2325 = vlaneseq
      %v2326 = vshrl.u32 %v2325, 7
      %v2327 = vsub.s32 %v2324, %v2326
      %v2328 = vrot.slane %v1955, %v2327
      %v2330 = vunpack.c.l.s4 1983009808
      %v2331 = vunpack.c.0.s8 %v2330
      %v2332 = vlaneseq
      %v2333 = vshrl.u32 %v2332, 7
      %v2334 = vsub.s32 %v2331, %v2333
      %v2335 = vrot.slane %v2321, %v2334
      %v2336 = vcombine.high %v2328, %v2328
      %v2337 = vcombine.high %v2335, %v2335
      %v2338 = vcombine.high %v1956, %v1956
      %v2340 = vunpack.c.l.s4 1983009808
      %v2341 = vunpack.c.0.s8 %v2340
      %v2342 = vlaneseq
      %v2343 = vshrl.u32 %v2342, 7
      %v2344 = vsub.s32 %v2341, %v2343
      %v2345 = vrot.slane %v1956, %v2344
      %v2347 = vunpack.c.l.s4 1983009808
      %v2348 = vunpack.c.0.s8 %v2347
      %v2349 = vlaneseq
      %v2350 = vshrl.u32 %v2349, 7
      %v2351 = vsub.s32 %v2348, %v2350
      %v2352 = vrot.slane %v2338, %v2351
      %v2353 = vcombine.high %v2345, %v2345
      %v2354 = vcombine.high %v2352, %v2352
      %v2356 = vunpack.c.l.s4 1983009808
      %v2357 = vunpack.c.0.s8 %v2356
      %v2358 = vlaneseq
      %v2359 = vshrl.u32 %v2358, 7
      %v2360 = vsub.s32 %v2357, %v2359
      %v2361 = vrot.slane %v1957, %v2360
      %v2362 = vcombine.high %v2361, %v2361
      %v2363 = vstv %s467
      %v2364 = vadd.s32 %v2363, 1
      %v2365 = vadd.s32 %v2363, 2
      %v2366 = vadd.s32 %v2363, 3
      %v2367 = vadd.s32 %v2363, 4
      %v2368 = vadd.s32 %v2363, 5
      %v2369 = vadd.s32 %v2363, 6
      %v2370 = vadd.s32 %v2363, 7
      %v2371 = vadd.s32 %v2363, 8
      %v2372 = vadd.s32 %v2363, 9
      %v2373 = vlaneseq
      %v2374 = vshrl.u32 %v2373, 7
      %v2375 = vadd.s32 %v2374, 8
      %v2376 = vadd.s32 %v2374, 16
      %vm2377 = vcmp.ge.s32.totalorder %v2363, 1
      %vm2378 = vcmp.ge.s32.totalorder %v2364, 1
      %vm2379 = vcmp.ge.s32.totalorder %v2365, 1
      %vm2380 = vcmp.ge.s32.totalorder %v2366, 1
      %vm2381 = vcmp.ge.s32.totalorder %v2367, 1
      %vm2382 = vcmp.ge.s32.totalorder %v2368, 1
      %vm2383 = vcmp.ge.s32.totalorder %v2369, 1
      %vm2384 = vcmp.ge.s32.totalorder %v2370, 1
      %vm2385 = vcmp.ge.s32.totalorder %v2371, 1
      %vm2386 = vcmp.ge.s32.totalorder %v2372, 1
      %vm2387 = vcmp.le.s32.totalorder %v2363, 16
      %vm2388 = vcmp.le.s32.totalorder %v2364, 16
      %vm2389 = vcmp.le.s32.totalorder %v2365, 16
      %vm2390 = vcmp.le.s32.totalorder %v2366, 16
      %vm2391 = vcmp.le.s32.totalorder %v2367, 16
      %vm2392 = vcmp.le.s32.totalorder %v2368, 16
      %vm2393 = vcmp.le.s32.totalorder %v2369, 16
      %vm2394 = vcmp.le.s32.totalorder %v2370, 16
      %vm2395 = vcmp.le.s32.totalorder %v2371, 16
      %vm2396 = vcmp.le.s32.totalorder %v2372, 16
      %vm2397 = vmand %vm2377, %vm2387
      %vm2398 = vmand %vm2378, %vm2388
      %vm2399 = vmand %vm2379, %vm2389
      %vm2400 = vmand %vm2380, %vm2390
      %vm2401 = vmand %vm2381, %vm2391
      %vm2402 = vmand %vm2382, %vm2392
      %vm2403 = vmand %vm2383, %vm2393
      %vm2404 = vmand %vm2384, %vm2394
      %vm2405 = vmand %vm2385, %vm2395
      %vm2406 = vmand %vm2386, %vm2396
      %vm2407 = vcmp.ge.s32.totalorder %v2374, 1
      %vm2408 = vcmp.ge.s32.totalorder %v2375, 1
      %vm2409 = vcmp.ge.s32.totalorder %v2376, 1
      %vm2410 = vmand %vm2397, %vm2407
      %vm2411 = vmand %vm2397, %vm2408
      %vm2412 = vmand %vm2397, %vm2409
      %vm2413 = vmand %vm2398, %vm2407
      %vm2414 = vmand %vm2398, %vm2408
      %vm2415 = vmand %vm2398, %vm2409
      %vm2416 = vmand %vm2399, %vm2407
      %vm2417 = vmand %vm2399, %vm2408
      %vm2418 = vmand %vm2399, %vm2409
      %vm2419 = vmand %vm2400, %vm2407
      %vm2420 = vmand %vm2400, %vm2408
      %vm2421 = vmand %vm2400, %vm2409
      %vm2422 = vmand %vm2401, %vm2407
      %vm2423 = vmand %vm2401, %vm2408
      %vm2424 = vmand %vm2401, %vm2409
      %vm2425 = vmand %vm2402, %vm2407
      %vm2426 = vmand %vm2402, %vm2408
      %vm2427 = vmand %vm2402, %vm2409
      %vm2428 = vmand %vm2403, %vm2407
      %vm2429 = vmand %vm2403, %vm2408
      %vm2430 = vmand %vm2403, %vm2409
      %vm2431 = vmand %vm2404, %vm2407
      %vm2432 = vmand %vm2404, %vm2408
      %vm2433 = vmand %vm2404, %vm2409
      %vm2434 = vmand %vm2405, %vm2407
      %vm2435 = vmand %vm2405, %vm2408
      %vm2436 = vmand %vm2405, %vm2409
      %vm2437 = vmand %vm2406, %vm2407
      %vm2438 = vmand %vm2406, %vm2408
      %vm2439 = vmand %vm2406, %vm2409
      %vm2440 = vcmp.le.s32.totalorder %v2374, 16
      %vm2441 = vcmp.le.s32.totalorder %v2375, 16
      %vm2442 = vcmp.le.s32.totalorder %v2376, 16
      %vm2443 = vmand %vm2410, %vm2440
      %vm2444 = vmand %vm2411, %vm2441
      %vm2445 = vmand %vm2412, %vm2442
      %vm2446 = vmand %vm2413, %vm2440
      %vm2447 = vmand %vm2414, %vm2441
      %vm2448 = vmand %vm2415, %vm2442
      %vm2449 = vmand %vm2416, %vm2440
      %vm2450 = vmand %vm2417, %vm2441
      %vm2451 = vmand %vm2418, %vm2442
      %vm2452 = vmand %vm2419, %vm2440
      %vm2453 = vmand %vm2420, %vm2441
      %vm2454 = vmand %vm2421, %vm2442
      %vm2455 = vmand %vm2422, %vm2440
      %vm2456 = vmand %vm2423, %vm2441
      %vm2457 = vmand %vm2424, %vm2442
      %vm2458 = vmand %vm2425, %vm2440
      %vm2459 = vmand %vm2426, %vm2441
      %vm2460 = vmand %vm2427, %vm2442
      %vm2461 = vmand %vm2428, %vm2440
      %vm2462 = vmand %vm2429, %vm2441
      %vm2463 = vmand %vm2430, %vm2442
      %vm2464 = vmand %vm2431, %vm2440
      %vm2465 = vmand %vm2432, %vm2441
      %vm2466 = vmand %vm2433, %vm2442
      %vm2467 = vmand %vm2434, %vm2440
      %vm2468 = vmand %vm2435, %vm2441
      %vm2469 = vmand %vm2436, %vm2442
      %vm2470 = vmand %vm2437, %vm2440
      %vm2471 = vmand %vm2438, %vm2441
      %vm2472 = vmand %vm2439, %vm2442
      %v2473 = vsel %vm2443, 1, 0
      %v2474 = vsel %vm2444, 1, 0
      %v2475 = vsel %vm2445, 1, 0
      %v2476 = vsel %vm2446, 1, 0
      %v2477 = vsel %vm2447, 1, 0
      %v2478 = vsel %vm2448, 1, 0
      %v2479 = vsel %vm2449, 1, 0
      %v2480 = vsel %vm2450, 1, 0
      %v2481 = vsel %vm2451, 1, 0
      %v2482 = vsel %vm2452, 1, 0
      %v2483 = vsel %vm2453, 1, 0
      %v2484 = vsel %vm2454, 1, 0
      %v2485 = vsel %vm2455, 1, 0
      %v2486 = vsel %vm2456, 1, 0
      %v2487 = vsel %vm2457, 1, 0
      %v2488 = vsel %vm2458, 1, 0
      %v2489 = vsel %vm2459, 1, 0
      %v2490 = vsel %vm2460, 1, 0
      %v2491 = vsel %vm2461, 1, 0
      %v2492 = vsel %vm2462, 1, 0
      %v2493 = vsel %vm2463, 1, 0
      %v2494 = vsel %vm2464, 1, 0
      %v2495 = vsel %vm2465, 1, 0
      %v2496 = vsel %vm2466, 1, 0
      %v2497 = vsel %vm2467, 1, 0
      %v2498 = vsel %vm2468, 1, 0
      %v2499 = vsel %vm2469, 1, 0
      %v2500 = vsel %vm2470, 1, 0
      %v2501 = vsel %vm2471, 1, 0
      %v2502 = vsel %vm2472, 1, 0
      %vm2503 = vcmp.eq.s32.totalorder %v2473, 1
      %vm2504 = vcmp.eq.s32.totalorder %v2474, 1
      %vm2505 = vcmp.eq.s32.totalorder %v2475, 1
      %vm2506 = vcmp.eq.s32.totalorder %v2476, 1
      %vm2507 = vcmp.eq.s32.totalorder %v2477, 1
      %vm2508 = vcmp.eq.s32.totalorder %v2478, 1
      %vm2509 = vcmp.eq.s32.totalorder %v2479, 1
      %vm2510 = vcmp.eq.s32.totalorder %v2480, 1
      %vm2511 = vcmp.eq.s32.totalorder %v2481, 1
      %vm2512 = vcmp.eq.s32.totalorder %v2482, 1
      %vm2513 = vcmp.eq.s32.totalorder %v2483, 1
      %vm2514 = vcmp.eq.s32.totalorder %v2484, 1
      %vm2515 = vcmp.eq.s32.totalorder %v2485, 1
      %vm2516 = vcmp.eq.s32.totalorder %v2486, 1
      %vm2517 = vcmp.eq.s32.totalorder %v2487, 1
      %vm2518 = vcmp.eq.s32.totalorder %v2488, 1
      %vm2519 = vcmp.eq.s32.totalorder %v2489, 1
      %vm2520 = vcmp.eq.s32.totalorder %v2490, 1
      %vm2521 = vcmp.eq.s32.totalorder %v2491, 1
      %vm2522 = vcmp.eq.s32.totalorder %v2492, 1
      %vm2523 = vcmp.eq.s32.totalorder %v2493, 1
      %vm2524 = vcmp.eq.s32.totalorder %v2494, 1
      %vm2525 = vcmp.eq.s32.totalorder %v2495, 1
      %vm2526 = vcmp.eq.s32.totalorder %v2496, 1
      %vm2527 = vcmp.eq.s32.totalorder %v2497, 1
      %vm2528 = vcmp.eq.s32.totalorder %v2498, 1
      %vm2529 = vcmp.eq.s32.totalorder %v2499, 1
      %vm2530 = vcmp.eq.s32.totalorder %v2500, 1
      %vm2531 = vcmp.eq.s32.totalorder %v2501, 1
      %vm2532 = vcmp.eq.s32.totalorder %v2502, 1
      %v2533 = vcombine.low %v1988, %v1996
      %v2534 = vcombine.low %v1995, %v1997
      %v2536 = vunpack.c.l.s4 1983009808
      %v2537 = vunpack.c.0.s8 %v2536
      %v2538 = vlaneseq
      %v2539 = vshrl.u32 %v2538, 7
      %v2540 = vsub.s32 %v2537, %v2539
      %v2541 = vrot.slane %v2533, %v2540
      %v2543 = vunpack.c.l.s4 1983009808
      %v2544 = vunpack.c.0.s8 %v2543
      %v2545 = vlaneseq
      %v2546 = vshrl.u32 %v2545, 7
      %v2547 = vsub.s32 %v2544, %v2546
      %v2548 = vrot.slane %v2534, %v2547
      %v2549 = vcombine.low %v2541, %v2548
      %v2550 = vcombine.low %v2005, %v2013
      %v2551 = vcombine.low %v2012, %v2014
      %v2553 = vunpack.c.l.s4 1983009808
      %v2554 = vunpack.c.0.s8 %v2553
      %v2555 = vlaneseq
      %v2556 = vshrl.u32 %v2555, 7
      %v2557 = vsub.s32 %v2554, %v2556
      %v2558 = vrot.slane %v2550, %v2557
      %v2560 = vunpack.c.l.s4 1983009808
      %v2561 = vunpack.c.0.s8 %v2560
      %v2562 = vlaneseq
      %v2563 = vshrl.u32 %v2562, 7
      %v2564 = vsub.s32 %v2561, %v2563
      %v2565 = vrot.slane %v2551, %v2564
      %v2566 = vcombine.low %v2558, %v2565
      %v2568 = vunpack.c.l.s4 1983009808
      %v2569 = vunpack.c.0.s8 %v2568
      %v2570 = vlaneseq
      %v2571 = vshrl.u32 %v2570, 7
      %v2572 = vsub.s32 %v2569, %v2571
      %v2573 = vrot.slane %v2022, %v2572
      %v2574 = vcombine.low %v2030, %v2029
      %v2575 = vcombine.low %v2031, %v2039
      %v2577 = vunpack.c.l.s4 1983009808
      %v2578 = vunpack.c.0.s8 %v2577
      %v2579 = vlaneseq
      %v2580 = vshrl.u32 %v2579, 7
      %v2581 = vsub.s32 %v2578, %v2580
      %v2582 = vrot.slane %v2574, %v2581
      %v2584 = vunpack.c.l.s4 1983009808
      %v2585 = vunpack.c.0.s8 %v2584
      %v2586 = vlaneseq
      %v2587 = vshrl.u32 %v2586, 7
      %v2588 = vsub.s32 %v2585, %v2587
      %v2589 = vrot.slane %v2575, %v2588
      %v2590 = vcombine.low %v2582, %v2589
      %v2591 = vcombine.low %v2047, %v2046
      %v2592 = vcombine.low %v2048, %v2056
      %v2594 = vunpack.c.l.s4 1983009808
      %v2595 = vunpack.c.0.s8 %v2594
      %v2596 = vlaneseq
      %v2597 = vshrl.u32 %v2596, 7
      %v2598 = vsub.s32 %v2595, %v2597
      %v2599 = vrot.slane %v2591, %v2598
      %v2601 = vunpack.c.l.s4 1983009808
      %v2602 = vunpack.c.0.s8 %v2601
      %v2603 = vlaneseq
      %v2604 = vshrl.u32 %v2603, 7
      %v2605 = vsub.s32 %v2602, %v2604
      %v2606 = vrot.slane %v2592, %v2605
      %v2607 = vcombine.low %v2599, %v2606
      %v2609 = vunpack.c.l.s4 1983009808
      %v2610 = vunpack.c.0.s8 %v2609
      %v2611 = vlaneseq
      %v2612 = vshrl.u32 %v2611, 7
      %v2613 = vsub.s32 %v2610, %v2612
      %v2614 = vrot.slane %v2064, %v2613
      %v2615 = vcombine.low %v2063, %v2065
      %v2616 = vcombine.low %v2073, %v2081
      %v2618 = vunpack.c.l.s4 1983009808
      %v2619 = vunpack.c.0.s8 %v2618
      %v2620 = vlaneseq
      %v2621 = vshrl.u32 %v2620, 7
      %v2622 = vsub.s32 %v2619, %v2621
      %v2623 = vrot.slane %v2615, %v2622
      %v2625 = vunpack.c.l.s4 1983009808
      %v2626 = vunpack.c.0.s8 %v2625
      %v2627 = vlaneseq
      %v2628 = vshrl.u32 %v2627, 7
      %v2629 = vsub.s32 %v2626, %v2628
      %v2630 = vrot.slane %v2616, %v2629
      %v2631 = vcombine.low %v2623, %v2630
      %v2632 = vcombine.low %v2080, %v2082
      %v2633 = vcombine.low %v2090, %v2098
      %v2635 = vunpack.c.l.s4 1983009808
      %v2636 = vunpack.c.0.s8 %v2635
      %v2637 = vlaneseq
      %v2638 = vshrl.u32 %v2637, 7
      %v2639 = vsub.s32 %v2636, %v2638
      %v2640 = vrot.slane %v2632, %v2639
      %v2642 = vunpack.c.l.s4 1983009808
      %v2643 = vunpack.c.0.s8 %v2642
      %v2644 = vlaneseq
      %v2645 = vshrl.u32 %v2644, 7
      %v2646 = vsub.s32 %v2643, %v2645
      %v2647 = vrot.slane %v2633, %v2646
      %v2648 = vcombine.low %v2640, %v2647
      %v2650 = vunpack.c.l.s4 1983009808
      %v2651 = vunpack.c.0.s8 %v2650
      %v2652 = vlaneseq
      %v2653 = vshrl.u32 %v2652, 7
      %v2654 = vsub.s32 %v2651, %v2653
      %v2655 = vrot.slane %v2097, %v2654
      %v2656 = vcombine.low %v2099, %v2107
      %v2657 = vcombine.low %v2115, %v2114
      %v2659 = vunpack.c.l.s4 1983009808
      %v2660 = vunpack.c.0.s8 %v2659
      %v2661 = vlaneseq
      %v2662 = vshrl.u32 %v2661, 7
      %v2663 = vsub.s32 %v2660, %v2662
      %v2664 = vrot.slane %v2656, %v2663
      %v2666 = vunpack.c.l.s4 1983009808
      %v2667 = vunpack.c.0.s8 %v2666
      %v2668 = vlaneseq
      %v2669 = vshrl.u32 %v2668, 7
      %v2670 = vsub.s32 %v2667, %v2669
      %v2671 = vrot.slane %v2657, %v2670
      %v2672 = vcombine.low %v2664, %v2671
      %v2673 = vcombine.low %v2116, %v2124
      %v2674 = vcombine.low %v2132, %v2131
      %v2676 = vunpack.c.l.s4 1983009808
      %v2677 = vunpack.c.0.s8 %v2676
      %v2678 = vlaneseq
      %v2679 = vshrl.u32 %v2678, 7
      %v2680 = vsub.s32 %v2677, %v2679
      %v2681 = vrot.slane %v2673, %v2680
      %v2683 = vunpack.c.l.s4 1983009808
      %v2684 = vunpack.c.0.s8 %v2683
      %v2685 = vlaneseq
      %v2686 = vshrl.u32 %v2685, 7
      %v2687 = vsub.s32 %v2684, %v2686
      %v2688 = vrot.slane %v2674, %v2687
      %v2689 = vcombine.low %v2681, %v2688
      %v2691 = vunpack.c.l.s4 1983009808
      %v2692 = vunpack.c.0.s8 %v2691
      %v2693 = vlaneseq
      %v2694 = vshrl.u32 %v2693, 7
      %v2695 = vsub.s32 %v2692, %v2694
      %v2696 = vrot.slane %v2133, %v2695
      %v2697 = vcombine.low %v2141, %v2149
      %v2698 = vcombine.low %v2148, %v2150
      %v2700 = vunpack.c.l.s4 1983009808
      %v2701 = vunpack.c.0.s8 %v2700
      %v2702 = vlaneseq
      %v2703 = vshrl.u32 %v2702, 7
      %v2704 = vsub.s32 %v2701, %v2703
      %v2705 = vrot.slane %v2697, %v2704
      %v2707 = vunpack.c.l.s4 1983009808
      %v2708 = vunpack.c.0.s8 %v2707
      %v2709 = vlaneseq
      %v2710 = vshrl.u32 %v2709, 7
      %v2711 = vsub.s32 %v2708, %v2710
      %v2712 = vrot.slane %v2698, %v2711
      %v2713 = vcombine.low %v2705, %v2712
      %v2714 = vcombine.low %v2158, %v2166
      %v2715 = vcombine.low %v2165, %v2167
      %v2717 = vunpack.c.l.s4 1983009808
      %v2718 = vunpack.c.0.s8 %v2717
      %v2719 = vlaneseq
      %v2720 = vshrl.u32 %v2719, 7
      %v2721 = vsub.s32 %v2718, %v2720
      %v2722 = vrot.slane %v2714, %v2721
      %v2724 = vunpack.c.l.s4 1983009808
      %v2725 = vunpack.c.0.s8 %v2724
      %v2726 = vlaneseq
      %v2727 = vshrl.u32 %v2726, 7
      %v2728 = vsub.s32 %v2725, %v2727
      %v2729 = vrot.slane %v2715, %v2728
      %v2730 = vcombine.low %v2722, %v2729
      %v2732 = vunpack.c.l.s4 1983009808
      %v2733 = vunpack.c.0.s8 %v2732
      %v2734 = vlaneseq
      %v2735 = vshrl.u32 %v2734, 7
      %v2736 = vsub.s32 %v2733, %v2735
      %v2737 = vrot.slane %v2175, %v2736
      %v2738 = vcombine.low %v2183, %v2182
      %v2739 = vcombine.low %v2184, %v2192
      %v2741 = vunpack.c.l.s4 1983009808
      %v2742 = vunpack.c.0.s8 %v2741
      %v2743 = vlaneseq
      %v2744 = vshrl.u32 %v2743, 7
      %v2745 = vsub.s32 %v2742, %v2744
      %v2746 = vrot.slane %v2738, %v2745
      %v2748 = vunpack.c.l.s4 1983009808
      %v2749 = vunpack.c.0.s8 %v2748
      %v2750 = vlaneseq
      %v2751 = vshrl.u32 %v2750, 7
      %v2752 = vsub.s32 %v2749, %v2751
      %v2753 = vrot.slane %v2739, %v2752
      %v2754 = vcombine.low %v2746, %v2753
      %v2755 = vcombine.low %v2200, %v2199
      %v2756 = vcombine.low %v2201, %v2209
      %v2758 = vunpack.c.l.s4 1983009808
      %v2759 = vunpack.c.0.s8 %v2758
      %v2760 = vlaneseq
      %v2761 = vshrl.u32 %v2760, 7
      %v2762 = vsub.s32 %v2759, %v2761
      %v2763 = vrot.slane %v2755, %v2762
      %v2765 = vunpack.c.l.s4 1983009808
      %v2766 = vunpack.c.0.s8 %v2765
      %v2767 = vlaneseq
      %v2768 = vshrl.u32 %v2767, 7
      %v2769 = vsub.s32 %v2766, %v2768
      %v2770 = vrot.slane %v2756, %v2769
      %v2771 = vcombine.low %v2763, %v2770
      %v2773 = vunpack.c.l.s4 1983009808
      %v2774 = vunpack.c.0.s8 %v2773
      %v2775 = vlaneseq
      %v2776 = vshrl.u32 %v2775, 7
      %v2777 = vsub.s32 %v2774, %v2776
      %v2778 = vrot.slane %v2217, %v2777
      %v2779 = vcombine.low %v2216, %v2218
      %v2780 = vcombine.low %v2226, %v2234
      %v2782 = vunpack.c.l.s4 1983009808
      %v2783 = vunpack.c.0.s8 %v2782
      %v2784 = vlaneseq
      %v2785 = vshrl.u32 %v2784, 7
      %v2786 = vsub.s32 %v2783, %v2785
      %v2787 = vrot.slane %v2779, %v2786
      %v2789 = vunpack.c.l.s4 1983009808
      %v2790 = vunpack.c.0.s8 %v2789
      %v2791 = vlaneseq
      %v2792 = vshrl.u32 %v2791, 7
      %v2793 = vsub.s32 %v2790, %v2792
      %v2794 = vrot.slane %v2780, %v2793
      %v2795 = vcombine.low %v2787, %v2794
      %v2796 = vcombine.low %v2233, %v2235
      %v2797 = vcombine.low %v2243, %v2251
      %v2799 = vunpack.c.l.s4 1983009808
      %v2800 = vunpack.c.0.s8 %v2799
      %v2801 = vlaneseq
      %v2802 = vshrl.u32 %v2801, 7
      %v2803 = vsub.s32 %v2800, %v2802
      %v2804 = vrot.slane %v2796, %v2803
      %v2806 = vunpack.c.l.s4 1983009808
      %v2807 = vunpack.c.0.s8 %v2806
      %v2808 = vlaneseq
      %v2809 = vshrl.u32 %v2808, 7
      %v2810 = vsub.s32 %v2807, %v2809
      %v2811 = vrot.slane %v2797, %v2810
      %v2812 = vcombine.low %v2804, %v2811
      %v2814 = vunpack.c.l.s4 1983009808
      %v2815 = vunpack.c.0.s8 %v2814
      %v2816 = vlaneseq
      %v2817 = vshrl.u32 %v2816, 7
      %v2818 = vsub.s32 %v2815, %v2817
      %v2819 = vrot.slane %v2250, %v2818
      %v2820 = vcombine.low %v2252, %v2260
      %v2821 = vcombine.low %v2268, %v2267
      %v2823 = vunpack.c.l.s4 1983009808
      %v2824 = vunpack.c.0.s8 %v2823
      %v2825 = vlaneseq
      %v2826 = vshrl.u32 %v2825, 7
      %v2827 = vsub.s32 %v2824, %v2826
      %v2828 = vrot.slane %v2820, %v2827
      %v2830 = vunpack.c.l.s4 1983009808
      %v2831 = vunpack.c.0.s8 %v2830
      %v2832 = vlaneseq
      %v2833 = vshrl.u32 %v2832, 7
      %v2834 = vsub.s32 %v2831, %v2833
      %v2835 = vrot.slane %v2821, %v2834
      %v2836 = vcombine.low %v2828, %v2835
      %v2837 = vcombine.low %v2269, %v2277
      %v2838 = vcombine.low %v2285, %v2284
      %v2840 = vunpack.c.l.s4 1983009808
      %v2841 = vunpack.c.0.s8 %v2840
      %v2842 = vlaneseq
      %v2843 = vshrl.u32 %v2842, 7
      %v2844 = vsub.s32 %v2841, %v2843
      %v2845 = vrot.slane %v2837, %v2844
      %v2847 = vunpack.c.l.s4 1983009808
      %v2848 = vunpack.c.0.s8 %v2847
      %v2849 = vlaneseq
      %v2850 = vshrl.u32 %v2849, 7
      %v2851 = vsub.s32 %v2848, %v2850
      %v2852 = vrot.slane %v2838, %v2851
      %v2853 = vcombine.low %v2845, %v2852
      %v2855 = vunpack.c.l.s4 1983009808
      %v2856 = vunpack.c.0.s8 %v2855
      %v2857 = vlaneseq
      %v2858 = vshrl.u32 %v2857, 7
      %v2859 = vsub.s32 %v2856, %v2858
      %v2860 = vrot.slane %v2286, %v2859
      %v2861 = vcombine.low %v2294, %v2302
      %v2862 = vcombine.low %v2301, %v2303
      %v2864 = vunpack.c.l.s4 1983009808
      %v2865 = vunpack.c.0.s8 %v2864
      %v2866 = vlaneseq
      %v2867 = vshrl.u32 %v2866, 7
      %v2868 = vsub.s32 %v2865, %v2867
      %v2869 = vrot.slane %v2861, %v2868
      %v2871 = vunpack.c.l.s4 1983009808
      %v2872 = vunpack.c.0.s8 %v2871
      %v2873 = vlaneseq
      %v2874 = vshrl.u32 %v2873, 7
      %v2875 = vsub.s32 %v2872, %v2874
      %v2876 = vrot.slane %v2862, %v2875
      %v2877 = vcombine.low %v2869, %v2876
      %v2878 = vcombine.low %v2311, %v2319
      %v2879 = vcombine.low %v2318, %v2320
      %v2881 = vunpack.c.l.s4 1983009808
      %v2882 = vunpack.c.0.s8 %v2881
      %v2883 = vlaneseq
      %v2884 = vshrl.u32 %v2883, 7
      %v2885 = vsub.s32 %v2882, %v2884
      %v2886 = vrot.slane %v2878, %v2885
      %v2888 = vunpack.c.l.s4 1983009808
      %v2889 = vunpack.c.0.s8 %v2888
      %v2890 = vlaneseq
      %v2891 = vshrl.u32 %v2890, 7
      %v2892 = vsub.s32 %v2889, %v2891
      %v2893 = vrot.slane %v2879, %v2892
      %v2894 = vcombine.low %v2886, %v2893
      %v2896 = vunpack.c.l.s4 1983009808
      %v2897 = vunpack.c.0.s8 %v2896
      %v2898 = vlaneseq
      %v2899 = vshrl.u32 %v2898, 7
      %v2900 = vsub.s32 %v2897, %v2899
      %v2901 = vrot.slane %v2328, %v2900
      %v2902 = vcombine.low %v2336, %v2335
      %v2903 = vcombine.low %v2337, %v2345
      %v2905 = vunpack.c.l.s4 1983009808
      %v2906 = vunpack.c.0.s8 %v2905
      %v2907 = vlaneseq
      %v2908 = vshrl.u32 %v2907, 7
      %v2909 = vsub.s32 %v2906, %v2908
      %v2910 = vrot.slane %v2902, %v2909
      %v2912 = vunpack.c.l.s4 1983009808
      %v2913 = vunpack.c.0.s8 %v2912
      %v2914 = vlaneseq
      %v2915 = vshrl.u32 %v2914, 7
      %v2916 = vsub.s32 %v2913, %v2915
      %v2917 = vrot.slane %v2903, %v2916
      %v2918 = vcombine.low %v2910, %v2917
      %v2919 = vcombine.low %v2353, %v2352
      %v2920 = vcombine.low %v2354, %v2361
      %v2922 = vunpack.c.l.s4 1983009808
      %v2923 = vunpack.c.0.s8 %v2922
      %v2924 = vlaneseq
      %v2925 = vshrl.u32 %v2924, 7
      %v2926 = vsub.s32 %v2923, %v2925
      %v2927 = vrot.slane %v2919, %v2926
      %v2929 = vunpack.c.l.s4 1983009808
      %v2930 = vunpack.c.0.s8 %v2929
      %v2931 = vlaneseq
      %v2932 = vshrl.u32 %v2931, 7
      %v2933 = vsub.s32 %v2930, %v2932
      %v2934 = vrot.slane %v2920, %v2933
      %v2935 = vcombine.low %v2927, %v2934
      %v2937 = vunpack.c.l.s4 1983009808
      %v2938 = vunpack.c.0.s8 %v2937
      %v2939 = vlaneseq
      %v2940 = vshrl.u32 %v2939, 7
      %v2941 = vsub.s32 %v2938, %v2940
      %v2942 = vrot.slane %v2362, %v2941
      %v2973 = vsel %vm2503, %v2549, 0.0
      %v2974 = vsel %vm2504, %v2566, 0.0
      %v2975 = vsel %vm2505, %v2573, 0.0
      %v2976 = vsel %vm2506, %v2590, 0.0
      %v2977 = vsel %vm2507, %v2607, 0.0
      %v2978 = vsel %vm2508, %v2614, 0.0
      %v2979 = vsel %vm2509, %v2631, 0.0
      %v2980 = vsel %vm2510, %v2648, 0.0
      %v2981 = vsel %vm2511, %v2655, 0.0
      %v2982 = vsel %vm2512, %v2672, 0.0
      %v2983 = vsel %vm2513, %v2689, 0.0
      %v2984 = vsel %vm2514, %v2696, 0.0
      %v2985 = vsel %vm2515, %v2713, 0.0
      %v2986 = vsel %vm2516, %v2730, 0.0
      %v2987 = vsel %vm2517, %v2737, 0.0
      %v2988 = vsel %vm2518, %v2754, 0.0
      %v2989 = vsel %vm2519, %v2771, 0.0
      %v2990 = vsel %vm2520, %v2778, 0.0
      %v2991 = vsel %vm2521, %v2795, 0.0
      %v2992 = vsel %vm2522, %v2812, 0.0
      %v2993 = vsel %vm2523, %v2819, 0.0
      %v2994 = vsel %vm2524, %v2836, 0.0
      %v2995 = vsel %vm2525, %v2853, 0.0
      %v2996 = vsel %vm2526, %v2860, 0.0
      %v2997 = vsel %vm2527, %v2877, 0.0
      %v2998 = vsel %vm2528, %v2894, 0.0
      %v2999 = vsel %vm2529, %v2901, 0.0
      %v3000 = vsel %vm2530, %v2918, 0.0
      %v3001 = vsel %vm2531, %v2935, 0.0
      %v3002 = vsel %vm2532, %v2942, 0.0
      %v3003 = vpack.c.bf16 %v2974, %v2973
      %v3004 = vpack.c.bf16 %v2975, %v2975
      %v3005 = vpack.c.bf16 %v2977, %v2976
      %v3006 = vpack.c.bf16 %v2978, %v2978
      %v3007 = vpack.c.bf16 %v2980, %v2979
      %v3008 = vpack.c.bf16 %v2981, %v2981
      %v3009 = vpack.c.bf16 %v2983, %v2982
      %v3010 = vpack.c.bf16 %v2984, %v2984
      %v3011 = vpack.c.bf16 %v2986, %v2985
      %v3012 = vpack.c.bf16 %v2987, %v2987
      %v3013 = vpack.c.bf16 %v2989, %v2988
      %v3014 = vpack.c.bf16 %v2990, %v2990
      %v3015 = vpack.c.bf16 %v2992, %v2991
      %v3016 = vpack.c.bf16 %v2993, %v2993
      %v3017 = vpack.c.bf16 %v2995, %v2994
      %v3018 = vpack.c.bf16 %v2996, %v2996
      %v3019 = vpack.c.bf16 %v2998, %v2997
      %v3020 = vpack.c.bf16 %v2999, %v2999
      %v3021 = vpack.c.bf16 %v3001, %v3000
      %v3022 = vpack.c.bf16 %v3002, %v3002
      %vm3023 = vsmask.f32 7424
      %v3025 = vshrl.u32 %v3003, 16
      %v3027 = vshll.u32 %v3003, 16
      %v3029 = vrot.slane %v3027, 1
      %v3030 = vor.u32 %v3025, %v3029
      %v3032 = vshll.u32 %v3004, 16
      %v3034 = vrot.slane %v3032, 1
      %v3035 = vsel %vm3023, %v3030, %v3034
      %v3037 = vshrl.u32 %v3005, 16
      %v3039 = vshll.u32 %v3005, 16
      %v3041 = vrot.slane %v3039, 1
      %v3042 = vor.u32 %v3037, %v3041
      %v3044 = vshll.u32 %v3006, 16
      %v3046 = vrot.slane %v3044, 1
      %v3047 = vsel %vm3023, %v3042, %v3046
      %v3049 = vshrl.u32 %v3007, 16
      %v3051 = vshll.u32 %v3007, 16
      %v3053 = vrot.slane %v3051, 1
      %v3054 = vor.u32 %v3049, %v3053
      %v3056 = vshll.u32 %v3008, 16
      %v3058 = vrot.slane %v3056, 1
      %v3059 = vsel %vm3023, %v3054, %v3058
      %v3061 = vshrl.u32 %v3009, 16
      %v3063 = vshll.u32 %v3009, 16
      %v3065 = vrot.slane %v3063, 1
      %v3066 = vor.u32 %v3061, %v3065
      %v3068 = vshll.u32 %v3010, 16
      %v3070 = vrot.slane %v3068, 1
      %v3071 = vsel %vm3023, %v3066, %v3070
      %v3073 = vshrl.u32 %v3011, 16
      %v3075 = vshll.u32 %v3011, 16
      %v3077 = vrot.slane %v3075, 1
      %v3078 = vor.u32 %v3073, %v3077
      %v3080 = vshll.u32 %v3012, 16
      %v3082 = vrot.slane %v3080, 1
      %v3083 = vsel %vm3023, %v3078, %v3082
      %v3085 = vshrl.u32 %v3013, 16
      %v3087 = vshll.u32 %v3013, 16
      %v3089 = vrot.slane %v3087, 1
      %v3090 = vor.u32 %v3085, %v3089
      %v3092 = vshll.u32 %v3014, 16
      %v3094 = vrot.slane %v3092, 1
      %v3095 = vsel %vm3023, %v3090, %v3094
      %v3097 = vshrl.u32 %v3015, 16
      %v3099 = vshll.u32 %v3015, 16
      %v3101 = vrot.slane %v3099, 1
      %v3102 = vor.u32 %v3097, %v3101
      %v3104 = vshll.u32 %v3016, 16
      %v3106 = vrot.slane %v3104, 1
      %v3107 = vsel %vm3023, %v3102, %v3106
      %v3109 = vshrl.u32 %v3017, 16
      %v3111 = vshll.u32 %v3017, 16
      %v3113 = vrot.slane %v3111, 1
      %v3114 = vor.u32 %v3109, %v3113
      %v3116 = vshll.u32 %v3018, 16
      %v3118 = vrot.slane %v3116, 1
      %v3119 = vsel %vm3023, %v3114, %v3118
      %vm3136 = vcmask 1046528
      %v3137 = vrot.slane %v3003, 1
      %v3138 = vrot.slane %v3004, 1
      %v3139 = vsel %vm3136, %v3137, %v3138
      %v3140 = vrot.slane %v3005, 1
      %v3141 = vrot.slane %v3006, 1
      %v3142 = vsel %vm3136, %v3140, %v3141
      %v3143 = vrot.slane %v3007, 1
      %v3144 = vrot.slane %v3008, 1
      %v3145 = vsel %vm3136, %v3143, %v3144
      %v3146 = vrot.slane %v3009, 1
      %v3147 = vrot.slane %v3010, 1
      %v3148 = vsel %vm3136, %v3146, %v3147
      %v3149 = vrot.slane %v3011, 1
      %v3150 = vrot.slane %v3012, 1
      %v3151 = vsel %vm3136, %v3149, %v3150
      %v3152 = vrot.slane %v3013, 1
      %v3153 = vrot.slane %v3014, 1
      %v3154 = vsel %vm3136, %v3152, %v3153
      %v3155 = vrot.slane %v3015, 1
      %v3156 = vrot.slane %v3016, 1
      %v3157 = vsel %vm3136, %v3155, %v3156
      %v3158 = vrot.slane %v3017, 1
      %v3159 = vrot.slane %v3018, 1
      %v3160 = vsel %vm3136, %v3158, %v3159
      %v3162 = vshrl.u32 %v3019, 16
      %v3164 = vshll.u32 %v3019, 16
      %v3166 = vrot.slane %v3164, 1
      %v3167 = vor.u32 %v3162, %v3166
      %v3169 = vshll.u32 %v3020, 16
      %v3171 = vrot.slane %v3169, 1
      %v3172 = vsel %vm3023, %v3167, %v3171
      %v3175 = vrot.slane %v3019, 1
      %v3176 = vrot.slane %v3020, 1
      %v3177 = vsel %vm3136, %v3175, %v3176
      %v3179 = vshrl.u32 %v3021, 16
      %v3181 = vshll.u32 %v3021, 16
      %v3183 = vrot.slane %v3181, 1
      %v3184 = vor.u32 %v3179, %v3183
      %v3186 = vshll.u32 %v3022, 16
      %v3188 = vrot.slane %v3186, 1
      %v3189 = vsel %vm3023, %v3184, %v3188
      %v3192 = vrot.slane %v3021, 1
      %v3193 = vrot.slane %v3022, 1
      %v3194 = vsel %vm3136, %v3192, %v3193
      %3195 = vrot.lane.b32.xlu0 %v3035, 4
      %v3196 = vpop.permute.xlu0 %3195
      %3197 = vrot.lane.b32.xlu0 %v3047, 4
      %v3198 = vpop.permute.xlu0 %3197
      %3199 = vrot.lane.b32.xlu0 %v3059, 4
      %v3200 = vpop.permute.xlu0 %3199
      %3201 = vrot.lane.b32.xlu0 %v3071, 4
      %v3202 = vpop.permute.xlu0 %3201
      %3203 = vrot.lane.b32.xlu0 %v3083, 4
      %v3204 = vpop.permute.xlu0 %3203
      %3205 = vrot.lane.b32.xlu0 %v3095, 4
      %v3206 = vpop.permute.xlu0 %3205
      %3207 = vrot.lane.b32.xlu0 %v3107, 4
      %v3208 = vpop.permute.xlu0 %3207
      %3209 = vrot.lane.b32.xlu0 %v3119, 4
      %v3210 = vpop.permute.xlu0 %3209
      %3211 = vrot.lane.b32.xlu0 %v3139, 8
      %v3212 = vpop.permute.xlu0 %3211
      %3213 = vrot.lane.b32.xlu0 %v3142, 8
      %v3214 = vpop.permute.xlu0 %3213
      %3215 = vrot.lane.b32.xlu0 %v3145, 8
      %v3216 = vpop.permute.xlu0 %3215
      %3217 = vrot.lane.b32.xlu0 %v3148, 8
      %v3218 = vpop.permute.xlu0 %3217
      %3219 = vrot.lane.b32.xlu0 %v3151, 8
      %v3220 = vpop.permute.xlu0 %3219
      %3221 = vrot.lane.b32.xlu0 %v3154, 8
      %v3222 = vpop.permute.xlu0 %3221
      %3223 = vrot.lane.b32.xlu0 %v3157, 8
      %v3224 = vpop.permute.xlu0 %3223
      %3225 = vrot.lane.b32.xlu0 %v3160, 8
      %v3226 = vpop.permute.xlu0 %3225
      %3227 = vrot.lane.b32.xlu0 %v3005, 12
      %v3228 = vpop.permute.xlu0 %3227
      %3229 = vrot.lane.b32.xlu0 %v3007, 12
      %v3230 = vpop.permute.xlu0 %3229
      %3231 = vrot.lane.b32.xlu0 %v3009, 12
      %v3232 = vpop.permute.xlu0 %3231
      %3233 = vrot.lane.b32.xlu0 %v3011, 12
      %v3234 = vpop.permute.xlu0 %3233
      %3235 = vrot.lane.b32.xlu0 %v3013, 12
      %v3236 = vpop.permute.xlu0 %3235
      %3237 = vrot.lane.b32.xlu0 %v3015, 12
      %v3238 = vpop.permute.xlu0 %3237
      %3239 = vrot.lane.b32.xlu0 %v3017, 12
      %v3240 = vpop.permute.xlu0 %3239
      %3241 = vrot.lane.b32.xlu0 %v3019, 12
      %v3242 = vpop.permute.xlu0 %3241
      %3243 = vrot.lane.b32.xlu0 %v3047, 16
      %v3244 = vpop.permute.xlu0 %3243
      %3245 = vrot.lane.b32.xlu0 %v3059, 16
      %v3246 = vpop.permute.xlu0 %3245
      %3247 = vrot.lane.b32.xlu0 %v3071, 16
      %v3248 = vpop.permute.xlu0 %3247
      %3249 = vrot.lane.b32.xlu0 %v3083, 16
      %v3250 = vpop.permute.xlu0 %3249
      %3251 = vrot.lane.b32.xlu0 %v3095, 16
      %v3252 = vpop.permute.xlu0 %3251
      %3253 = vrot.lane.b32.xlu0 %v3107, 16
      %v3254 = vpop.permute.xlu0 %3253
      %3255 = vrot.lane.b32.xlu0 %v3119, 16
      %v3256 = vpop.permute.xlu0 %3255
      %3257 = vrot.lane.b32.xlu0 %v3172, 16
      %v3258 = vpop.permute.xlu0 %3257
      %3259 = vrot.lane.b32.xlu0 %v3142, 20
      %v3260 = vpop.permute.xlu0 %3259
      %3261 = vrot.lane.b32.xlu0 %v3145, 20
      %v3262 = vpop.permute.xlu0 %3261
      %3263 = vrot.lane.b32.xlu0 %v3148, 20
      %v3264 = vpop.permute.xlu0 %3263
      %3265 = vrot.lane.b32.xlu0 %v3151, 20
      %v3266 = vpop.permute.xlu0 %3265
      %3267 = vrot.lane.b32.xlu0 %v3154, 20
      %v3268 = vpop.permute.xlu0 %3267
      %3269 = vrot.lane.b32.xlu0 %v3157, 20
      %v3270 = vpop.permute.xlu0 %3269
      %3271 = vrot.lane.b32.xlu0 %v3160, 20
      %v3272 = vpop.permute.xlu0 %3271
      %3273 = vrot.lane.b32.xlu0 %v3177, 20
      %v3274 = vpop.permute.xlu0 %3273
      %3275 = vrot.lane.b32.xlu0 %v3007, 24
      %v3276 = vpop.permute.xlu0 %3275
      %3277 = vrot.lane.b32.xlu0 %v3009, 24
      %v3278 = vpop.permute.xlu0 %3277
      %3279 = vrot.lane.b32.xlu0 %v3011, 24
      %v3280 = vpop.permute.xlu0 %3279
      %3281 = vrot.lane.b32.xlu0 %v3013, 24
      %v3282 = vpop.permute.xlu0 %3281
      %3283 = vrot.lane.b32.xlu0 %v3015, 24
      %v3284 = vpop.permute.xlu0 %3283
      %3285 = vrot.lane.b32.xlu0 %v3017, 24
      %v3286 = vpop.permute.xlu0 %3285
      %3287 = vrot.lane.b32.xlu0 %v3019, 24
      %v3288 = vpop.permute.xlu0 %3287
      %3289 = vrot.lane.b32.xlu0 %v3021, 24
      %v3290 = vpop.permute.xlu0 %3289
      %3291 = vrot.lane.b32.xlu0 %v3059, 28
      %v3292 = vpop.permute.xlu0 %3291
      %3293 = vrot.lane.b32.xlu0 %v3071, 28
      %v3294 = vpop.permute.xlu0 %3293
      %3295 = vrot.lane.b32.xlu0 %v3083, 28
      %v3296 = vpop.permute.xlu0 %3295
      %3297 = vrot.lane.b32.xlu0 %v3095, 28
      %v3298 = vpop.permute.xlu0 %3297
      %3299 = vrot.lane.b32.xlu0 %v3107, 28
      %v3300 = vpop.permute.xlu0 %3299
      %3301 = vrot.lane.b32.xlu0 %v3119, 28
      %v3302 = vpop.permute.xlu0 %3301
      %3303 = vrot.lane.b32.xlu0 %v3172, 28
      %v3304 = vpop.permute.xlu0 %3303
      %3305 = vrot.lane.b32.xlu0 %v3189, 28
      %v3306 = vpop.permute.xlu0 %3305
      %3307 = vrot.lane.b32.xlu0 %v3145, 32
      %v3308 = vpop.permute.xlu0 %3307
      %3309 = vrot.lane.b32.xlu0 %v3148, 32
      %v3310 = vpop.permute.xlu0 %3309
      %3311 = vrot.lane.b32.xlu0 %v3151, 32
      %v3312 = vpop.permute.xlu0 %3311
      %3313 = vrot.lane.b32.xlu0 %v3154, 32
      %v3314 = vpop.permute.xlu0 %3313
      %3315 = vrot.lane.b32.xlu0 %v3157, 32
      %v3316 = vpop.permute.xlu0 %3315
      %3317 = vrot.lane.b32.xlu0 %v3160, 32
      %v3318 = vpop.permute.xlu0 %3317
      %3319 = vrot.lane.b32.xlu0 %v3177, 32
      %v3320 = vpop.permute.xlu0 %3319
      %3321 = vrot.lane.b32.xlu0 %v3194, 32
      %v3322 = vpop.permute.xlu0 %3321
      %v3324 = vsel %vm1706, %v3003, %v3196
      %v3326 = vsel %vm1706, %v3005, %v3198
      %v3328 = vsel %vm1706, %v3007, %v3200
      %v3330 = vsel %vm1706, %v3009, %v3202
      %v3332 = vsel %vm1706, %v3011, %v3204
      %v3334 = vsel %vm1706, %v3013, %v3206
      %v3336 = vsel %vm1706, %v3015, %v3208
      %v3338 = vsel %vm1706, %v3017, %v3210
      %vm3339 = vcmask 64512
      %v3341 = vsel %vm3339, %v3324, %v3212
      %v3343 = vsel %vm3339, %v3326, %v3214
      %v3345 = vsel %vm3339, %v3328, %v3216
      %v3347 = vsel %vm3339, %v3330, %v3218
      %v3349 = vsel %vm3339, %v3332, %v3220
      %v3351 = vsel %vm3339, %v3334, %v3222
      %v3353 = vsel %vm3339, %v3336, %v3224
      %v3355 = vsel %vm3339, %v3338, %v3226
      %vm3356 = vcmask 97280
      %v3358 = vsel %vm3356, %v3341, %v3228
      %v3360 = vsel %vm3356, %v3343, %v3230
      %v3362 = vsel %vm3356, %v3345, %v3232
      %v3364 = vsel %vm3356, %v3347, %v3234
      %v3366 = vsel %vm3356, %v3349, %v3236
      %v3368 = vsel %vm3356, %v3351, %v3238
      %v3370 = vsel %vm3356, %v3353, %v3240
      %v3372 = vsel %vm3356, %v3355, %v3242
      %vm3373 = vcmask 130048
      %v3375 = vsel %vm3373, %v3358, %v3244
      %v3377 = vsel %vm3373, %v3360, %v3246
      %v3379 = vsel %vm3373, %v3362, %v3248
      %v3381 = vsel %vm3373, %v3364, %v3250
      %v3383 = vsel %vm3373, %v3366, %v3252
      %v3385 = vsel %vm3373, %v3368, %v3254
      %v3387 = vsel %vm3373, %v3370, %v3256
      %v3389 = vsel %vm3373, %v3372, %v3258
      %vm3390 = vcmask 162816
      %v3392 = vsel %vm3390, %v3375, %v3260
      %v3394 = vsel %vm3390, %v3377, %v3262
      %v3396 = vsel %vm3390, %v3379, %v3264
      %v3398 = vsel %vm3390, %v3381, %v3266
      %v3400 = vsel %vm3390, %v3383, %v3268
      %v3402 = vsel %vm3390, %v3385, %v3270
      %v3404 = vsel %vm3390, %v3387, %v3272
      %v3406 = vsel %vm3390, %v3389, %v3274
      %vm3407 = vcmask 195584
      %v3409 = vsel %vm3407, %v3392, %v3276
      %v3411 = vsel %vm3407, %v3394, %v3278
      %v3413 = vsel %vm3407, %v3396, %v3280
      %v3415 = vsel %vm3407, %v3398, %v3282
      %v3417 = vsel %vm3407, %v3400, %v3284
      %v3419 = vsel %vm3407, %v3402, %v3286
      %v3421 = vsel %vm3407, %v3404, %v3288
      %v3423 = vsel %vm3407, %v3406, %v3290
      %vm3424 = vcmask 228352
      %v3426 = vsel %vm3424, %v3409, %v3292
      %v3428 = vsel %vm3424, %v3411, %v3294
      %v3430 = vsel %vm3424, %v3413, %v3296
      %v3432 = vsel %vm3424, %v3415, %v3298
      %v3434 = vsel %vm3424, %v3417, %v3300
      %v3436 = vsel %vm3424, %v3419, %v3302
      %v3438 = vsel %vm3424, %v3421, %v3304
      %v3440 = vsel %vm3424, %v3423, %v3306
      %vm3441 = vcmask 261120
      %v3443 = vsel %vm3441, %v3426, %v3308
      %v3445 = vsel %vm3441, %v3428, %v3310
      %v3447 = vsel %vm3441, %v3430, %v3312
      %v3449 = vsel %vm3441, %v3432, %v3314
      %v3451 = vsel %vm3441, %v3434, %v3316
      %v3453 = vsel %vm3441, %v3436, %v3318
      %v3455 = vsel %vm3441, %v3438, %v3320
      %v3457 = vsel %vm3441, %v3440, %v3322
      %v3458 = vld [vmem:[%s4] sm:$0xf]
      %v3459 = vld [vmem:[%s4 + $0x4] sm:$0xf]
      %v3460 = vld [vmem:[%s4 + $0x8] sm:$0xf]
      %v3461 = vld [vmem:[%s4 + $0xc] sm:$0xf]
      %v3462 = vld [vmem:[%s4 + $0x10] sm:$0x3]
      %v3468 = vunpack.c.l.b16 %v3458
      %v3469 = vunpack.c.l.b16 %v3459
      %v3470 = vunpack.c.l.b16 %v3460
      %v3471 = vunpack.c.l.b16 %v3461
      %v3472 = vunpack.c.l.b16 %v3462
      %v3473 = vpack.c.b16 %v3469, %v3468
      %v3474 = vpack.c.b16 %v3471, %v3470
      %v3475 = vpack.c.b16 %v3472, %v3472
      %vm3478 = vcmask 293888
      %v3479 = vsel %vm3478, %v3443, 0
      %v3481 = vsel %vm3478, %v3445, 0
      %v3483 = vsel %vm3478, %v3447, 0
      %v3485 = vsel %vm3478, %v3449, 0
      %v3487 = vsel %vm3478, %v3451, 0
      %v3489 = vsel %vm3478, %v3453, 0
      %v3491 = vsel %vm3478, %v3455, 0
      %v3493 = vsel %vm3478, %v3457, 0
      %v3496 = vsel %vm1743, %v3475, 0
      %3498 = vmatprep.subr.bf16.mxu0 0
      %3499 = vmatpush1.bf16.msra.mxu0 0
      %3500 = vmatprep.subr.bf16.mxu0 0
      %3501 = vmatpush1.bf16.msra.mxu0 0
      %3502 = vmatprep.subr.bf16.mxu0 0
      %3503 = vmatpush1.bf16.msra.mxu0 0
      %3504 = vmatprep.subr.bf16.mxu0 0
      %3505 = vmatpush1.bf16.msra.mxu0 0
      %3506 = vmatprep.subr.bf16.mxu0 0
      %3507 = vmatpush1.bf16.msra.mxu0 0
      %3508 = vmatprep.subr.bf16.mxu0 0
      %3509 = vmatpush1.bf16.msra.mxu0 %v3496
      %3510 = vmatprep.subr.bf16.mxu0 0
      %3511 = vmatpush1.bf16.msra.mxu0 %v3474
      %3512 = vmatprep.subr.bf16.mxu0 0
      %3513 = vmatpush1.bf16.msra.mxu0 %v3473
      %3514 = vmatprep.subr.bf16.mxu0 0
      %3515 = vmatpush2.bf16.msra.mxu0 0
      %3516 = vmatprep.subr.bf16.mxu0 0
      %3517 = vmatpush2.bf16.msra.mxu0 0
      %3518 = vmatprep.subr.bf16.mxu0 0
      %3519 = vmatpush2.bf16.msra.mxu0 0
      %3520 = vmatprep.subr.bf16.mxu0 0
      %3521 = vmatpush2.bf16.msra.mxu0 0
      %3522 = vmatprep.subr.bf16.mxu0 0
      %3523 = vmatpush2.bf16.msra.mxu0 0
      %3524 = vmatprep.subr.bf16.mxu0 0
      %3525 = vmatpush2.bf16.msra.mxu0 0
      %3526 = vmatprep.subr.bf16.mxu0 0
      %3527 = vmatpush2.bf16.msra.mxu0 0
      %3528 = vmatprep.subr.bf16.mxu0 0
      %3529 = vmatpush2.bf16.msra.mxu0 0
      %3530 = vmatprep.mubr.bf16.mxu0 0
      %3531 = vmatmul.mubr.bf16.gmra.mxu0 %v3479
      %v3532 = vpop.f32.mrf.mxu0
      %v3533 = vadd.f32 0.0, %v3532
      %v3534 = vpop.f32.mrf.mxu0
      %v3535 = vpop.f32.mrf.mxu0
      %v3536 = vadd.f32 0.0, %v3535
      %v3537 = vpop.f32.mrf.mxu0
      %3538 = vmatprep.mubr.bf16.mxu0 0
      %3539 = vmatmul.mubr.bf16.gmra.mxu0 %v3481
      %v3540 = vpop.f32.mrf.mxu0
      %v3541 = vadd.f32 0.0, %v3540
      %v3542 = vpop.f32.mrf.mxu0
      %v3543 = vpop.f32.mrf.mxu0
      %v3544 = vadd.f32 0.0, %v3543
      %v3545 = vpop.f32.mrf.mxu0
      %3546 = vmatprep.mubr.bf16.mxu0 0
      %3547 = vmatmul.mubr.bf16.gmra.mxu0 %v3483
      %v3548 = vpop.f32.mrf.mxu0
      %v3549 = vadd.f32 0.0, %v3548
      %v3550 = vpop.f32.mrf.mxu0
      %v3551 = vpop.f32.mrf.mxu0
      %v3552 = vadd.f32 0.0, %v3551
      %v3553 = vpop.f32.mrf.mxu0
      %3554 = vmatprep.mubr.bf16.mxu0 0
      %3555 = vmatmul.mubr.bf16.gmra.mxu0 %v3485
      %v3556 = vpop.f32.mrf.mxu0
      %v3557 = vadd.f32 0.0, %v3556
      %v3558 = vpop.f32.mrf.mxu0
      %v3559 = vpop.f32.mrf.mxu0
      %v3560 = vadd.f32 0.0, %v3559
      %v3561 = vpop.f32.mrf.mxu0
      %3562 = vmatprep.mubr.bf16.mxu0 0
      %3563 = vmatmul.mubr.bf16.gmra.mxu0 %v3487
      %v3564 = vpop.f32.mrf.mxu0
      %v3565 = vadd.f32 0.0, %v3564
      %v3566 = vpop.f32.mrf.mxu0
      %v3567 = vpop.f32.mrf.mxu0
      %v3568 = vadd.f32 0.0, %v3567
      %v3569 = vpop.f32.mrf.mxu0
      %3570 = vmatprep.mubr.bf16.mxu0 0
      %3571 = vmatmul.mubr.bf16.gmra.mxu0 %v3489
      %v3572 = vpop.f32.mrf.mxu0
      %v3573 = vadd.f32 0.0, %v3572
      %v3574 = vpop.f32.mrf.mxu0
      %v3575 = vpop.f32.mrf.mxu0
      %v3576 = vadd.f32 0.0, %v3575
      %v3577 = vpop.f32.mrf.mxu0
      %3578 = vmatprep.mubr.bf16.mxu0 0
      %3579 = vmatmul.mubr.bf16.gmra.mxu0 %v3491
      %v3580 = vpop.f32.mrf.mxu0
      %v3581 = vadd.f32 0.0, %v3580
      %v3582 = vpop.f32.mrf.mxu0
      %v3583 = vpop.f32.mrf.mxu0
      %v3584 = vadd.f32 0.0, %v3583
      %v3585 = vpop.f32.mrf.mxu0
      %3586 = vmatprep.mubr.bf16.mxu0 0
      %3587 = vmatmul.mubr.bf16.gmra.mxu0 %v3493
      %v3588 = vpop.f32.mrf.mxu0
      %v3589 = vadd.f32 0.0, %v3588
      %v3590 = vpop.f32.mrf.mxu0
      %v3591 = vpop.f32.mrf.mxu0
      %v3592 = vadd.f32 0.0, %v3591
      %v3593 = vpop.f32.mrf.mxu0
      %3594 = vdwg.mxu0
      %v3595 = vld [vmem:[%s5] sm:$0x1]
      %v3597 = vlaneseq
      %v3598 = vshrl.u32 %v3597, 7
      %v3599 = vsub.s32 0, %v3598
      %v3600 = vrot.slane %v3595, %v3599
      %v3602 = vmul.f32 %v3533, %v3600
      %v3603 = vmul.f32 %v3536, %v3600
      %v3604 = vmul.f32 %v3541, %v3600
      %v3605 = vmul.f32 %v3544, %v3600
      %v3606 = vmul.f32 %v3549, %v3600
      %v3607 = vmul.f32 %v3552, %v3600
      %v3608 = vmul.f32 %v3557, %v3600
      %v3609 = vmul.f32 %v3560, %v3600
      %v3610 = vmul.f32 %v3565, %v3600
      %v3611 = vmul.f32 %v3568, %v3600
      %v3612 = vmul.f32 %v3573, %v3600
      %v3613 = vmul.f32 %v3576, %v3600
      %v3614 = vmul.f32 %v3581, %v3600
      %v3615 = vmul.f32 %v3584, %v3600
      %v3616 = vmul.f32 %v3589, %v3600
      %v3617 = vmul.f32 %v3592, %v3600
      %v3618 = vld [vmem:[%s6] sm:$0x1]
      %v3620 = vlaneseq
      %v3621 = vshrl.u32 %v3620, 7
      %v3622 = vsub.s32 0, %v3621
      %v3623 = vrot.slane %v3618, %v3622
      %v3625 = vadd.f32 %v3602, %v3623
      %v3626 = vadd.f32 %v3603, %v3623
      %v3627 = vadd.f32 %v3604, %v3623
      %v3628 = vadd.f32 %v3605, %v3623
      %v3629 = vadd.f32 %v3606, %v3623
      %v3630 = vadd.f32 %v3607, %v3623
      %v3631 = vadd.f32 %v3608, %v3623
      %v3632 = vadd.f32 %v3609, %v3623
      %v3633 = vadd.f32 %v3610, %v3623
      %v3634 = vadd.f32 %v3611, %v3623
      %v3635 = vadd.f32 %v3612, %v3623
      %v3636 = vadd.f32 %v3613, %v3623
      %v3637 = vadd.f32 %v3614, %v3623
      %v3638 = vadd.f32 %v3615, %v3623
      %v3639 = vadd.f32 %v3616, %v3623
      %v3640 = vadd.f32 %v3617, %v3623
      %v3641 = vmax.f32 %v3625, 0.0
      %v3642 = vmax.f32 %v3626, 0.0
      %v3643 = vmax.f32 %v3627, 0.0
      %v3644 = vmax.f32 %v3628, 0.0
      %v3645 = vmax.f32 %v3629, 0.0
      %v3646 = vmax.f32 %v3630, 0.0
      %v3647 = vmax.f32 %v3631, 0.0
      %v3648 = vmax.f32 %v3632, 0.0
      %v3649 = vmax.f32 %v3633, 0.0
      %v3650 = vmax.f32 %v3634, 0.0
      %v3651 = vmax.f32 %v3635, 0.0
      %v3652 = vmax.f32 %v3636, 0.0
      %v3653 = vmax.f32 %v3637, 0.0
      %v3654 = vmax.f32 %v3638, 0.0
      %v3655 = vmax.f32 %v3639, 0.0
      %v3656 = vmax.f32 %v3640, 0.0
      %v3657 = vpack.c.bf16 %v3642, %v3641
      %v3658 = vpack.c.bf16 %v3644, %v3643
      %v3659 = vpack.c.bf16 %v3646, %v3645
      %v3660 = vpack.c.bf16 %v3648, %v3647
      %v3661 = vpack.c.bf16 %v3650, %v3649
      %v3662 = vpack.c.bf16 %v3652, %v3651
      %v3663 = vpack.c.bf16 %v3654, %v3653
      %v3664 = vpack.c.bf16 %v3656, %v3655
      %v3665 = vld [vmem:[%s7] sm:$0x3]
      %v3667 = vsel %vm1706, %v3657, 0
      %v3670 = vsel %vm1706, %v3658, 0
      %v3673 = vsel %vm1706, %v3659, 0
      %v3676 = vsel %vm1706, %v3660, 0
      %v3679 = vsel %vm1706, %v3661, 0
      %v3682 = vsel %vm1706, %v3662, 0
      %v3685 = vsel %vm1706, %v3663, 0
      %v3688 = vsel %vm1706, %v3664, 0
      %v3691 = vsel %vm1743, %v3665, 0
      %3693 = vmatprep.subr.bf16.mxu0 0
      %3694 = vmatpush1.bf16.msra.mxu0 0
      %3695 = vmatprep.subr.bf16.mxu0 0
      %3696 = vmatpush1.bf16.msra.mxu0 0
      %3697 = vmatprep.subr.bf16.mxu0 0
      %3698 = vmatpush1.bf16.msra.mxu0 0
      %3699 = vmatprep.subr.bf16.mxu0 0
      %3700 = vmatpush1.bf16.msra.mxu0 0
      %3701 = vmatprep.subr.bf16.mxu0 0
      %3702 = vmatpush1.bf16.msra.mxu0 0
      %3703 = vmatprep.subr.bf16.mxu0 0
      %3704 = vmatpush1.bf16.msra.mxu0 0
      %3705 = vmatprep.subr.bf16.mxu0 0
      %3706 = vmatpush1.bf16.msra.mxu0 0
      %3707 = vmatprep.subr.bf16.mxu0 0
      %3708 = vmatpush1.bf16.msra.mxu0 %v3691
      %3709 = vmatprep.subr.bf16.mxu0 0
      %3710 = vmatpush2.bf16.msra.mxu0 0
      %3711 = vmatprep.subr.bf16.mxu0 0
      %3712 = vmatpush2.bf16.msra.mxu0 0
      %3713 = vmatprep.subr.bf16.mxu0 0
      %3714 = vmatpush2.bf16.msra.mxu0 0
      %3715 = vmatprep.subr.bf16.mxu0 0
      %3716 = vmatpush2.bf16.msra.mxu0 0
      %3717 = vmatprep.subr.bf16.mxu0 0
      %3718 = vmatpush2.bf16.msra.mxu0 0
      %3719 = vmatprep.subr.bf16.mxu0 0
      %3720 = vmatpush2.bf16.msra.mxu0 0
      %3721 = vmatprep.subr.bf16.mxu0 0
      %3722 = vmatpush2.bf16.msra.mxu0 0
      %3723 = vmatprep.subr.bf16.mxu0 0
      %3724 = vmatpush2.bf16.msra.mxu0 0
      %3725 = vmatprep.mubr.bf16.mxu0 0
      %3726 = vmatmul.mubr.bf16.gmra.mxu0 %v3667
      %v3727 = vpop.f32.mrf.mxu0
      %v3728 = vadd.f32 0.0, %v3727
      %v3729 = vpop.f32.mrf.mxu0
      %v3730 = vpop.f32.mrf.mxu0
      %v3731 = vadd.f32 0.0, %v3730
      %v3732 = vpop.f32.mrf.mxu0
      %3733 = vmatprep.mubr.bf16.mxu0 0
      %3734 = vmatmul.mubr.bf16.gmra.mxu0 %v3670
      %v3735 = vpop.f32.mrf.mxu0
      %v3736 = vadd.f32 0.0, %v3735
      %v3737 = vpop.f32.mrf.mxu0
      %v3738 = vpop.f32.mrf.mxu0
      %v3739 = vadd.f32 0.0, %v3738
      %v3740 = vpop.f32.mrf.mxu0
      %3741 = vmatprep.mubr.bf16.mxu0 0
      %3742 = vmatmul.mubr.bf16.gmra.mxu0 %v3673
      %v3743 = vpop.f32.mrf.mxu0
      %v3744 = vadd.f32 0.0, %v3743
      %v3745 = vpop.f32.mrf.mxu0
      %v3746 = vpop.f32.mrf.mxu0
      %v3747 = vadd.f32 0.0, %v3746
      %v3748 = vpop.f32.mrf.mxu0
      %3749 = vmatprep.mubr.bf16.mxu0 0
      %3750 = vmatmul.mubr.bf16.gmra.mxu0 %v3676
      %v3751 = vpop.f32.mrf.mxu0
      %v3752 = vadd.f32 0.0, %v3751
      %v3753 = vpop.f32.mrf.mxu0
      %v3754 = vpop.f32.mrf.mxu0
      %v3755 = vadd.f32 0.0, %v3754
      %v3756 = vpop.f32.mrf.mxu0
      %3757 = vmatprep.mubr.bf16.mxu0 0
      %3758 = vmatmul.mubr.bf16.gmra.mxu0 %v3679
      %v3759 = vpop.f32.mrf.mxu0
      %v3760 = vadd.f32 0.0, %v3759
      %v3761 = vpop.f32.mrf.mxu0
      %v3762 = vpop.f32.mrf.mxu0
      %v3763 = vadd.f32 0.0, %v3762
      %v3764 = vpop.f32.mrf.mxu0
      %3765 = vmatprep.mubr.bf16.mxu0 0
      %3766 = vmatmul.mubr.bf16.gmra.mxu0 %v3682
      %v3767 = vpop.f32.mrf.mxu0
      %v3768 = vadd.f32 0.0, %v3767
      %v3769 = vpop.f32.mrf.mxu0
      %v3770 = vpop.f32.mrf.mxu0
      %v3771 = vadd.f32 0.0, %v3770
      %v3772 = vpop.f32.mrf.mxu0
      %3773 = vmatprep.mubr.bf16.mxu0 0
      %3774 = vmatmul.mubr.bf16.gmra.mxu0 %v3685
      %v3775 = vpop.f32.mrf.mxu0
      %v3776 = vadd.f32 0.0, %v3775
      %v3777 = vpop.f32.mrf.mxu0
      %v3778 = vpop.f32.mrf.mxu0
      %v3779 = vadd.f32 0.0, %v3778
      %v3780 = vpop.f32.mrf.mxu0
      %3781 = vmatprep.mubr.bf16.mxu0 0
      %3782 = vmatmul.mubr.bf16.gmra.mxu0 %v3688
      %v3783 = vpop.f32.mrf.mxu0
      %v3784 = vadd.f32 0.0, %v3783
      %v3785 = vpop.f32.mrf.mxu0
      %v3786 = vpop.f32.mrf.mxu0
      %v3787 = vadd.f32 0.0, %v3786
      %v3788 = vpop.f32.mrf.mxu0
      %3789 = vdwg.mxu0
      %v3790 = vld [vmem:[%s8] sm:$0x1]
      %v3792 = vlaneseq
      %v3793 = vshrl.u32 %v3792, 7
      %v3794 = vsub.s32 0, %v3793
      %v3795 = vrot.slane %v3790, %v3794
      %v3797 = vmul.f32 %v3728, %v3795
      %v3798 = vmul.f32 %v3731, %v3795
      %v3799 = vmul.f32 %v3736, %v3795
      %v3800 = vmul.f32 %v3739, %v3795
      %v3801 = vmul.f32 %v3744, %v3795
      %v3802 = vmul.f32 %v3747, %v3795
      %v3803 = vmul.f32 %v3752, %v3795
      %v3804 = vmul.f32 %v3755, %v3795
      %v3805 = vmul.f32 %v3760, %v3795
      %v3806 = vmul.f32 %v3763, %v3795
      %v3807 = vmul.f32 %v3768, %v3795
      %v3808 = vmul.f32 %v3771, %v3795
      %v3809 = vmul.f32 %v3776, %v3795
      %v3810 = vmul.f32 %v3779, %v3795
      %v3811 = vmul.f32 %v3784, %v3795
      %v3812 = vmul.f32 %v3787, %v3795
      %v3813 = vld [vmem:[%s9] sm:$0x1]
      %v3815 = vlaneseq
      %v3816 = vshrl.u32 %v3815, 7
      %v3817 = vsub.s32 0, %v3816
      %v3818 = vrot.slane %v3813, %v3817
      %v3820 = vadd.f32 %v3797, %v3818
      %v3821 = vadd.f32 %v3798, %v3818
      %v3822 = vadd.f32 %v3799, %v3818
      %v3823 = vadd.f32 %v3800, %v3818
      %v3824 = vadd.f32 %v3801, %v3818
      %v3825 = vadd.f32 %v3802, %v3818
      %v3826 = vadd.f32 %v3803, %v3818
      %v3827 = vadd.f32 %v3804, %v3818
      %v3828 = vadd.f32 %v3805, %v3818
      %v3829 = vadd.f32 %v3806, %v3818
      %v3830 = vadd.f32 %v3807, %v3818
      %v3831 = vadd.f32 %v3808, %v3818
      %v3832 = vadd.f32 %v3809, %v3818
      %v3833 = vadd.f32 %v3810, %v3818
      %v3834 = vadd.f32 %v3811, %v3818
      %v3835 = vadd.f32 %v3812, %v3818
      %vm3836 = vsmask.f32 3328
      %vm3837 = vsmask.f32 7440
      %vm3838 = vmor %vm3836, %vm3837
      %v3840 = vshrl.u32 %v474, 16
      %v3842 = vrot.slane %v3840, 4
      %v3843 = vshll.u32 %v474, 16
      %v3845 = vrot.slane %v3843, 5
      %v3846 = vor.u32 %v3842, %v3845
      %v3847 = vrot.slane %v3846, 4
      %v3849 = vshll.u32 %v475, 16
      %v3851 = vrot.slane %v3849, 5
      %v3852 = vsel %vm3838, %v3847, %v3851
      %v3853 = vshrl.u32 %v475, 16
      %v3855 = vrot.slane %v3853, 4
      %v3856 = vor.u32 %v3855, %v3851
      %v3857 = vrot.slane %v3856, 4
      %v3859 = vshll.u32 %v476, 16
      %v3861 = vrot.slane %v3859, 5
      %v3862 = vsel %vm3838, %v3857, %v3861
      %v3864 = vshrl.u32 %v477, 16
      %v3866 = vrot.slane %v3864, 4
      %v3867 = vshll.u32 %v477, 16
      %v3869 = vrot.slane %v3867, 5
      %v3870 = vor.u32 %v3866, %v3869
      %v3871 = vrot.slane %v3870, 4
      %v3873 = vshll.u32 %v478, 16
      %v3875 = vrot.slane %v3873, 5
      %v3876 = vsel %vm3838, %v3871, %v3875
      %v3877 = vshrl.u32 %v478, 16
      %v3879 = vrot.slane %v3877, 4
      %v3880 = vor.u32 %v3879, %v3875
      %v3881 = vrot.slane %v3880, 4
      %v3883 = vshll.u32 %v479, 16
      %v3885 = vrot.slane %v3883, 5
      %v3886 = vsel %vm3838, %v3881, %v3885
      %v3888 = vshrl.u32 %v480, 16
      %v3890 = vrot.slane %v3888, 4
      %v3891 = vshll.u32 %v480, 16
      %v3893 = vrot.slane %v3891, 5
      %v3894 = vor.u32 %v3890, %v3893
      %v3895 = vrot.slane %v3894, 4
      %v3897 = vshll.u32 %v481, 16
      %v3899 = vrot.slane %v3897, 5
      %v3900 = vsel %vm3838, %v3895, %v3899
      %v3901 = vshrl.u32 %v481, 16
      %v3903 = vrot.slane %v3901, 4
      %v3904 = vor.u32 %v3903, %v3899
      %v3905 = vrot.slane %v3904, 4
      %v3907 = vshll.u32 %v482, 16
      %v3909 = vrot.slane %v3907, 5
      %v3910 = vsel %vm3838, %v3905, %v3909
      %v3912 = vshrl.u32 %v483, 16
      %v3914 = vrot.slane %v3912, 4
      %v3915 = vshll.u32 %v483, 16
      %v3917 = vrot.slane %v3915, 5
      %v3918 = vor.u32 %v3914, %v3917
      %v3919 = vrot.slane %v3918, 4
      %v3921 = vshll.u32 %v484, 16
      %v3923 = vrot.slane %v3921, 5
      %v3924 = vsel %vm3838, %v3919, %v3923
      %v3925 = vshrl.u32 %v484, 16
      %v3927 = vrot.slane %v3925, 4
      %v3928 = vor.u32 %v3927, %v3923
      %v3929 = vrot.slane %v3928, 4
      %v3931 = vshll.u32 %v485, 16
      %v3933 = vrot.slane %v3931, 5
      %v3934 = vsel %vm3838, %v3929, %v3933
      %v3936 = vshrl.u32 %v486, 16
      %v3938 = vrot.slane %v3936, 4
      %v3939 = vshll.u32 %v486, 16
      %v3941 = vrot.slane %v3939, 5
      %v3942 = vor.u32 %v3938, %v3941
      %v3943 = vrot.slane %v3942, 4
      %v3945 = vshll.u32 %v487, 16
      %v3947 = vrot.slane %v3945, 5
      %v3948 = vsel %vm3838, %v3943, %v3947
      %v3949 = vshrl.u32 %v487, 16
      %v3951 = vrot.slane %v3949, 4
      %v3952 = vor.u32 %v3951, %v3947
      %v3953 = vrot.slane %v3952, 4
      %v3955 = vshll.u32 %v488, 16
      %v3957 = vrot.slane %v3955, 5
      %v3958 = vsel %vm3838, %v3953, %v3957
      %v3960 = vshrl.u32 %v489, 16
      %v3962 = vrot.slane %v3960, 4
      %v3963 = vshll.u32 %v489, 16
      %v3965 = vrot.slane %v3963, 5
      %v3966 = vor.u32 %v3962, %v3965
      %v3967 = vrot.slane %v3966, 4
      %v3969 = vshll.u32 %v490, 16
      %v3971 = vrot.slane %v3969, 5
      %v3972 = vsel %vm3838, %v3967, %v3971
      %v3973 = vshrl.u32 %v490, 16
      %v3975 = vrot.slane %v3973, 4
      %v3976 = vor.u32 %v3975, %v3971
      %v3977 = vrot.slane %v3976, 4
      %v3979 = vshll.u32 %v491, 16
      %v3981 = vrot.slane %v3979, 5
      %v3982 = vsel %vm3838, %v3977, %v3981
      %v3984 = vshrl.u32 %v492, 16
      %v3986 = vrot.slane %v3984, 4
      %v3987 = vshll.u32 %v492, 16
      %v3989 = vrot.slane %v3987, 5
      %v3990 = vor.u32 %v3986, %v3989
      %v3991 = vrot.slane %v3990, 4
      %v3993 = vshll.u32 %v493, 16
      %v3995 = vrot.slane %v3993, 5
      %v3996 = vsel %vm3838, %v3991, %v3995
      %v3997 = vshrl.u32 %v493, 16
      %v3999 = vrot.slane %v3997, 4
      %v4000 = vor.u32 %v3999, %v3995
      %v4001 = vrot.slane %v4000, 4
      %v4003 = vshll.u32 %v494, 16
      %v4005 = vrot.slane %v4003, 5
      %v4006 = vsel %vm3838, %v4001, %v4005
      %v4008 = vshrl.u32 %v495, 16
      %v4010 = vrot.slane %v4008, 4
      %v4011 = vshll.u32 %v495, 16
      %v4013 = vrot.slane %v4011, 5
      %v4014 = vor.u32 %v4010, %v4013
      %v4015 = vrot.slane %v4014, 4
      %v4017 = vshll.u32 %v496, 16
      %v4019 = vrot.slane %v4017, 5
      %v4020 = vsel %vm3838, %v4015, %v4019
      %v4021 = vshrl.u32 %v496, 16
      %v4023 = vrot.slane %v4021, 4
      %v4024 = vor.u32 %v4023, %v4019
      %v4025 = vrot.slane %v4024, 4
      %v4027 = vshll.u32 %v497, 16
      %v4029 = vrot.slane %v4027, 5
      %v4030 = vsel %vm3838, %v4025, %v4029
      %v4031 = vld [vmem:[%s10] sm:$0x3]
      %v4032 = vunpack.c.l.b16 %v3852
      %v4033 = vunpack.c.l.b16 %v3862
      %v4034 = vunpack.c.l.b16 %v3876
      %v4035 = vunpack.c.l.b16 %v3886
      %v4036 = vunpack.c.l.b16 %v3900
      %v4037 = vunpack.c.l.b16 %v3910
      %v4038 = vunpack.c.l.b16 %v3924
      %v4039 = vunpack.c.l.b16 %v3934
      %v4040 = vunpack.c.l.b16 %v3948
      %v4041 = vunpack.c.l.b16 %v3958
      %v4042 = vunpack.c.l.b16 %v3972
      %v4043 = vunpack.c.l.b16 %v3982
      %v4044 = vunpack.c.l.b16 %v3996
      %v4045 = vunpack.c.l.b16 %v4006
      %v4046 = vunpack.c.l.b16 %v4020
      %v4047 = vunpack.c.l.b16 %v4030
      %v4048 = vpack.c.b16 %v4033, %v4032
      %v4049 = vpack.c.b16 %v4035, %v4034
      %v4050 = vpack.c.b16 %v4037, %v4036
      %v4051 = vpack.c.b16 %v4039, %v4038
      %v4052 = vpack.c.b16 %v4041, %v4040
      %v4053 = vpack.c.b16 %v4043, %v4042
      %v4054 = vpack.c.b16 %v4045, %v4044
      %v4055 = vpack.c.b16 %v4047, %v4046
      %v4057 = vsel %vm1706, %v4048, 0
      %v4060 = vsel %vm1706, %v4049, 0
      %v4063 = vsel %vm1706, %v4050, 0
      %v4066 = vsel %vm1706, %v4051, 0
      %v4069 = vsel %vm1706, %v4052, 0
      %v4072 = vsel %vm1706, %v4053, 0
      %v4075 = vsel %vm1706, %v4054, 0
      %v4078 = vsel %vm1706, %v4055, 0
      %v4081 = vsel %vm1743, %v4031, 0
      %4083 = vmatprep.subr.bf16.mxu0 0
      %4084 = vmatpush1.bf16.msra.mxu0 0
      %4085 = vmatprep.subr.bf16.mxu0 0
      %4086 = vmatpush1.bf16.msra.mxu0 0
      %4087 = vmatprep.subr.bf16.mxu0 0
      %4088 = vmatpush1.bf16.msra.mxu0 0
      %4089 = vmatprep.subr.bf16.mxu0 0
      %4090 = vmatpush1.bf16.msra.mxu0 0
      %4091 = vmatprep.subr.bf16.mxu0 0
      %4092 = vmatpush1.bf16.msra.mxu0 0
      %4093 = vmatprep.subr.bf16.mxu0 0
      %4094 = vmatpush1.bf16.msra.mxu0 0
      %4095 = vmatprep.subr.bf16.mxu0 0
      %4096 = vmatpush1.bf16.msra.mxu0 0
      %4097 = vmatprep.subr.bf16.mxu0 0
      %4098 = vmatpush1.bf16.msra.mxu0 %v4081
      %4099 = vmatprep.subr.bf16.mxu0 0
      %4100 = vmatpush2.bf16.msra.mxu0 0
      %4101 = vmatprep.subr.bf16.mxu0 0
      %4102 = vmatpush2.bf16.msra.mxu0 0
      %4103 = vmatprep.subr.bf16.mxu0 0
      %4104 = vmatpush2.bf16.msra.mxu0 0
      %4105 = vmatprep.subr.bf16.mxu0 0
      %4106 = vmatpush2.bf16.msra.mxu0 0
      %4107 = vmatprep.subr.bf16.mxu0 0
      %4108 = vmatpush2.bf16.msra.mxu0 0
      %4109 = vmatprep.subr.bf16.mxu0 0
      %4110 = vmatpush2.bf16.msra.mxu0 0
      %4111 = vmatprep.subr.bf16.mxu0 0
      %4112 = vmatpush2.bf16.msra.mxu0 0
      %4113 = vmatprep.subr.bf16.mxu0 0
      %4114 = vmatpush2.bf16.msra.mxu0 0
      %4115 = vmatprep.mubr.bf16.mxu0 0
      %4116 = vmatmul.mubr.bf16.gmra.mxu0 %v4057
      %v4117 = vpop.f32.mrf.mxu0
      %v4118 = vadd.f32 0.0, %v4117
      %v4119 = vpop.f32.mrf.mxu0
      %v4120 = vpop.f32.mrf.mxu0
      %v4121 = vadd.f32 0.0, %v4120
      %v4122 = vpop.f32.mrf.mxu0
      %4123 = vmatprep.mubr.bf16.mxu0 0
      %4124 = vmatmul.mubr.bf16.gmra.mxu0 %v4060
      %v4125 = vpop.f32.mrf.mxu0
      %v4126 = vadd.f32 0.0, %v4125
      %v4127 = vpop.f32.mrf.mxu0
      %v4128 = vpop.f32.mrf.mxu0
      %v4129 = vadd.f32 0.0, %v4128
      %v4130 = vpop.f32.mrf.mxu0
      %4131 = vmatprep.mubr.bf16.mxu0 0
      %4132 = vmatmul.mubr.bf16.gmra.mxu0 %v4063
      %v4133 = vpop.f32.mrf.mxu0
      %v4134 = vadd.f32 0.0, %v4133
      %v4135 = vpop.f32.mrf.mxu0
      %v4136 = vpop.f32.mrf.mxu0
      %v4137 = vadd.f32 0.0, %v4136
      %v4138 = vpop.f32.mrf.mxu0
      %4139 = vmatprep.mubr.bf16.mxu0 0
      %4140 = vmatmul.mubr.bf16.gmra.mxu0 %v4066
      %v4141 = vpop.f32.mrf.mxu0
      %v4142 = vadd.f32 0.0, %v4141
      %v4143 = vpop.f32.mrf.mxu0
      %v4144 = vpop.f32.mrf.mxu0
      %v4145 = vadd.f32 0.0, %v4144
      %v4146 = vpop.f32.mrf.mxu0
      %4147 = vmatprep.mubr.bf16.mxu0 0
      %4148 = vmatmul.mubr.bf16.gmra.mxu0 %v4069
      %v4149 = vpop.f32.mrf.mxu0
      %v4150 = vadd.f32 0.0, %v4149
      %v4151 = vpop.f32.mrf.mxu0
      %v4152 = vpop.f32.mrf.mxu0
      %v4153 = vadd.f32 0.0, %v4152
      %v4154 = vpop.f32.mrf.mxu0
      %4155 = vmatprep.mubr.bf16.mxu0 0
      %4156 = vmatmul.mubr.bf16.gmra.mxu0 %v4072
      %v4157 = vpop.f32.mrf.mxu0
      %v4158 = vadd.f32 0.0, %v4157
      %v4159 = vpop.f32.mrf.mxu0
      %v4160 = vpop.f32.mrf.mxu0
      %v4161 = vadd.f32 0.0, %v4160
      %v4162 = vpop.f32.mrf.mxu0
      %4163 = vmatprep.mubr.bf16.mxu0 0
      %4164 = vmatmul.mubr.bf16.gmra.mxu0 %v4075
      %v4165 = vpop.f32.mrf.mxu0
      %v4166 = vadd.f32 0.0, %v4165
      %v4167 = vpop.f32.mrf.mxu0
      %v4168 = vpop.f32.mrf.mxu0
      %v4169 = vadd.f32 0.0, %v4168
      %v4170 = vpop.f32.mrf.mxu0
      %4171 = vmatprep.mubr.bf16.mxu0 0
      %4172 = vmatmul.mubr.bf16.gmra.mxu0 %v4078
      %v4173 = vpop.f32.mrf.mxu0
      %v4174 = vadd.f32 0.0, %v4173
      %v4175 = vpop.f32.mrf.mxu0
      %v4176 = vpop.f32.mrf.mxu0
      %v4177 = vadd.f32 0.0, %v4176
      %v4178 = vpop.f32.mrf.mxu0
      %4179 = vdwg.mxu0
      %v4180 = vld [vmem:[%s11] sm:$0x1]
      %v4182 = vlaneseq
      %v4183 = vshrl.u32 %v4182, 7
      %v4184 = vsub.s32 0, %v4183
      %v4185 = vrot.slane %v4180, %v4184
      %v4187 = vmul.f32 %v4118, %v4185
      %v4188 = vmul.f32 %v4121, %v4185
      %v4189 = vmul.f32 %v4126, %v4185
      %v4190 = vmul.f32 %v4129, %v4185
      %v4191 = vmul.f32 %v4134, %v4185
      %v4192 = vmul.f32 %v4137, %v4185
      %v4193 = vmul.f32 %v4142, %v4185
      %v4194 = vmul.f32 %v4145, %v4185
      %v4195 = vmul.f32 %v4150, %v4185
      %v4196 = vmul.f32 %v4153, %v4185
      %v4197 = vmul.f32 %v4158, %v4185
      %v4198 = vmul.f32 %v4161, %v4185
      %v4199 = vmul.f32 %v4166, %v4185
      %v4200 = vmul.f32 %v4169, %v4185
      %v4201 = vmul.f32 %v4174, %v4185
      %v4202 = vmul.f32 %v4177, %v4185
      %v4203 = vld [vmem:[%s12] sm:$0x1]
      %v4205 = vlaneseq
      %v4206 = vshrl.u32 %v4205, 7
      %v4207 = vsub.s32 0, %v4206
      %v4208 = vrot.slane %v4203, %v4207
      %v4210 = vadd.f32 %v4187, %v4208
      %v4211 = vadd.f32 %v4188, %v4208
      %v4212 = vadd.f32 %v4189, %v4208
      %v4213 = vadd.f32 %v4190, %v4208
      %v4214 = vadd.f32 %v4191, %v4208
      %v4215 = vadd.f32 %v4192, %v4208
      %v4216 = vadd.f32 %v4193, %v4208
      %v4217 = vadd.f32 %v4194, %v4208
      %v4218 = vadd.f32 %v4195, %v4208
      %v4219 = vadd.f32 %v4196, %v4208
      %v4220 = vadd.f32 %v4197, %v4208
      %v4221 = vadd.f32 %v4198, %v4208
      %v4222 = vadd.f32 %v4199, %v4208
      %v4223 = vadd.f32 %v4200, %v4208
      %v4224 = vadd.f32 %v4201, %v4208
      %v4225 = vadd.f32 %v4202, %v4208
      %v4226 = vadd.f32 %v3820, %v4210
      %v4227 = vadd.f32 %v3821, %v4211
      %v4228 = vadd.f32 %v3822, %v4212
      %v4229 = vadd.f32 %v3823, %v4213
      %v4230 = vadd.f32 %v3824, %v4214
      %v4231 = vadd.f32 %v3825, %v4215
      %v4232 = vadd.f32 %v3826, %v4216
      %v4233 = vadd.f32 %v3827, %v4217
      %v4234 = vadd.f32 %v3828, %v4218
      %v4235 = vadd.f32 %v3829, %v4219
      %v4236 = vadd.f32 %v3830, %v4220
      %v4237 = vadd.f32 %v3831, %v4221
      %v4238 = vadd.f32 %v3832, %v4222
      %v4239 = vadd.f32 %v3833, %v4223
      %v4240 = vadd.f32 %v3834, %v4224
      %v4241 = vadd.f32 %v3835, %v4225
      %v4242 = vmax.f32 %v4226, 0.0
      %v4243 = vmax.f32 %v4227, 0.0
      %v4244 = vmax.f32 %v4228, 0.0
      %v4245 = vmax.f32 %v4229, 0.0
      %v4246 = vmax.f32 %v4230, 0.0
      %v4247 = vmax.f32 %v4231, 0.0
      %v4248 = vmax.f32 %v4232, 0.0
      %v4249 = vmax.f32 %v4233, 0.0
      %v4250 = vmax.f32 %v4234, 0.0
      %v4251 = vmax.f32 %v4235, 0.0
      %v4252 = vmax.f32 %v4236, 0.0
      %v4253 = vmax.f32 %v4237, 0.0
      %v4254 = vmax.f32 %v4238, 0.0
      %v4255 = vmax.f32 %v4239, 0.0
      %v4256 = vmax.f32 %v4240, 0.0
      %v4257 = vmax.f32 %v4241, 0.0
      %v4258 = vpack.c.bf16 %v4243, %v4242
      %v4259 = vpack.c.bf16 %v4245, %v4244
      %v4260 = vpack.c.bf16 %v4247, %v4246
      %v4261 = vpack.c.bf16 %v4249, %v4248
      %v4262 = vpack.c.bf16 %v4251, %v4250
      %v4263 = vpack.c.bf16 %v4253, %v4252
      %v4264 = vpack.c.bf16 %v4255, %v4254
      %v4265 = vpack.c.bf16 %v4257, %v4256
      %v4274 = vunpack.c.l.b16 %v4258
      %v4275 = vunpack.c.h.b16 %v4258
      %v4276 = vunpack.c.l.b16 %v4259
      %v4277 = vunpack.c.h.b16 %v4259
      %v4278 = vunpack.c.l.b16 %v4260
      %v4279 = vunpack.c.h.b16 %v4260
      %v4280 = vunpack.c.l.b16 %v4261
      %v4281 = vunpack.c.h.b16 %v4261
      %v4282 = vunpack.c.l.b16 %v4262
      %v4283 = vunpack.c.h.b16 %v4262
      %v4284 = vunpack.c.l.b16 %v4263
      %v4285 = vunpack.c.h.b16 %v4263
      %v4286 = vunpack.c.l.b16 %v4264
      %v4287 = vunpack.c.h.b16 %v4264
      %v4288 = vunpack.c.l.b16 %v4265
      %v4289 = vunpack.c.h.b16 %v4265
      %v4290 = vpack.c.b16 %v4274, %v4274
      %v4291 = vpack.c.b16 %v4275, %v4275
      %v4292 = vpack.c.b16 %v4276, %v4276
      %v4293 = vpack.c.b16 %v4277, %v4277
      %v4294 = vpack.c.b16 %v4278, %v4278
      %v4295 = vpack.c.b16 %v4279, %v4279
      %v4296 = vpack.c.b16 %v4280, %v4280
      %v4297 = vpack.c.b16 %v4281, %v4281
      %v4298 = vpack.c.b16 %v4282, %v4282
      %v4299 = vpack.c.b16 %v4283, %v4283
      %v4300 = vpack.c.b16 %v4284, %v4284
      %v4301 = vpack.c.b16 %v4285, %v4285
      %v4302 = vpack.c.b16 %v4286, %v4286
      %v4303 = vpack.c.b16 %v4287, %v4287
      %v4304 = vpack.c.b16 %v4288, %v4288
      %v4305 = vpack.c.b16 %v4289, %v4289
      %vm4322 = vcmask 125952
      %4323 = vst.msk [vmem:[%s464] sm:$0xf] %vm4322, %v4290
      %4324 = vst.msk [vmem:[%s464 + $0x4] sm:$0xf] %vm4322, %v4291
      %4325 = vst.msk [vmem:[%s464 + $0x8] sm:$0xf] %vm4322, %v4292
      %4326 = vst.msk [vmem:[%s464 + $0xc] sm:$0xf] %vm4322, %v4293
      %4327 = vst.msk [vmem:[%s464 + $0x10] sm:$0xf] %vm4322, %v4294
      %4328 = vst.msk [vmem:[%s464 + $0x14] sm:$0xf] %vm4322, %v4295
      %4329 = vst.msk [vmem:[%s464 + $0x18] sm:$0xf] %vm4322, %v4296
      %4330 = vst.msk [vmem:[%s464 + $0x1c] sm:$0xf] %vm4322, %v4297
      %4331 = vst.msk [vmem:[%s464 + $0x20] sm:$0xf] %vm4322, %v4298
      %4332 = vst.msk [vmem:[%s464 + $0x24] sm:$0xf] %vm4322, %v4299
      %4333 = vst.msk [vmem:[%s464 + $0x28] sm:$0xf] %vm4322, %v4300
      %4334 = vst.msk [vmem:[%s464 + $0x2c] sm:$0xf] %vm4322, %v4301
      %4335 = vst.msk [vmem:[%s464 + $0x30] sm:$0xf] %vm4322, %v4302
      %4336 = vst.msk [vmem:[%s464 + $0x34] sm:$0xf] %vm4322, %v4303
      %4337 = vst.msk [vmem:[%s464 + $0x38] sm:$0xf] %vm4322, %v4304
      %4338 = vst.msk [vmem:[%s464 + $0x3c] sm:$0xf] %vm4322, %v4305
      %s4339 = smul.u32 8, %s29
      %p4340 = scmp.lt.s32.totalorder %s28, 1
      %s4341 = scalar_select %p4340, %s28, 1
      %p4342 = scmp.lt.s32.totalorder %s4339, 15
      %s4343 = scalar_select %p4342, %s4339, 15
      %s4344 = smul.addr %s4343, 2
      %s4345 = smul.addr %s4341, 32
      %s4346 = sadd.s32 %s4344, %s4345
      %s4347 = smul.addr %s4346, 4
      %s4348 = scalar_lea.vmem %s13, %s4347
      // Predicated region
      $region73: #{bottleneck_forward.1} parent=71 // pred_check
        %p4349 = pneg %p334
      $region74: #{bottleneck_forward.1} parent=71 // pred_check_branch
        %4351 = sbr.rel (%p4349) target = $region76
      $region75: #{bottleneck_forward.1} parent=71 // pred_region
        %s4352 = smul.u32 8, %s29
      $region76: #{bottleneck_forward.1} parent=71 // pred_fallthru
        _
    $region72: #{bottleneck_forward.1} parent=5 // pred_fallthru
      _
    %p4353 = scmp.le.s32.totalorder 2, %s19
    // Predicated region
    $region77: #{bottleneck_forward.1} parent=5 // pred_check
      %p4354 = pneg %p4353
    $region78: #{bottleneck_forward.1} parent=5 // pred_check_branch
      %4356 = sbr.rel (%p4354) target = $region80
    $region79: #{bottleneck_forward.1} parent=5 // pred_region
      %s4357 = ssub.s32 %s19, 2
      // Predicated region
      $region81: #{bottleneck_forward.1} parent=79 // pred_check
        %p4358 = pneg %p340
      $region82: #{bottleneck_forward.1} parent=79 // pred_check_branch
        %4360 = sbr.rel (%p4358) target = $region84
      $region83: #{bottleneck_forward.1} parent=79 // pred_region
        %s4361 = smul.u32 8, %s31
        %p4362 = scmp.lt.s32.totalorder %s30, 1
        %s4363 = scalar_select %p4362, %s30, 1
        %p4364 = scmp.lt.s32.totalorder %s4361, 15
        %s4365 = scalar_select %p4364, %s4361, 15
        %s4366 = smul.addr %s4365, 2
        %s4367 = smul.addr %s4363, 32
        %s4368 = sadd.s32 %s4366, %s4367
        %s4369 = smul.addr %s4368, 4
        %s4370 = scalar_lea.vmem %s13, %s4369
      $region84: #{bottleneck_forward.1} parent=79 // pred_fallthru
        _
    $region80: #{bottleneck_forward.1} parent=5 // pred_fallthru
      _
  $region6: #{bottleneck_forward.1} parent=0 // loop_footer
    %s23 = sadd.s32 1, %s19
  $region7: #{bottleneck_forward.1} parent=0 // loop_footer_branch
    %18 = sbr.rel target = $region3
  $region8: #{bottleneck_forward.1} parent=0 // loop_exit
    _

</llo_original>
